<compile_context>
chip_gen: v7x
topology: tpu7x:2x2x1
jax: 0.10.0
libtpu: 0.0.40
codegen_flags: <defaults>
</compile_context>

<pallas_src>
import jax
import jax.numpy as jnp
from jax.experimental import pallas as pl
from jax.experimental.pallas import tpu as pltpu

# ---------------- small CLIP-ViT analogue configuration ----------------
IMG = 16          # image size (CLIP: 224)
PATCH = 8         # patch size (CLIP: 32)
CH = 3            # RGB channels
D = 32            # hidden size (CLIP: 768)
HEADS = 4         # attention heads (CLIP: 12)
DH = D // HEADS   # head dim = 8
MLP = 64          # MLP intermediate (CLIP: 3072)
LAYERS = 2        # encoder layers (CLIP: 12)
P = (IMG // PATCH) ** 2   # num patches = 4
S = P + 1                 # sequence length = patches + [CLS] = 5
PD = PATCH * PATCH * CH   # flattened patch dim = 192
EPS = 1e-5

# kernel-facing lane-dense padding (TPU vreg lane width = 128)
DPAD = 128
MLPPAD = 128
QKV = 3 * DPAD            # fused q|k|v lane blocks


# ---------------- fused Pallas kernel (one image per grid step) ----------------
def clip_encoder_kernel(patches_ref, wpatch_ref, posadd_ref, preg_ref, preb_ref,
                        ln1g_ref, ln1b_ref, wqkv_ref, bqkv_ref, wo_ref, bo_ref,
                        ln2g_ref, ln2b_ref, w1_ref, b1_ref, w2_ref, b2_ref,
                        o_ref):
    """Patch embed + pre-LN + all encoder layers for ONE image."""
    f32 = jnp.float32
    bf16 = jnp.bfloat16

    # lane masks inside the 128-lane padded layout
    lane = jax.lax.broadcasted_iota(jnp.int32, (1, DPAD), 1)
    lmask = (lane < D).astype(f32)
    # disjoint per-head lane masks (head h owns lanes [h*DH, (h+1)*DH))
    hmasks = [((lane >= h * DH) & (lane < (h + 1) * DH)).astype(f32)
              for h in range(HEADS)]

    def layernorm(x, g, b):
        # padded lanes of x are kept exactly zero, so sum(x)/D is the true mean
        mu = jnp.sum(x, axis=-1, keepdims=True) * (1.0 / D)
        d = (x - mu) * lmask
        var = jnp.sum(d * d, axis=-1, keepdims=True) * (1.0 / D)
        return d * jax.lax.rsqrt(var + EPS) * g + b   # g,b zero-padded

    # --- patch embedding + [CLS]/position add + pre-LayerNorm ---
    # The CLS row of `patches` is all-zero; posadd already holds cls+pos[0]
    # there, so no in-kernel concatenate is needed.
    patches = patches_ref[0]                                           # (S, PD)
    emb = jnp.dot(patches.astype(bf16), wpatch_ref[...],
                  preferred_element_type=f32) + posadd_ref[...]        # (S, DPAD)
    x = layernorm(emb, preg_ref[...], preb_ref[...])

    for li in range(LAYERS):        # static unroll; fine at LAYERS=2
        # --- self-attention (pre-LN): one fused lane-dense QKV matmul ---
        h = layernorm(x, ln1g_ref[li], ln1b_ref[li])
        qkv = jnp.dot(h.astype(bf16), wqkv_ref[li],
                      preferred_element_type=f32) + bqkv_ref[li]       # (S, 3*DPAD)
        q = qkv[:, 0:DPAD]              # 1/sqrt(DH) folded into wq/bq host-side
        k = qkv[:, DPAD:2 * DPAD]
        v = qkv[:, 2 * DPAD:3 * DPAD]

        ctx = jnp.zeros((S, DPAD), f32)
        for hm in hmasks:
            # masking q restricts the full-lane contraction to this head's lanes
            s = jax.lax.dot_general((q * hm).astype(bf16), k.astype(bf16),
                                    (((1,), (1,)), ((), ())),
                                    preferred_element_type=f32)        # (S, S)
            s = s - jnp.max(s, axis=-1, keepdims=True)
            e = jnp.exp(s)
            p = e * pl.reciprocal(jnp.sum(e, axis=-1, keepdims=True), approx=True)
            ctx = ctx + jnp.dot(p.astype(bf16), (v * hm).astype(bf16),
                                preferred_element_type=f32)            # (S, DPAD)

        # lane-dense output projection (head reduction folded into the MXU dot)
        x = x + jnp.dot(ctx.astype(bf16), wo_ref[li],
                        preferred_element_type=f32) + bo_ref[li]

        # --- MLP block (quick_gelu, as in CLIP) ---
        h2 = layernorm(x, ln2g_ref[li], ln2b_ref[li])
        m = jnp.dot(h2.astype(bf16), w1_ref[li],
                    preferred_element_type=f32) + b1_ref[li]           # (S, MLPPAD)
        m = m * jax.nn.sigmoid(1.702 * m)
        x = x + jnp.dot(m.astype(bf16), w2_ref[li],
                        preferred_element_type=f32) + b2_ref[li]

    o_ref[0] = x.astype(o_ref.dtype)                                   # lane-dense (S, 128)


# ---------------- parameter init (deterministic, synthetic) ----------------
def init_params(key):
    keys = jax.random.split(key, 4 + LAYERS)

    def nrm(k, shape, scale=0.02):
        return scale * jax.random.normal(k, shape, jnp.float32)

    params = {
        "w_patch": nrm(keys[0], (PD, D)),                 # conv(3,D,PATCH,PATCH) as matmul
        "cls": nrm(keys[1], (1, D)),                      # class_embedding
        "pos": nrm(keys[2], (S, D)),                      # position_embedding
        "pre_ln_g": jnp.ones((1, D), jnp.float32),        # pre_layrnorm
        "pre_ln_b": jnp.zeros((1, D), jnp.float32),
        "layers": [],
    }
    for li in range(LAYERS):
        lk = jax.random.split(keys[4 + li], 6)
        params["layers"].append(dict(
            ln1_g=jnp.ones((1, D), jnp.float32), ln1_b=jnp.zeros((1, D), jnp.float32),
            wq=nrm(lk[0], (D, D)), bq=jnp.zeros((1, D), jnp.float32),
            wk=nrm(lk[1], (D, D)), bk=jnp.zeros((1, D), jnp.float32),
            wv=nrm(lk[2], (D, D)), bv=jnp.zeros((1, D), jnp.float32),
            wo=nrm(lk[3], (D, D)), bo=jnp.zeros((1, D), jnp.float32),
            ln2_g=jnp.ones((1, D), jnp.float32), ln2_b=jnp.zeros((1, D), jnp.float32),
            w1=nrm(lk[4], (D, MLP)), b1=jnp.zeros((1, MLP), jnp.float32),
            w2=nrm(lk[5], (MLP, D)), b2=jnp.zeros((1, D), jnp.float32),
        ))
    return params


# ---------------- kernel-facing parameter prep (pad / fuse / stack / cast) ----------------
def _pad_cols(a, cols):
    return jnp.pad(a, ((0, 0), (0, cols - a.shape[1])))


def _prep_kernel_inputs(params):
    """Host/XLA-side constant folding into the padded bf16 kernel layout."""
    bf16 = jnp.bfloat16
    scale = 1.0 / (DH ** 0.5)

    w_patch = _pad_cols(params["w_patch"], DPAD).astype(bf16)          # (PD, DPAD)

    # shared per-token additive table: row 0 = cls + pos[0], rows 1..P = pos[1:]
    table = jnp.concatenate([params["cls"] + params["pos"][0:1],
                             params["pos"][1:]], axis=0)               # (S, D)
    pos_add = _pad_cols(table, DPAD)                                   # (S, DPAD) f32

    pre_g = _pad_cols(params["pre_ln_g"], DPAD)
    pre_b = _pad_cols(params["pre_ln_b"], DPAD)

    def fused_qkv_w(lp):
        w = jnp.zeros((DPAD, QKV), jnp.float32)
        w = w.at[:D, 0:D].set(lp["wq"] * scale)           # 1/sqrt(DH) folded in
        w = w.at[:D, DPAD:DPAD + D].set(lp["wk"])
        w = w.at[:D, 2 * DPAD:2 * DPAD + D].set(lp["wv"])
        return w.astype(bf16)

    def fused_qkv_b(lp):
        b = jnp.zeros((1, QKV), jnp.float32)
        b = b.at[:, 0:D].set(lp["bq"] * scale)
        b = b.at[:, DPAD:DPAD + D].set(lp["bk"])
        b = b.at[:, 2 * DPAD:2 * DPAD + D].set(lp["bv"])
        return b

    def out_w(lp):
        w = jnp.zeros((DPAD, DPAD), jnp.float32)
        return w.at[:D, :D].set(lp["wo"]).astype(bf16)

    L = params["layers"]
    stack = lambda fn: jnp.stack([fn(lp) for lp in L], axis=0)

    ln1g = stack(lambda lp: _pad_cols(lp["ln1_g"], DPAD))              # (L, 1, DPAD)
    ln1b = stack(lambda lp: _pad_cols(lp["ln1_b"], DPAD))
    wqkv = stack(fused_qkv_w)                                          # (L, DPAD, 3*DPAD) bf16
    bqkv = stack(fused_qkv_b)                                          # (L, 1, 3*DPAD)  f32
    wo = stack(out_w)                                                  # (L, DPAD, DPAD) bf16
    bo = stack(lambda lp: _pad_cols(lp["bo"], DPAD))
    ln2g = stack(lambda lp: _pad_cols(lp["ln2_g"], DPAD))
    ln2b = stack(lambda lp: _pad_cols(lp["ln2_b"], DPAD))
    w1 = stack(lambda lp: jnp.pad(lp["w1"],
                                  ((0, DPAD - D), (0, MLPPAD - MLP))).astype(bf16))
    b1 = stack(lambda lp: _pad_cols(lp["b1"], MLPPAD))
    w2 = stack(lambda lp: jnp.pad(lp["w2"],
                                  ((0, MLPPAD - MLP), (0, DPAD - D))).astype(bf16))
    b2 = stack(lambda lp: _pad_cols(lp["b2"], DPAD))

    return (w_patch, pos_add, pre_g, pre_b,
            ln1g, ln1b, wqkv, bqkv, wo, bo,
            ln2g, ln2b, w1, b1, w2, b2)


def _resident_spec(arr):
    """Whole-array VMEM-resident input (constant block index across the grid)."""
    zeros = (0,) * arr.ndim
    return pl.BlockSpec(arr.shape, lambda b: zeros)


# ---------------- wrapper (glue + single pallas_call over a batch grid) ----------------
def clip_vision_encoder(images, params):
    """images: (B, IMG, IMG, CH) float32 NHWC -> last_hidden_state (B, S, D)."""
    B = images.shape[0]
    g = IMG // PATCH

    # Patch extraction (non-overlapping conv-as-matmul prep), plain JAX glue;
    # an all-zero "patch" row is inserted at the [CLS] position of each image.
    patches = images.reshape(B, g, PATCH, g, PATCH, CH)
    patches = patches.transpose(0, 1, 3, 2, 4, 5).reshape(B, P, PD)
    patches = jnp.concatenate([jnp.zeros((B, 1, PD), jnp.float32), patches],
                              axis=1)                                  # (B, S, PD)

    kin = _prep_kernel_inputs(params)

    in_specs = [pl.BlockSpec((1, S, PD), lambda b: (b, 0, 0))]         # per-image tile
    in_specs += [_resident_spec(a) for a in kin]                       # shared weights
    out_spec = pl.BlockSpec((1, S, DPAD), lambda b: (b, 0, 0))

    out = pl.pallas_call(
        clip_encoder_kernel,
        out_shape=jax.ShapeDtypeStruct((B, S, DPAD), jnp.float32),
        grid=(B,),
        in_specs=in_specs,
        out_specs=out_spec,
        compiler_params=pltpu.CompilerParams(
            dimension_semantics=("parallel",)),                        # v7x: 2 TCs
    )(patches, *kin)

    # slice lane padding off; last_hidden_state (no post_layernorm), as in CLIPVisionModel
    return out[:, :, :D]


# ---------------- pure-JAX f32 reference for correctness checking ----------------
def _layernorm_ref(x, g, b):
    mu = jnp.mean(x, axis=-1, keepdims=True)
    var = jnp.mean((x - mu) ** 2, axis=-1, keepdims=True)
    return (x - mu) * jax.lax.rsqrt(var + EPS) * g + b


def clip_vision_encoder_ref(images, params):
    B = images.shape[0]
    g = IMG // PATCH
    x = images.reshape(B, g, PATCH, g, PATCH, CH)
    x = x.transpose(0, 1, 3, 2, 4, 5).reshape(B, P, PD)
    pe = jnp.einsum('bpf,fd->bpd', x, params["w_patch"])
    cls = jnp.broadcast_to(params["cls"][None], (B, 1, D))
    h = _layernorm_ref(jnp.concatenate([cls, pe], axis=1) + params["pos"][None],
                       params["pre_ln_g"], params["pre_ln_b"])
    scale = 1.0 / (DH ** 0.5)
    for lp in params["layers"]:
        y = _layernorm_ref(h, lp["ln1_g"], lp["ln1_b"])
        q = ((y @ lp["wq"] + lp["bq"]) * scale).reshape(B, S, HEADS, DH).transpose(0, 2, 1, 3)
        k = (y @ lp["wk"] + lp["bk"]).reshape(B, S, HEADS, DH).transpose(0, 2, 1, 3)
        v = (y @ lp["wv"] + lp["bv"]).reshape(B, S, HEADS, DH).transpose(0, 2, 1, 3)
        a = jax.nn.softmax(jnp.einsum('bhqd,bhkd->bhqk', q, k), axis=-1)
        ctx = jnp.einsum('bhqk,bhkd->bhqd', a, v).transpose(0, 2, 1, 3).reshape(B, S, D)
        h = h + ctx @ lp["wo"] + lp["bo"]
        y = _layernorm_ref(h, lp["ln2_g"], lp["ln2_b"])
        m = y @ lp["w1"] + lp["b1"]
        m = m * jax.nn.sigmoid(1.702 * m)
        h = h + m @ lp["w2"] + lp["b2"]
    return h


if __name__ == "__main__":
    key = jax.random.PRNGKey(0)
    k_img, k_par = jax.random.split(key)
    images = jax.random.normal(k_img, (2, IMG, IMG, CH), jnp.float32)
    params = init_params(k_par)

    out = jax.block_until_ready(jax.jit(clip_vision_encoder)(images, params))
    ref = jax.block_until_ready(clip_vision_encoder_ref(images, params))

    assert out.shape == (2, S, D), out.shape
    assert out.dtype == jnp.float32
    assert bool(jnp.all(jnp.isfinite(out)))
    # kernel matmuls use bf16 MXU operands (f32 accumulation); the reference is
    # pure f32, so the tolerance accounts for bf16 input rounding.
    max_err = float(jnp.max(jnp.abs(out - ref)))
    assert max_err < 2e-2, max_err
    print("KERNEL_OK")
</pallas_src>

<mosaic_0001>
module attributes {stable_mosaic.version = 11 : i64} {
  func.func @clip_encoder_kernel(%arg0: i32, %arg1: memref<1x5x192xf32, #tpu.memory_space<vmem>>, %arg2: memref<192x128xbf16, #tpu.memory_space<vmem>>, %arg3: memref<5x128xf32, #tpu.memory_space<vmem>>, %arg4: memref<1x128xf32, #tpu.memory_space<vmem>>, %arg5: memref<1x128xf32, #tpu.memory_space<vmem>>, %arg6: memref<2x1x128xf32, #tpu.memory_space<vmem>>, %arg7: memref<2x1x128xf32, #tpu.memory_space<vmem>>, %arg8: memref<2x128x384xbf16, #tpu.memory_space<vmem>>, %arg9: memref<2x1x384xf32, #tpu.memory_space<vmem>>, %arg10: memref<2x128x128xbf16, #tpu.memory_space<vmem>>, %arg11: memref<2x1x128xf32, #tpu.memory_space<vmem>>, %arg12: memref<2x1x128xf32, #tpu.memory_space<vmem>>, %arg13: memref<2x1x128xf32, #tpu.memory_space<vmem>>, %arg14: memref<2x128x128xbf16, #tpu.memory_space<vmem>>, %arg15: memref<2x1x128xf32, #tpu.memory_space<vmem>>, %arg16: memref<2x128x128xbf16, #tpu.memory_space<vmem>>, %arg17: memref<2x1x128xf32, #tpu.memory_space<vmem>>, %arg18: memref<1x5x128xf32, #tpu.memory_space<vmem>>) attributes {dimension_semantics = [#tpu.dimension_semantics<parallel>], iteration_bounds = array<i64: 2>, scalar_prefetch = 0 : i64, scratch_operands = 0 : i64, tpu.core_type = #tpu.core_type<tc>, window_params = [{transform_indices = @transform_0, window_bounds = array<i64: 1, 5, 192>}, {pipeline_mode = #tpu.pipeline_mode<synchronous>, transform_indices = @transform_1, window_bounds = array<i64: 192, 128>}, {pipeline_mode = #tpu.pipeline_mode<synchronous>, transform_indices = @transform_2, window_bounds = array<i64: 5, 128>}, {pipeline_mode = #tpu.pipeline_mode<synchronous>, transform_indices = @transform_3, window_bounds = array<i64: 1, 128>}, {pipeline_mode = #tpu.pipeline_mode<synchronous>, transform_indices = @transform_4, window_bounds = array<i64: 1, 128>}, {pipeline_mode = #tpu.pipeline_mode<synchronous>, transform_indices = @transform_5, window_bounds = array<i64: 2, 1, 128>}, {pipeline_mode = #tpu.pipeline_mode<synchronous>, transform_indices = @transform_6, window_bounds = array<i64: 2, 1, 128>}, {pipeline_mode = #tpu.pipeline_mode<synchronous>, transform_indices = @transform_7, window_bounds = array<i64: 2, 128, 384>}, {pipeline_mode = #tpu.pipeline_mode<synchronous>, transform_indices = @transform_8, window_bounds = array<i64: 2, 1, 384>}, {pipeline_mode = #tpu.pipeline_mode<synchronous>, transform_indices = @transform_9, window_bounds = array<i64: 2, 128, 128>}, {pipeline_mode = #tpu.pipeline_mode<synchronous>, transform_indices = @transform_10, window_bounds = array<i64: 2, 1, 128>}, {pipeline_mode = #tpu.pipeline_mode<synchronous>, transform_indices = @transform_11, window_bounds = array<i64: 2, 1, 128>}, {pipeline_mode = #tpu.pipeline_mode<synchronous>, transform_indices = @transform_12, window_bounds = array<i64: 2, 1, 128>}, {pipeline_mode = #tpu.pipeline_mode<synchronous>, transform_indices = @transform_13, window_bounds = array<i64: 2, 128, 128>}, {pipeline_mode = #tpu.pipeline_mode<synchronous>, transform_indices = @transform_14, window_bounds = array<i64: 2, 1, 128>}, {pipeline_mode = #tpu.pipeline_mode<synchronous>, transform_indices = @transform_15, window_bounds = array<i64: 2, 128, 128>}, {pipeline_mode = #tpu.pipeline_mode<synchronous>, transform_indices = @transform_16, window_bounds = array<i64: 2, 1, 128>}, {transform_indices = @transform_17, window_bounds = array<i64: 1, 5, 128>}]} {
    %0 = tpu.iota {dimensions = array<i32: 1>} : vector<1x128xi32>
    %c32_i32 = arith.constant 32 : i32
    %1 = vector.broadcast %c32_i32 : i32 to vector<1x128xi32>
    %2 = arith.cmpi slt, %0, %1 : vector<1x128xi32>
    %3 = arith.extui %2 : vector<1x128xi1> to vector<1x128xi32>
    %4 = arith.sitofp %3 : vector<1x128xi32> to vector<1x128xf32>
    %c0_i32 = arith.constant 0 : i32
    %5 = vector.broadcast %c0_i32 : i32 to vector<1x128xi32>
    %6 = arith.cmpi sge, %0, %5 : vector<1x128xi32>
    %c8_i32 = arith.constant 8 : i32
    %7 = vector.broadcast %c8_i32 : i32 to vector<1x128xi32>
    %8 = arith.cmpi slt, %0, %7 : vector<1x128xi32>
    %9 = arith.andi %6, %8 : vector<1x128xi1>
    %10 = arith.extui %9 : vector<1x128xi1> to vector<1x128xi32>
    %11 = arith.sitofp %10 : vector<1x128xi32> to vector<1x128xf32>
    %c8_i32_0 = arith.constant 8 : i32
    %12 = vector.broadcast %c8_i32_0 : i32 to vector<1x128xi32>
    %13 = arith.cmpi sge, %0, %12 : vector<1x128xi32>
    %c16_i32 = arith.constant 16 : i32
    %14 = vector.broadcast %c16_i32 : i32 to vector<1x128xi32>
    %15 = arith.cmpi slt, %0, %14 : vector<1x128xi32>
    %16 = arith.andi %13, %15 : vector<1x128xi1>
    %17 = arith.extui %16 : vector<1x128xi1> to vector<1x128xi32>
    %18 = arith.sitofp %17 : vector<1x128xi32> to vector<1x128xf32>
    %c16_i32_1 = arith.constant 16 : i32
    %19 = vector.broadcast %c16_i32_1 : i32 to vector<1x128xi32>
    %20 = arith.cmpi sge, %0, %19 : vector<1x128xi32>
    %c24_i32 = arith.constant 24 : i32
    %21 = vector.broadcast %c24_i32 : i32 to vector<1x128xi32>
    %22 = arith.cmpi slt, %0, %21 : vector<1x128xi32>
    %23 = arith.andi %20, %22 : vector<1x128xi1>
    %24 = arith.extui %23 : vector<1x128xi1> to vector<1x128xi32>
    %25 = arith.sitofp %24 : vector<1x128xi32> to vector<1x128xf32>
    %c24_i32_2 = arith.constant 24 : i32
    %26 = vector.broadcast %c24_i32_2 : i32 to vector<1x128xi32>
    %27 = arith.cmpi sge, %0, %26 : vector<1x128xi32>
    %c32_i32_3 = arith.constant 32 : i32
    %28 = vector.broadcast %c32_i32_3 : i32 to vector<1x128xi32>
    %29 = arith.cmpi slt, %0, %28 : vector<1x128xi32>
    %30 = arith.andi %27, %29 : vector<1x128xi1>
    %31 = arith.extui %30 : vector<1x128xi1> to vector<1x128xi32>
    %32 = arith.sitofp %31 : vector<1x128xi32> to vector<1x128xf32>
    %c0 = arith.constant 0 : index
    %c0_4 = arith.constant 0 : index
    %c0_5 = arith.constant 0 : index
    %33 = vector.load %arg1[%c0, %c0_4, %c0_5] : memref<1x5x192xf32, #tpu.memory_space<vmem>>, vector<1x5x192xf32>
    %34 = vector.shape_cast %33 : vector<1x5x192xf32> to vector<5x192xf32>
    %35 = arith.truncf %34 : vector<5x192xf32> to vector<5x192xbf16>
    %c0_6 = arith.constant 0 : index
    %c0_7 = arith.constant 0 : index
    %36 = vector.load %arg2[%c0_6, %c0_7] : memref<192x128xbf16, #tpu.memory_space<vmem>>, vector<192x128xbf16>
    %cst = arith.constant dense<0.000000e+00> : vector<5x128xf32>
    %37 = tpu.matmul %35, %36, %cst {dimension_numbers = #tpu.dot_dimension_numbers<[1], [0], [0], [1], [0, 0, 1, 1], [], []>} : vector<5x192xbf16>, vector<192x128xbf16>, vector<5x128xf32> -> vector<5x128xf32>
    %c0_8 = arith.constant 0 : index
    %c0_9 = arith.constant 0 : index
    %38 = vector.load %arg3[%c0_8, %c0_9] : memref<5x128xf32, #tpu.memory_space<vmem>>, vector<5x128xf32>
    %39 = arith.addf %37, %38 : vector<5x128xf32>
    %c0_10 = arith.constant 0 : index
    %c0_11 = arith.constant 0 : index
    %40 = vector.load %arg4[%c0_10, %c0_11] : memref<1x128xf32, #tpu.memory_space<vmem>>, vector<1x128xf32>
    %c0_12 = arith.constant 0 : index
    %c0_13 = arith.constant 0 : index
    %41 = vector.load %arg5[%c0_12, %c0_13] : memref<1x128xf32, #tpu.memory_space<vmem>>, vector<1x128xf32>
    %cst_14 = arith.constant dense<0.000000e+00> : vector<5xf32>
    %42 = vector.multi_reduction <add>, %39, %cst_14 [1] : vector<5x128xf32> to vector<5xf32>
    %43 = vector.shape_cast %42 : vector<5xf32> to vector<5x1xf32>
    %cst_15 = arith.constant 3.125000e-02 : f32
    %44 = vector.broadcast %cst_15 : f32 to vector<5x1xf32>
    %45 = arith.mulf %43, %44 : vector<5x1xf32>
    %46 = vector.broadcast %45 : vector<5x1xf32> to vector<5x128xf32>
    %47 = arith.subf %39, %46 : vector<5x128xf32>
    %48 = vector.broadcast %4 : vector<1x128xf32> to vector<5x128xf32>
    %49 = arith.mulf %47, %48 : vector<5x128xf32>
    %50 = arith.mulf %49, %49 : vector<5x128xf32>
    %cst_16 = arith.constant dense<0.000000e+00> : vector<5xf32>
    %51 = vector.multi_reduction <add>, %50, %cst_16 [1] : vector<5x128xf32> to vector<5xf32>
    %52 = vector.shape_cast %51 : vector<5xf32> to vector<5x1xf32>
    %cst_17 = arith.constant 3.125000e-02 : f32
    %53 = vector.broadcast %cst_17 : f32 to vector<5x1xf32>
    %54 = arith.mulf %52, %53 : vector<5x1xf32>
    %cst_18 = arith.constant 9.99999974E-6 : f32
    %55 = vector.broadcast %cst_18 : f32 to vector<5x1xf32>
    %56 = arith.addf %54, %55 : vector<5x1xf32>
    %57 = math.rsqrt %56 : vector<5x1xf32>
    %58 = vector.broadcast %57 : vector<5x1xf32> to vector<5x128xf32>
    %59 = arith.mulf %49, %58 : vector<5x128xf32>
    %60 = vector.broadcast %40 : vector<1x128xf32> to vector<5x128xf32>
    %61 = arith.mulf %59, %60 : vector<5x128xf32>
    %62 = vector.broadcast %41 : vector<1x128xf32> to vector<5x128xf32>
    %63 = arith.addf %61, %62 : vector<5x128xf32>
    %c0_19 = arith.constant 0 : index
    %c0_20 = arith.constant 0 : index
    %c0_21 = arith.constant 0 : index
    %64 = vector.load %arg6[%c0_19, %c0_20, %c0_21] : memref<2x1x128xf32, #tpu.memory_space<vmem>>, vector<1x1x128xf32>
    %65 = vector.shape_cast %64 : vector<1x1x128xf32> to vector<1x128xf32>
    %c0_22 = arith.constant 0 : index
    %c0_23 = arith.constant 0 : index
    %c0_24 = arith.constant 0 : index
    %66 = vector.load %arg7[%c0_22, %c0_23, %c0_24] : memref<2x1x128xf32, #tpu.memory_space<vmem>>, vector<1x1x128xf32>
    %67 = vector.shape_cast %66 : vector<1x1x128xf32> to vector<1x128xf32>
    %cst_25 = arith.constant dense<0.000000e+00> : vector<5xf32>
    %68 = vector.multi_reduction <add>, %63, %cst_25 [1] : vector<5x128xf32> to vector<5xf32>
    %69 = vector.shape_cast %68 : vector<5xf32> to vector<5x1xf32>
    %cst_26 = arith.constant 3.125000e-02 : f32
    %70 = vector.broadcast %cst_26 : f32 to vector<5x1xf32>
    %71 = arith.mulf %69, %70 : vector<5x1xf32>
    %72 = vector.broadcast %71 : vector<5x1xf32> to vector<5x128xf32>
    %73 = arith.subf %63, %72 : vector<5x128xf32>
    %74 = vector.broadcast %4 : vector<1x128xf32> to vector<5x128xf32>
    %75 = arith.mulf %73, %74 : vector<5x128xf32>
    %76 = arith.mulf %75, %75 : vector<5x128xf32>
    %cst_27 = arith.constant dense<0.000000e+00> : vector<5xf32>
    %77 = vector.multi_reduction <add>, %76, %cst_27 [1] : vector<5x128xf32> to vector<5xf32>
    %78 = vector.shape_cast %77 : vector<5xf32> to vector<5x1xf32>
    %cst_28 = arith.constant 3.125000e-02 : f32
    %79 = vector.broadcast %cst_28 : f32 to vector<5x1xf32>
    %80 = arith.mulf %78, %79 : vector<5x1xf32>
    %cst_29 = arith.constant 9.99999974E-6 : f32
    %81 = vector.broadcast %cst_29 : f32 to vector<5x1xf32>
    %82 = arith.addf %80, %81 : vector<5x1xf32>
    %83 = math.rsqrt %82 : vector<5x1xf32>
    %84 = vector.broadcast %83 : vector<5x1xf32> to vector<5x128xf32>
    %85 = arith.mulf %75, %84 : vector<5x128xf32>
    %86 = vector.broadcast %65 : vector<1x128xf32> to vector<5x128xf32>
    %87 = arith.mulf %85, %86 : vector<5x128xf32>
    %88 = vector.broadcast %67 : vector<1x128xf32> to vector<5x128xf32>
    %89 = arith.addf %87, %88 : vector<5x128xf32>
    %90 = arith.truncf %89 : vector<5x128xf32> to vector<5x128xbf16>
    %c0_30 = arith.constant 0 : index
    %c0_31 = arith.constant 0 : index
    %c0_32 = arith.constant 0 : index
    %91 = vector.load %arg8[%c0_30, %c0_31, %c0_32] : memref<2x128x384xbf16, #tpu.memory_space<vmem>>, vector<1x128x384xbf16>
    %92 = vector.shape_cast %91 : vector<1x128x384xbf16> to vector<128x384xbf16>
    %cst_33 = arith.constant dense<0.000000e+00> : vector<5x384xf32>
    %93 = tpu.matmul %90, %92, %cst_33 {dimension_numbers = #tpu.dot_dimension_numbers<[1], [0], [0], [1], [0, 0, 1, 1], [], []>} : vector<5x128xbf16>, vector<128x384xbf16>, vector<5x384xf32> -> vector<5x384xf32>
    %c0_34 = arith.constant 0 : index
    %c0_35 = arith.constant 0 : index
    %c0_36 = arith.constant 0 : index
    %94 = vector.load %arg9[%c0_34, %c0_35, %c0_36] : memref<2x1x384xf32, #tpu.memory_space<vmem>>, vector<1x1x384xf32>
    %95 = vector.shape_cast %94 : vector<1x1x384xf32> to vector<1x384xf32>
    %96 = vector.broadcast %95 : vector<1x384xf32> to vector<5x384xf32>
    %97 = arith.addf %93, %96 : vector<5x384xf32>
    %98 = vector.extract_strided_slice %97 {offsets = [0, 0], sizes = [5, 128], strides = [1, 1]} : vector<5x384xf32> to vector<5x128xf32>
    %99 = vector.extract_strided_slice %97 {offsets = [0, 128], sizes = [5, 128], strides = [1, 1]} : vector<5x384xf32> to vector<5x128xf32>
    %100 = vector.extract_strided_slice %97 {offsets = [0, 256], sizes = [5, 128], strides = [1, 1]} : vector<5x384xf32> to vector<5x128xf32>
    %cst_37 = arith.constant 0.000000e+00 : f32
    %101 = vector.broadcast %cst_37 : f32 to vector<5x128xf32>
    %102 = vector.broadcast %11 : vector<1x128xf32> to vector<5x128xf32>
    %103 = arith.mulf %98, %102 : vector<5x128xf32>
    %104 = arith.truncf %103 : vector<5x128xf32> to vector<5x128xbf16>
    %105 = arith.truncf %99 : vector<5x128xf32> to vector<5x128xbf16>
    %cst_38 = arith.constant dense<0.000000e+00> : vector<5x5xf32>
    %106 = tpu.matmul %104, %105, %cst_38 {dimension_numbers = #tpu.dot_dimension_numbers<[1], [1], [0], [0], [0, 0, 1, 0], [], []>} : vector<5x128xbf16>, vector<5x128xbf16>, vector<5x5xf32> -> vector<5x5xf32>
    %cst_39 = arith.constant dense<0xFF800000> : vector<5xf32>
    %107 = vector.multi_reduction <maximumf>, %106, %cst_39 [1] : vector<5x5xf32> to vector<5xf32>
    %108 = vector.shape_cast %107 : vector<5xf32> to vector<5x1xf32>
    %109 = vector.broadcast %108 : vector<5x1xf32> to vector<5x5xf32>
    %110 = arith.subf %106, %109 : vector<5x5xf32>
    %111 = math.exp %110 : vector<5x5xf32>
    %cst_40 = arith.constant dense<0.000000e+00> : vector<5xf32>
    %112 = vector.multi_reduction <add>, %111, %cst_40 [1] : vector<5x5xf32> to vector<5xf32>
    %113 = vector.shape_cast %112 : vector<5xf32> to vector<5x1xf32>
    %114 = tpu.reciprocal %113 {approx = true} : vector<5x1xf32> -> vector<5x1xf32>
    %115 = vector.broadcast %114 : vector<5x1xf32> to vector<5x5xf32>
    %116 = arith.mulf %111, %115 : vector<5x5xf32>
    %117 = arith.truncf %116 : vector<5x5xf32> to vector<5x5xbf16>
    %118 = vector.broadcast %11 : vector<1x128xf32> to vector<5x128xf32>
    %119 = arith.mulf %100, %118 : vector<5x128xf32>
    %120 = arith.truncf %119 : vector<5x128xf32> to vector<5x128xbf16>
    %cst_41 = arith.constant dense<0.000000e+00> : vector<5x128xf32>
    %121 = tpu.matmul %117, %120, %cst_41 {dimension_numbers = #tpu.dot_dimension_numbers<[1], [0], [0], [1], [0, 0, 1, 1], [], []>} : vector<5x5xbf16>, vector<5x128xbf16>, vector<5x128xf32> -> vector<5x128xf32>
    %122 = arith.addf %101, %121 : vector<5x128xf32>
    %123 = vector.broadcast %18 : vector<1x128xf32> to vector<5x128xf32>
    %124 = arith.mulf %98, %123 : vector<5x128xf32>
    %125 = arith.truncf %124 : vector<5x128xf32> to vector<5x128xbf16>
    %126 = arith.truncf %99 : vector<5x128xf32> to vector<5x128xbf16>
    %cst_42 = arith.constant dense<0.000000e+00> : vector<5x5xf32>
    %127 = tpu.matmul %125, %126, %cst_42 {dimension_numbers = #tpu.dot_dimension_numbers<[1], [1], [0], [0], [0, 0, 1, 0], [], []>} : vector<5x128xbf16>, vector<5x128xbf16>, vector<5x5xf32> -> vector<5x5xf32>
    %cst_43 = arith.constant dense<0xFF800000> : vector<5xf32>
    %128 = vector.multi_reduction <maximumf>, %127, %cst_43 [1] : vector<5x5xf32> to vector<5xf32>
    %129 = vector.shape_cast %128 : vector<5xf32> to vector<5x1xf32>
    %130 = vector.broadcast %129 : vector<5x1xf32> to vector<5x5xf32>
    %131 = arith.subf %127, %130 : vector<5x5xf32>
    %132 = math.exp %131 : vector<5x5xf32>
    %cst_44 = arith.constant dense<0.000000e+00> : vector<5xf32>
    %133 = vector.multi_reduction <add>, %132, %cst_44 [1] : vector<5x5xf32> to vector<5xf32>
    %134 = vector.shape_cast %133 : vector<5xf32> to vector<5x1xf32>
    %135 = tpu.reciprocal %134 {approx = true} : vector<5x1xf32> -> vector<5x1xf32>
    %136 = vector.broadcast %135 : vector<5x1xf32> to vector<5x5xf32>
    %137 = arith.mulf %132, %136 : vector<5x5xf32>
    %138 = arith.truncf %137 : vector<5x5xf32> to vector<5x5xbf16>
    %139 = vector.broadcast %18 : vector<1x128xf32> to vector<5x128xf32>
    %140 = arith.mulf %100, %139 : vector<5x128xf32>
    %141 = arith.truncf %140 : vector<5x128xf32> to vector<5x128xbf16>
    %cst_45 = arith.constant dense<0.000000e+00> : vector<5x128xf32>
    %142 = tpu.matmul %138, %141, %cst_45 {dimension_numbers = #tpu.dot_dimension_numbers<[1], [0], [0], [1], [0, 0, 1, 1], [], []>} : vector<5x5xbf16>, vector<5x128xbf16>, vector<5x128xf32> -> vector<5x128xf32>
    %143 = arith.addf %122, %142 : vector<5x128xf32>
    %144 = vector.broadcast %25 : vector<1x128xf32> to vector<5x128xf32>
    %145 = arith.mulf %98, %144 : vector<5x128xf32>
    %146 = arith.truncf %145 : vector<5x128xf32> to vector<5x128xbf16>
    %147 = arith.truncf %99 : vector<5x128xf32> to vector<5x128xbf16>
    %cst_46 = arith.constant dense<0.000000e+00> : vector<5x5xf32>
    %148 = tpu.matmul %146, %147, %cst_46 {dimension_numbers = #tpu.dot_dimension_numbers<[1], [1], [0], [0], [0, 0, 1, 0], [], []>} : vector<5x128xbf16>, vector<5x128xbf16>, vector<5x5xf32> -> vector<5x5xf32>
    %cst_47 = arith.constant dense<0xFF800000> : vector<5xf32>
    %149 = vector.multi_reduction <maximumf>, %148, %cst_47 [1] : vector<5x5xf32> to vector<5xf32>
    %150 = vector.shape_cast %149 : vector<5xf32> to vector<5x1xf32>
    %151 = vector.broadcast %150 : vector<5x1xf32> to vector<5x5xf32>
    %152 = arith.subf %148, %151 : vector<5x5xf32>
    %153 = math.exp %152 : vector<5x5xf32>
    %cst_48 = arith.constant dense<0.000000e+00> : vector<5xf32>
    %154 = vector.multi_reduction <add>, %153, %cst_48 [1] : vector<5x5xf32> to vector<5xf32>
    %155 = vector.shape_cast %154 : vector<5xf32> to vector<5x1xf32>
    %156 = tpu.reciprocal %155 {approx = true} : vector<5x1xf32> -> vector<5x1xf32>
    %157 = vector.broadcast %156 : vector<5x1xf32> to vector<5x5xf32>
    %158 = arith.mulf %153, %157 : vector<5x5xf32>
    %159 = arith.truncf %158 : vector<5x5xf32> to vector<5x5xbf16>
    %160 = vector.broadcast %25 : vector<1x128xf32> to vector<5x128xf32>
    %161 = arith.mulf %100, %160 : vector<5x128xf32>
    %162 = arith.truncf %161 : vector<5x128xf32> to vector<5x128xbf16>
    %cst_49 = arith.constant dense<0.000000e+00> : vector<5x128xf32>
    %163 = tpu.matmul %159, %162, %cst_49 {dimension_numbers = #tpu.dot_dimension_numbers<[1], [0], [0], [1], [0, 0, 1, 1], [], []>} : vector<5x5xbf16>, vector<5x128xbf16>, vector<5x128xf32> -> vector<5x128xf32>
    %164 = arith.addf %143, %163 : vector<5x128xf32>
    %165 = vector.broadcast %32 : vector<1x128xf32> to vector<5x128xf32>
    %166 = arith.mulf %98, %165 : vector<5x128xf32>
    %167 = arith.truncf %166 : vector<5x128xf32> to vector<5x128xbf16>
    %168 = arith.truncf %99 : vector<5x128xf32> to vector<5x128xbf16>
    %cst_50 = arith.constant dense<0.000000e+00> : vector<5x5xf32>
    %169 = tpu.matmul %167, %168, %cst_50 {dimension_numbers = #tpu.dot_dimension_numbers<[1], [1], [0], [0], [0, 0, 1, 0], [], []>} : vector<5x128xbf16>, vector<5x128xbf16>, vector<5x5xf32> -> vector<5x5xf32>
    %cst_51 = arith.constant dense<0xFF800000> : vector<5xf32>
    %170 = vector.multi_reduction <maximumf>, %169, %cst_51 [1] : vector<5x5xf32> to vector<5xf32>
    %171 = vector.shape_cast %170 : vector<5xf32> to vector<5x1xf32>
    %172 = vector.broadcast %171 : vector<5x1xf32> to vector<5x5xf32>
    %173 = arith.subf %169, %172 : vector<5x5xf32>
    %174 = math.exp %173 : vector<5x5xf32>
    %cst_52 = arith.constant dense<0.000000e+00> : vector<5xf32>
    %175 = vector.multi_reduction <add>, %174, %cst_52 [1] : vector<5x5xf32> to vector<5xf32>
    %176 = vector.shape_cast %175 : vector<5xf32> to vector<5x1xf32>
    %177 = tpu.reciprocal %176 {approx = true} : vector<5x1xf32> -> vector<5x1xf32>
    %178 = vector.broadcast %177 : vector<5x1xf32> to vector<5x5xf32>
    %179 = arith.mulf %174, %178 : vector<5x5xf32>
    %180 = arith.truncf %179 : vector<5x5xf32> to vector<5x5xbf16>
    %181 = vector.broadcast %32 : vector<1x128xf32> to vector<5x128xf32>
    %182 = arith.mulf %100, %181 : vector<5x128xf32>
    %183 = arith.truncf %182 : vector<5x128xf32> to vector<5x128xbf16>
    %cst_53 = arith.constant dense<0.000000e+00> : vector<5x128xf32>
    %184 = tpu.matmul %180, %183, %cst_53 {dimension_numbers = #tpu.dot_dimension_numbers<[1], [0], [0], [1], [0, 0, 1, 1], [], []>} : vector<5x5xbf16>, vector<5x128xbf16>, vector<5x128xf32> -> vector<5x128xf32>
    %185 = arith.addf %164, %184 : vector<5x128xf32>
    %186 = arith.truncf %185 : vector<5x128xf32> to vector<5x128xbf16>
    %c0_54 = arith.constant 0 : index
    %c0_55 = arith.constant 0 : index
    %c0_56 = arith.constant 0 : index
    %187 = vector.load %arg10[%c0_54, %c0_55, %c0_56] : memref<2x128x128xbf16, #tpu.memory_space<vmem>>, vector<1x128x128xbf16>
    %188 = vector.shape_cast %187 : vector<1x128x128xbf16> to vector<128x128xbf16>
    %cst_57 = arith.constant dense<0.000000e+00> : vector<5x128xf32>
    %189 = tpu.matmul %186, %188, %cst_57 {dimension_numbers = #tpu.dot_dimension_numbers<[1], [0], [0], [1], [0, 0, 1, 1], [], []>} : vector<5x128xbf16>, vector<128x128xbf16>, vector<5x128xf32> -> vector<5x128xf32>
    %190 = arith.addf %63, %189 : vector<5x128xf32>
    %c0_58 = arith.constant 0 : index
    %c0_59 = arith.constant 0 : index
    %c0_60 = arith.constant 0 : index
    %191 = vector.load %arg11[%c0_58, %c0_59, %c0_60] : memref<2x1x128xf32, #tpu.memory_space<vmem>>, vector<1x1x128xf32>
    %192 = vector.shape_cast %191 : vector<1x1x128xf32> to vector<1x128xf32>
    %193 = vector.broadcast %192 : vector<1x128xf32> to vector<5x128xf32>
    %194 = arith.addf %190, %193 : vector<5x128xf32>
    %c0_61 = arith.constant 0 : index
    %c0_62 = arith.constant 0 : index
    %c0_63 = arith.constant 0 : index
    %195 = vector.load %arg12[%c0_61, %c0_62, %c0_63] : memref<2x1x128xf32, #tpu.memory_space<vmem>>, vector<1x1x128xf32>
    %196 = vector.shape_cast %195 : vector<1x1x128xf32> to vector<1x128xf32>
    %c0_64 = arith.constant 0 : index
    %c0_65 = arith.constant 0 : index
    %c0_66 = arith.constant 0 : index
    %197 = vector.load %arg13[%c0_64, %c0_65, %c0_66] : memref<2x1x128xf32, #tpu.memory_space<vmem>>, vector<1x1x128xf32>
    %198 = vector.shape_cast %197 : vector<1x1x128xf32> to vector<1x128xf32>
    %cst_67 = arith.constant dense<0.000000e+00> : vector<5xf32>
    %199 = vector.multi_reduction <add>, %194, %cst_67 [1] : vector<5x128xf32> to vector<5xf32>
    %200 = vector.shape_cast %199 : vector<5xf32> to vector<5x1xf32>
    %cst_68 = arith.constant 3.125000e-02 : f32
    %201 = vector.broadcast %cst_68 : f32 to vector<5x1xf32>
    %202 = arith.mulf %200, %201 : vector<5x1xf32>
    %203 = vector.broadcast %202 : vector<5x1xf32> to vector<5x128xf32>
    %204 = arith.subf %194, %203 : vector<5x128xf32>
    %205 = vector.broadcast %4 : vector<1x128xf32> to vector<5x128xf32>
    %206 = arith.mulf %204, %205 : vector<5x128xf32>
    %207 = arith.mulf %206, %206 : vector<5x128xf32>
    %cst_69 = arith.constant dense<0.000000e+00> : vector<5xf32>
    %208 = vector.multi_reduction <add>, %207, %cst_69 [1] : vector<5x128xf32> to vector<5xf32>
    %209 = vector.shape_cast %208 : vector<5xf32> to vector<5x1xf32>
    %cst_70 = arith.constant 3.125000e-02 : f32
    %210 = vector.broadcast %cst_70 : f32 to vector<5x1xf32>
    %211 = arith.mulf %209, %210 : vector<5x1xf32>
    %cst_71 = arith.constant 9.99999974E-6 : f32
    %212 = vector.broadcast %cst_71 : f32 to vector<5x1xf32>
    %213 = arith.addf %211, %212 : vector<5x1xf32>
    %214 = math.rsqrt %213 : vector<5x1xf32>
    %215 = vector.broadcast %214 : vector<5x1xf32> to vector<5x128xf32>
    %216 = arith.mulf %206, %215 : vector<5x128xf32>
    %217 = vector.broadcast %196 : vector<1x128xf32> to vector<5x128xf32>
    %218 = arith.mulf %216, %217 : vector<5x128xf32>
    %219 = vector.broadcast %198 : vector<1x128xf32> to vector<5x128xf32>
    %220 = arith.addf %218, %219 : vector<5x128xf32>
    %221 = arith.truncf %220 : vector<5x128xf32> to vector<5x128xbf16>
    %c0_72 = arith.constant 0 : index
    %c0_73 = arith.constant 0 : index
    %c0_74 = arith.constant 0 : index
    %222 = vector.load %arg14[%c0_72, %c0_73, %c0_74] : memref<2x128x128xbf16, #tpu.memory_space<vmem>>, vector<1x128x128xbf16>
    %223 = vector.shape_cast %222 : vector<1x128x128xbf16> to vector<128x128xbf16>
    %cst_75 = arith.constant dense<0.000000e+00> : vector<5x128xf32>
    %224 = tpu.matmul %221, %223, %cst_75 {dimension_numbers = #tpu.dot_dimension_numbers<[1], [0], [0], [1], [0, 0, 1, 1], [], []>} : vector<5x128xbf16>, vector<128x128xbf16>, vector<5x128xf32> -> vector<5x128xf32>
    %c0_76 = arith.constant 0 : index
    %c0_77 = arith.constant 0 : index
    %c0_78 = arith.constant 0 : index
    %225 = vector.load %arg15[%c0_76, %c0_77, %c0_78] : memref<2x1x128xf32, #tpu.memory_space<vmem>>, vector<1x1x128xf32>
    %226 = vector.shape_cast %225 : vector<1x1x128xf32> to vector<1x128xf32>
    %227 = vector.broadcast %226 : vector<1x128xf32> to vector<5x128xf32>
    %228 = arith.addf %224, %227 : vector<5x128xf32>
    %cst_79 = arith.constant 1.702000e+00 : f32
    %229 = vector.broadcast %cst_79 : f32 to vector<5x128xf32>
    %230 = arith.mulf %229, %228 : vector<5x128xf32>
    %231 = arith.negf %230 : vector<5x128xf32>
    %232 = math.exp %231 : vector<5x128xf32>
    %cst_80 = arith.constant 1.000000e+00 : f32
    %233 = vector.broadcast %cst_80 : f32 to vector<5x128xf32>
    %234 = arith.addf %233, %232 : vector<5x128xf32>
    %235 = arith.divf %233, %234 : vector<5x128xf32>
    %236 = arith.mulf %228, %235 : vector<5x128xf32>
    %237 = arith.truncf %236 : vector<5x128xf32> to vector<5x128xbf16>
    %c0_81 = arith.constant 0 : index
    %c0_82 = arith.constant 0 : index
    %c0_83 = arith.constant 0 : index
    %238 = vector.load %arg16[%c0_81, %c0_82, %c0_83] : memref<2x128x128xbf16, #tpu.memory_space<vmem>>, vector<1x128x128xbf16>
    %239 = vector.shape_cast %238 : vector<1x128x128xbf16> to vector<128x128xbf16>
    %cst_84 = arith.constant dense<0.000000e+00> : vector<5x128xf32>
    %240 = tpu.matmul %237, %239, %cst_84 {dimension_numbers = #tpu.dot_dimension_numbers<[1], [0], [0], [1], [0, 0, 1, 1], [], []>} : vector<5x128xbf16>, vector<128x128xbf16>, vector<5x128xf32> -> vector<5x128xf32>
    %241 = arith.addf %194, %240 : vector<5x128xf32>
    %c0_85 = arith.constant 0 : index
    %c0_86 = arith.constant 0 : index
    %c0_87 = arith.constant 0 : index
    %242 = vector.load %arg17[%c0_85, %c0_86, %c0_87] : memref<2x1x128xf32, #tpu.memory_space<vmem>>, vector<1x1x128xf32>
    %243 = vector.shape_cast %242 : vector<1x1x128xf32> to vector<1x128xf32>
    %244 = vector.broadcast %243 : vector<1x128xf32> to vector<5x128xf32>
    %245 = arith.addf %241, %244 : vector<5x128xf32>
    %c1 = arith.constant 1 : index
    %c0_88 = arith.constant 0 : index
    %c0_89 = arith.constant 0 : index
    %246 = vector.load %arg6[%c1, %c0_88, %c0_89] : memref<2x1x128xf32, #tpu.memory_space<vmem>>, vector<1x1x128xf32>
    %247 = vector.shape_cast %246 : vector<1x1x128xf32> to vector<1x128xf32>
    %c1_90 = arith.constant 1 : index
    %c0_91 = arith.constant 0 : index
    %c0_92 = arith.constant 0 : index
    %248 = vector.load %arg7[%c1_90, %c0_91, %c0_92] : memref<2x1x128xf32, #tpu.memory_space<vmem>>, vector<1x1x128xf32>
    %249 = vector.shape_cast %248 : vector<1x1x128xf32> to vector<1x128xf32>
    %cst_93 = arith.constant dense<0.000000e+00> : vector<5xf32>
    %250 = vector.multi_reduction <add>, %245, %cst_93 [1] : vector<5x128xf32> to vector<5xf32>
    %251 = vector.shape_cast %250 : vector<5xf32> to vector<5x1xf32>
    %cst_94 = arith.constant 3.125000e-02 : f32
    %252 = vector.broadcast %cst_94 : f32 to vector<5x1xf32>
    %253 = arith.mulf %251, %252 : vector<5x1xf32>
    %254 = vector.broadcast %253 : vector<5x1xf32> to vector<5x128xf32>
    %255 = arith.subf %245, %254 : vector<5x128xf32>
    %256 = vector.broadcast %4 : vector<1x128xf32> to vector<5x128xf32>
    %257 = arith.mulf %255, %256 : vector<5x128xf32>
    %258 = arith.mulf %257, %257 : vector<5x128xf32>
    %cst_95 = arith.constant dense<0.000000e+00> : vector<5xf32>
    %259 = vector.multi_reduction <add>, %258, %cst_95 [1] : vector<5x128xf32> to vector<5xf32>
    %260 = vector.shape_cast %259 : vector<5xf32> to vector<5x1xf32>
    %cst_96 = arith.constant 3.125000e-02 : f32
    %261 = vector.broadcast %cst_96 : f32 to vector<5x1xf32>
    %262 = arith.mulf %260, %261 : vector<5x1xf32>
    %cst_97 = arith.constant 9.99999974E-6 : f32
    %263 = vector.broadcast %cst_97 : f32 to vector<5x1xf32>
    %264 = arith.addf %262, %263 : vector<5x1xf32>
    %265 = math.rsqrt %264 : vector<5x1xf32>
    %266 = vector.broadcast %265 : vector<5x1xf32> to vector<5x128xf32>
    %267 = arith.mulf %257, %266 : vector<5x128xf32>
    %268 = vector.broadcast %247 : vector<1x128xf32> to vector<5x128xf32>
    %269 = arith.mulf %267, %268 : vector<5x128xf32>
    %270 = vector.broadcast %249 : vector<1x128xf32> to vector<5x128xf32>
    %271 = arith.addf %269, %270 : vector<5x128xf32>
    %272 = arith.truncf %271 : vector<5x128xf32> to vector<5x128xbf16>
    %c1_98 = arith.constant 1 : index
    %c0_99 = arith.constant 0 : index
    %c0_100 = arith.constant 0 : index
    %273 = vector.load %arg8[%c1_98, %c0_99, %c0_100] : memref<2x128x384xbf16, #tpu.memory_space<vmem>>, vector<1x128x384xbf16>
    %274 = vector.shape_cast %273 : vector<1x128x384xbf16> to vector<128x384xbf16>
    %cst_101 = arith.constant dense<0.000000e+00> : vector<5x384xf32>
    %275 = tpu.matmul %272, %274, %cst_101 {dimension_numbers = #tpu.dot_dimension_numbers<[1], [0], [0], [1], [0, 0, 1, 1], [], []>} : vector<5x128xbf16>, vector<128x384xbf16>, vector<5x384xf32> -> vector<5x384xf32>
    %c1_102 = arith.constant 1 : index
    %c0_103 = arith.constant 0 : index
    %c0_104 = arith.constant 0 : index
    %276 = vector.load %arg9[%c1_102, %c0_103, %c0_104] : memref<2x1x384xf32, #tpu.memory_space<vmem>>, vector<1x1x384xf32>
    %277 = vector.shape_cast %276 : vector<1x1x384xf32> to vector<1x384xf32>
    %278 = vector.broadcast %277 : vector<1x384xf32> to vector<5x384xf32>
    %279 = arith.addf %275, %278 : vector<5x384xf32>
    %280 = vector.extract_strided_slice %279 {offsets = [0, 0], sizes = [5, 128], strides = [1, 1]} : vector<5x384xf32> to vector<5x128xf32>
    %281 = vector.extract_strided_slice %279 {offsets = [0, 128], sizes = [5, 128], strides = [1, 1]} : vector<5x384xf32> to vector<5x128xf32>
    %282 = vector.extract_strided_slice %279 {offsets = [0, 256], sizes = [5, 128], strides = [1, 1]} : vector<5x384xf32> to vector<5x128xf32>
    %cst_105 = arith.constant 0.000000e+00 : f32
    %283 = vector.broadcast %cst_105 : f32 to vector<5x128xf32>
    %284 = vector.broadcast %11 : vector<1x128xf32> to vector<5x128xf32>
    %285 = arith.mulf %280, %284 : vector<5x128xf32>
    %286 = arith.truncf %285 : vector<5x128xf32> to vector<5x128xbf16>
    %287 = arith.truncf %281 : vector<5x128xf32> to vector<5x128xbf16>
    %cst_106 = arith.constant dense<0.000000e+00> : vector<5x5xf32>
    %288 = tpu.matmul %286, %287, %cst_106 {dimension_numbers = #tpu.dot_dimension_numbers<[1], [1], [0], [0], [0, 0, 1, 0], [], []>} : vector<5x128xbf16>, vector<5x128xbf16>, vector<5x5xf32> -> vector<5x5xf32>
    %cst_107 = arith.constant dense<0xFF800000> : vector<5xf32>
    %289 = vector.multi_reduction <maximumf>, %288, %cst_107 [1] : vector<5x5xf32> to vector<5xf32>
    %290 = vector.shape_cast %289 : vector<5xf32> to vector<5x1xf32>
    %291 = vector.broadcast %290 : vector<5x1xf32> to vector<5x5xf32>
    %292 = arith.subf %288, %291 : vector<5x5xf32>
    %293 = math.exp %292 : vector<5x5xf32>
    %cst_108 = arith.constant dense<0.000000e+00> : vector<5xf32>
    %294 = vector.multi_reduction <add>, %293, %cst_108 [1] : vector<5x5xf32> to vector<5xf32>
    %295 = vector.shape_cast %294 : vector<5xf32> to vector<5x1xf32>
    %296 = tpu.reciprocal %295 {approx = true} : vector<5x1xf32> -> vector<5x1xf32>
    %297 = vector.broadcast %296 : vector<5x1xf32> to vector<5x5xf32>
    %298 = arith.mulf %293, %297 : vector<5x5xf32>
    %299 = arith.truncf %298 : vector<5x5xf32> to vector<5x5xbf16>
    %300 = vector.broadcast %11 : vector<1x128xf32> to vector<5x128xf32>
    %301 = arith.mulf %282, %300 : vector<5x128xf32>
    %302 = arith.truncf %301 : vector<5x128xf32> to vector<5x128xbf16>
    %cst_109 = arith.constant dense<0.000000e+00> : vector<5x128xf32>
    %303 = tpu.matmul %299, %302, %cst_109 {dimension_numbers = #tpu.dot_dimension_numbers<[1], [0], [0], [1], [0, 0, 1, 1], [], []>} : vector<5x5xbf16>, vector<5x128xbf16>, vector<5x128xf32> -> vector<5x128xf32>
    %304 = arith.addf %283, %303 : vector<5x128xf32>
    %305 = vector.broadcast %18 : vector<1x128xf32> to vector<5x128xf32>
    %306 = arith.mulf %280, %305 : vector<5x128xf32>
    %307 = arith.truncf %306 : vector<5x128xf32> to vector<5x128xbf16>
    %308 = arith.truncf %281 : vector<5x128xf32> to vector<5x128xbf16>
    %cst_110 = arith.constant dense<0.000000e+00> : vector<5x5xf32>
    %309 = tpu.matmul %307, %308, %cst_110 {dimension_numbers = #tpu.dot_dimension_numbers<[1], [1], [0], [0], [0, 0, 1, 0], [], []>} : vector<5x128xbf16>, vector<5x128xbf16>, vector<5x5xf32> -> vector<5x5xf32>
    %cst_111 = arith.constant dense<0xFF800000> : vector<5xf32>
    %310 = vector.multi_reduction <maximumf>, %309, %cst_111 [1] : vector<5x5xf32> to vector<5xf32>
    %311 = vector.shape_cast %310 : vector<5xf32> to vector<5x1xf32>
    %312 = vector.broadcast %311 : vector<5x1xf32> to vector<5x5xf32>
    %313 = arith.subf %309, %312 : vector<5x5xf32>
    %314 = math.exp %313 : vector<5x5xf32>
    %cst_112 = arith.constant dense<0.000000e+00> : vector<5xf32>
    %315 = vector.multi_reduction <add>, %314, %cst_112 [1] : vector<5x5xf32> to vector<5xf32>
    %316 = vector.shape_cast %315 : vector<5xf32> to vector<5x1xf32>
    %317 = tpu.reciprocal %316 {approx = true} : vector<5x1xf32> -> vector<5x1xf32>
    %318 = vector.broadcast %317 : vector<5x1xf32> to vector<5x5xf32>
    %319 = arith.mulf %314, %318 : vector<5x5xf32>
    %320 = arith.truncf %319 : vector<5x5xf32> to vector<5x5xbf16>
    %321 = vector.broadcast %18 : vector<1x128xf32> to vector<5x128xf32>
    %322 = arith.mulf %282, %321 : vector<5x128xf32>
    %323 = arith.truncf %322 : vector<5x128xf32> to vector<5x128xbf16>
    %cst_113 = arith.constant dense<0.000000e+00> : vector<5x128xf32>
    %324 = tpu.matmul %320, %323, %cst_113 {dimension_numbers = #tpu.dot_dimension_numbers<[1], [0], [0], [1], [0, 0, 1, 1], [], []>} : vector<5x5xbf16>, vector<5x128xbf16>, vector<5x128xf32> -> vector<5x128xf32>
    %325 = arith.addf %304, %324 : vector<5x128xf32>
    %326 = vector.broadcast %25 : vector<1x128xf32> to vector<5x128xf32>
    %327 = arith.mulf %280, %326 : vector<5x128xf32>
    %328 = arith.truncf %327 : vector<5x128xf32> to vector<5x128xbf16>
    %329 = arith.truncf %281 : vector<5x128xf32> to vector<5x128xbf16>
    %cst_114 = arith.constant dense<0.000000e+00> : vector<5x5xf32>
    %330 = tpu.matmul %328, %329, %cst_114 {dimension_numbers = #tpu.dot_dimension_numbers<[1], [1], [0], [0], [0, 0, 1, 0], [], []>} : vector<5x128xbf16>, vector<5x128xbf16>, vector<5x5xf32> -> vector<5x5xf32>
    %cst_115 = arith.constant dense<0xFF800000> : vector<5xf32>
    %331 = vector.multi_reduction <maximumf>, %330, %cst_115 [1] : vector<5x5xf32> to vector<5xf32>
    %332 = vector.shape_cast %331 : vector<5xf32> to vector<5x1xf32>
    %333 = vector.broadcast %332 : vector<5x1xf32> to vector<5x5xf32>
    %334 = arith.subf %330, %333 : vector<5x5xf32>
    %335 = math.exp %334 : vector<5x5xf32>
    %cst_116 = arith.constant dense<0.000000e+00> : vector<5xf32>
    %336 = vector.multi_reduction <add>, %335, %cst_116 [1] : vector<5x5xf32> to vector<5xf32>
    %337 = vector.shape_cast %336 : vector<5xf32> to vector<5x1xf32>
    %338 = tpu.reciprocal %337 {approx = true} : vector<5x1xf32> -> vector<5x1xf32>
    %339 = vector.broadcast %338 : vector<5x1xf32> to vector<5x5xf32>
    %340 = arith.mulf %335, %339 : vector<5x5xf32>
    %341 = arith.truncf %340 : vector<5x5xf32> to vector<5x5xbf16>
    %342 = vector.broadcast %25 : vector<1x128xf32> to vector<5x128xf32>
    %343 = arith.mulf %282, %342 : vector<5x128xf32>
    %344 = arith.truncf %343 : vector<5x128xf32> to vector<5x128xbf16>
    %cst_117 = arith.constant dense<0.000000e+00> : vector<5x128xf32>
    %345 = tpu.matmul %341, %344, %cst_117 {dimension_numbers = #tpu.dot_dimension_numbers<[1], [0], [0], [1], [0, 0, 1, 1], [], []>} : vector<5x5xbf16>, vector<5x128xbf16>, vector<5x128xf32> -> vector<5x128xf32>
    %346 = arith.addf %325, %345 : vector<5x128xf32>
    %347 = vector.broadcast %32 : vector<1x128xf32> to vector<5x128xf32>
    %348 = arith.mulf %280, %347 : vector<5x128xf32>
    %349 = arith.truncf %348 : vector<5x128xf32> to vector<5x128xbf16>
    %350 = arith.truncf %281 : vector<5x128xf32> to vector<5x128xbf16>
    %cst_118 = arith.constant dense<0.000000e+00> : vector<5x5xf32>
    %351 = tpu.matmul %349, %350, %cst_118 {dimension_numbers = #tpu.dot_dimension_numbers<[1], [1], [0], [0], [0, 0, 1, 0], [], []>} : vector<5x128xbf16>, vector<5x128xbf16>, vector<5x5xf32> -> vector<5x5xf32>
    %cst_119 = arith.constant dense<0xFF800000> : vector<5xf32>
    %352 = vector.multi_reduction <maximumf>, %351, %cst_119 [1] : vector<5x5xf32> to vector<5xf32>
    %353 = vector.shape_cast %352 : vector<5xf32> to vector<5x1xf32>
    %354 = vector.broadcast %353 : vector<5x1xf32> to vector<5x5xf32>
    %355 = arith.subf %351, %354 : vector<5x5xf32>
    %356 = math.exp %355 : vector<5x5xf32>
    %cst_120 = arith.constant dense<0.000000e+00> : vector<5xf32>
    %357 = vector.multi_reduction <add>, %356, %cst_120 [1] : vector<5x5xf32> to vector<5xf32>
    %358 = vector.shape_cast %357 : vector<5xf32> to vector<5x1xf32>
    %359 = tpu.reciprocal %358 {approx = true} : vector<5x1xf32> -> vector<5x1xf32>
    %360 = vector.broadcast %359 : vector<5x1xf32> to vector<5x5xf32>
    %361 = arith.mulf %356, %360 : vector<5x5xf32>
    %362 = arith.truncf %361 : vector<5x5xf32> to vector<5x5xbf16>
    %363 = vector.broadcast %32 : vector<1x128xf32> to vector<5x128xf32>
    %364 = arith.mulf %282, %363 : vector<5x128xf32>
    %365 = arith.truncf %364 : vector<5x128xf32> to vector<5x128xbf16>
    %cst_121 = arith.constant dense<0.000000e+00> : vector<5x128xf32>
    %366 = tpu.matmul %362, %365, %cst_121 {dimension_numbers = #tpu.dot_dimension_numbers<[1], [0], [0], [1], [0, 0, 1, 1], [], []>} : vector<5x5xbf16>, vector<5x128xbf16>, vector<5x128xf32> -> vector<5x128xf32>
    %367 = arith.addf %346, %366 : vector<5x128xf32>
    %368 = arith.truncf %367 : vector<5x128xf32> to vector<5x128xbf16>
    %c1_122 = arith.constant 1 : index
    %c0_123 = arith.constant 0 : index
    %c0_124 = arith.constant 0 : index
    %369 = vector.load %arg10[%c1_122, %c0_123, %c0_124] : memref<2x128x128xbf16, #tpu.memory_space<vmem>>, vector<1x128x128xbf16>
    %370 = vector.shape_cast %369 : vector<1x128x128xbf16> to vector<128x128xbf16>
    %cst_125 = arith.constant dense<0.000000e+00> : vector<5x128xf32>
    %371 = tpu.matmul %368, %370, %cst_125 {dimension_numbers = #tpu.dot_dimension_numbers<[1], [0], [0], [1], [0, 0, 1, 1], [], []>} : vector<5x128xbf16>, vector<128x128xbf16>, vector<5x128xf32> -> vector<5x128xf32>
    %372 = arith.addf %245, %371 : vector<5x128xf32>
    %c1_126 = arith.constant 1 : index
    %c0_127 = arith.constant 0 : index
    %c0_128 = arith.constant 0 : index
    %373 = vector.load %arg11[%c1_126, %c0_127, %c0_128] : memref<2x1x128xf32, #tpu.memory_space<vmem>>, vector<1x1x128xf32>
    %374 = vector.shape_cast %373 : vector<1x1x128xf32> to vector<1x128xf32>
    %375 = vector.broadcast %374 : vector<1x128xf32> to vector<5x128xf32>
    %376 = arith.addf %372, %375 : vector<5x128xf32>
    %c1_129 = arith.constant 1 : index
    %c0_130 = arith.constant 0 : index
    %c0_131 = arith.constant 0 : index
    %377 = vector.load %arg12[%c1_129, %c0_130, %c0_131] : memref<2x1x128xf32, #tpu.memory_space<vmem>>, vector<1x1x128xf32>
    %378 = vector.shape_cast %377 : vector<1x1x128xf32> to vector<1x128xf32>
    %c1_132 = arith.constant 1 : index
    %c0_133 = arith.constant 0 : index
    %c0_134 = arith.constant 0 : index
    %379 = vector.load %arg13[%c1_132, %c0_133, %c0_134] : memref<2x1x128xf32, #tpu.memory_space<vmem>>, vector<1x1x128xf32>
    %380 = vector.shape_cast %379 : vector<1x1x128xf32> to vector<1x128xf32>
    %cst_135 = arith.constant dense<0.000000e+00> : vector<5xf32>
    %381 = vector.multi_reduction <add>, %376, %cst_135 [1] : vector<5x128xf32> to vector<5xf32>
    %382 = vector.shape_cast %381 : vector<5xf32> to vector<5x1xf32>
    %cst_136 = arith.constant 3.125000e-02 : f32
    %383 = vector.broadcast %cst_136 : f32 to vector<5x1xf32>
    %384 = arith.mulf %382, %383 : vector<5x1xf32>
    %385 = vector.broadcast %384 : vector<5x1xf32> to vector<5x128xf32>
    %386 = arith.subf %376, %385 : vector<5x128xf32>
    %387 = vector.broadcast %4 : vector<1x128xf32> to vector<5x128xf32>
    %388 = arith.mulf %386, %387 : vector<5x128xf32>
    %389 = arith.mulf %388, %388 : vector<5x128xf32>
    %cst_137 = arith.constant dense<0.000000e+00> : vector<5xf32>
    %390 = vector.multi_reduction <add>, %389, %cst_137 [1] : vector<5x128xf32> to vector<5xf32>
    %391 = vector.shape_cast %390 : vector<5xf32> to vector<5x1xf32>
    %cst_138 = arith.constant 3.125000e-02 : f32
    %392 = vector.broadcast %cst_138 : f32 to vector<5x1xf32>
    %393 = arith.mulf %391, %392 : vector<5x1xf32>
    %cst_139 = arith.constant 9.99999974E-6 : f32
    %394 = vector.broadcast %cst_139 : f32 to vector<5x1xf32>
    %395 = arith.addf %393, %394 : vector<5x1xf32>
    %396 = math.rsqrt %395 : vector<5x1xf32>
    %397 = vector.broadcast %396 : vector<5x1xf32> to vector<5x128xf32>
    %398 = arith.mulf %388, %397 : vector<5x128xf32>
    %399 = vector.broadcast %378 : vector<1x128xf32> to vector<5x128xf32>
    %400 = arith.mulf %398, %399 : vector<5x128xf32>
    %401 = vector.broadcast %380 : vector<1x128xf32> to vector<5x128xf32>
    %402 = arith.addf %400, %401 : vector<5x128xf32>
    %403 = arith.truncf %402 : vector<5x128xf32> to vector<5x128xbf16>
    %c1_140 = arith.constant 1 : index
    %c0_141 = arith.constant 0 : index
    %c0_142 = arith.constant 0 : index
    %404 = vector.load %arg14[%c1_140, %c0_141, %c0_142] : memref<2x128x128xbf16, #tpu.memory_space<vmem>>, vector<1x128x128xbf16>
    %405 = vector.shape_cast %404 : vector<1x128x128xbf16> to vector<128x128xbf16>
    %cst_143 = arith.constant dense<0.000000e+00> : vector<5x128xf32>
    %406 = tpu.matmul %403, %405, %cst_143 {dimension_numbers = #tpu.dot_dimension_numbers<[1], [0], [0], [1], [0, 0, 1, 1], [], []>} : vector<5x128xbf16>, vector<128x128xbf16>, vector<5x128xf32> -> vector<5x128xf32>
    %c1_144 = arith.constant 1 : index
    %c0_145 = arith.constant 0 : index
    %c0_146 = arith.constant 0 : index
    %407 = vector.load %arg15[%c1_144, %c0_145, %c0_146] : memref<2x1x128xf32, #tpu.memory_space<vmem>>, vector<1x1x128xf32>
    %408 = vector.shape_cast %407 : vector<1x1x128xf32> to vector<1x128xf32>
    %409 = vector.broadcast %408 : vector<1x128xf32> to vector<5x128xf32>
    %410 = arith.addf %406, %409 : vector<5x128xf32>
    %cst_147 = arith.constant 1.702000e+00 : f32
    %411 = vector.broadcast %cst_147 : f32 to vector<5x128xf32>
    %412 = arith.mulf %411, %410 : vector<5x128xf32>
    %413 = arith.negf %412 : vector<5x128xf32>
    %414 = math.exp %413 : vector<5x128xf32>
    %cst_148 = arith.constant 1.000000e+00 : f32
    %415 = vector.broadcast %cst_148 : f32 to vector<5x128xf32>
    %416 = arith.addf %415, %414 : vector<5x128xf32>
    %417 = arith.divf %415, %416 : vector<5x128xf32>
    %418 = arith.mulf %410, %417 : vector<5x128xf32>
    %419 = arith.truncf %418 : vector<5x128xf32> to vector<5x128xbf16>
    %c1_149 = arith.constant 1 : index
    %c0_150 = arith.constant 0 : index
    %c0_151 = arith.constant 0 : index
    %420 = vector.load %arg16[%c1_149, %c0_150, %c0_151] : memref<2x128x128xbf16, #tpu.memory_space<vmem>>, vector<1x128x128xbf16>
    %421 = vector.shape_cast %420 : vector<1x128x128xbf16> to vector<128x128xbf16>
    %cst_152 = arith.constant dense<0.000000e+00> : vector<5x128xf32>
    %422 = tpu.matmul %419, %421, %cst_152 {dimension_numbers = #tpu.dot_dimension_numbers<[1], [0], [0], [1], [0, 0, 1, 1], [], []>} : vector<5x128xbf16>, vector<128x128xbf16>, vector<5x128xf32> -> vector<5x128xf32>
    %423 = arith.addf %376, %422 : vector<5x128xf32>
    %c1_153 = arith.constant 1 : index
    %c0_154 = arith.constant 0 : index
    %c0_155 = arith.constant 0 : index
    %424 = vector.load %arg17[%c1_153, %c0_154, %c0_155] : memref<2x1x128xf32, #tpu.memory_space<vmem>>, vector<1x1x128xf32>
    %425 = vector.shape_cast %424 : vector<1x1x128xf32> to vector<1x128xf32>
    %426 = vector.broadcast %425 : vector<1x128xf32> to vector<5x128xf32>
    %427 = arith.addf %423, %426 : vector<5x128xf32>
    %c0_156 = arith.constant 0 : index
    %c0_157 = arith.constant 0 : index
    %c0_158 = arith.constant 0 : index
    %428 = vector.load %arg18[%c0_156, %c0_157, %c0_158] : memref<1x5x128xf32, #tpu.memory_space<vmem>>, vector<1x5x128xf32>
    %429 = vector.shape_cast %428 : vector<1x5x128xf32> to vector<5x128xf32>
    %430 = vector.shape_cast %427 : vector<5x128xf32> to vector<1x5x128xf32>
    tpu.vector_store %arg18[%c0_156, %c0_157, %c0_158], %430 {strides = array<i32>} : memref<1x5x128xf32, #tpu.memory_space<vmem>>, vector<1x5x128xf32>,
    return
  }
  func.func @transform_0(%arg0: i32) -> (i32, i32, i32) {
    %c0_i32 = arith.constant 0 : i32
    %c0_i32_0 = arith.constant 0 : i32
    %c0_i32_1 = arith.constant 0 : i32
    return %arg0, %c0_i32, %c0_i32_0 : i32, i32, i32
  }
  func.func @transform_1(%arg0: i32) -> (i32, i32) {
    %c0_i32 = arith.constant 0 : i32
    %c0_i32_0 = arith.constant 0 : i32
    %c0_i32_1 = arith.constant 0 : i32
    return %c0_i32, %c0_i32_0 : i32, i32
  }
  func.func @transform_2(%arg0: i32) -> (i32, i32) {
    %c0_i32 = arith.constant 0 : i32
    %c0_i32_0 = arith.constant 0 : i32
    %c0_i32_1 = arith.constant 0 : i32
    return %c0_i32, %c0_i32_0 : i32, i32
  }
  func.func @transform_3(%arg0: i32) -> (i32, i32) {
    %c0_i32 = arith.constant 0 : i32
    %c0_i32_0 = arith.constant 0 : i32
    %c0_i32_1 = arith.constant 0 : i32
    return %c0_i32, %c0_i32_0 : i32, i32
  }
  func.func @transform_4(%arg0: i32) -> (i32, i32) {
    %c0_i32 = arith.constant 0 : i32
    %c0_i32_0 = arith.constant 0 : i32
    %c0_i32_1 = arith.constant 0 : i32
    return %c0_i32, %c0_i32_0 : i32, i32
  }
  func.func @transform_5(%arg0: i32) -> (i32, i32, i32) {
    %c0_i32 = arith.constant 0 : i32
    %c0_i32_0 = arith.constant 0 : i32
    %c0_i32_1 = arith.constant 0 : i32
    %c0_i32_2 = arith.constant 0 : i32
    return %c0_i32, %c0_i32_0, %c0_i32_1 : i32, i32, i32
  }
  func.func @transform_6(%arg0: i32) -> (i32, i32, i32) {
    %c0_i32 = arith.constant 0 : i32
    %c0_i32_0 = arith.constant 0 : i32
    %c0_i32_1 = arith.constant 0 : i32
    %c0_i32_2 = arith.constant 0 : i32
    return %c0_i32, %c0_i32_0, %c0_i32_1 : i32, i32, i32
  }
  func.func @transform_7(%arg0: i32) -> (i32, i32, i32) {
    %c0_i32 = arith.constant 0 : i32
    %c0_i32_0 = arith.constant 0 : i32
    %c0_i32_1 = arith.constant 0 : i32
    %c0_i32_2 = arith.constant 0 : i32
    return %c0_i32, %c0_i32_0, %c0_i32_1 : i32, i32, i32
  }
  func.func @transform_8(%arg0: i32) -> (i32, i32, i32) {
    %c0_i32 = arith.constant 0 : i32
    %c0_i32_0 = arith.constant 0 : i32
    %c0_i32_1 = arith.constant 0 : i32
    %c0_i32_2 = arith.constant 0 : i32
    return %c0_i32, %c0_i32_0, %c0_i32_1 : i32, i32, i32
  }
  func.func @transform_9(%arg0: i32) -> (i32, i32, i32) {
    %c0_i32 = arith.constant 0 : i32
    %c0_i32_0 = arith.constant 0 : i32
    %c0_i32_1 = arith.constant 0 : i32
    %c0_i32_2 = arith.constant 0 : i32
    return %c0_i32, %c0_i32_0, %c0_i32_1 : i32, i32, i32
  }
  func.func @transform_10(%arg0: i32) -> (i32, i32, i32) {
    %c0_i32 = arith.constant 0 : i32
    %c0_i32_0 = arith.constant 0 : i32
    %c0_i32_1 = arith.constant 0 : i32
    %c0_i32_2 = arith.constant 0 : i32
    return %c0_i32, %c0_i32_0, %c0_i32_1 : i32, i32, i32
  }
  func.func @transform_11(%arg0: i32) -> (i32, i32, i32) {
    %c0_i32 = arith.constant 0 : i32
    %c0_i32_0 = arith.constant 0 : i32
    %c0_i32_1 = arith.constant 0 : i32
    %c0_i32_2 = arith.constant 0 : i32
    return %c0_i32, %c0_i32_0, %c0_i32_1 : i32, i32, i32
  }
  func.func @transform_12(%arg0: i32) -> (i32, i32, i32) {
    %c0_i32 = arith.constant 0 : i32
    %c0_i32_0 = arith.constant 0 : i32
    %c0_i32_1 = arith.constant 0 : i32
    %c0_i32_2 = arith.constant 0 : i32
    return %c0_i32, %c0_i32_0, %c0_i32_1 : i32, i32, i32
  }
  func.func @transform_13(%arg0: i32) -> (i32, i32, i32) {
    %c0_i32 = arith.constant 0 : i32
    %c0_i32_0 = arith.constant 0 : i32
    %c0_i32_1 = arith.constant 0 : i32
    %c0_i32_2 = arith.constant 0 : i32
    return %c0_i32, %c0_i32_0, %c0_i32_1 : i32, i32, i32
  }
  func.func @transform_14(%arg0: i32) -> (i32, i32, i32) {
    %c0_i32 = arith.constant 0 : i32
    %c0_i32_0 = arith.constant 0 : i32
    %c0_i32_1 = arith.constant 0 : i32
    %c0_i32_2 = arith.constant 0 : i32
    return %c0_i32, %c0_i32_0, %c0_i32_1 : i32, i32, i32
  }
  func.func @transform_15(%arg0: i32) -> (i32, i32, i32) {
    %c0_i32 = arith.constant 0 : i32
    %c0_i32_0 = arith.constant 0 : i32
    %c0_i32_1 = arith.constant 0 : i32
    %c0_i32_2 = arith.constant 0 : i32
    return %c0_i32, %c0_i32_0, %c0_i32_1 : i32, i32, i32
  }
  func.func @transform_16(%arg0: i32) -> (i32, i32, i32) {
    %c0_i32 = arith.constant 0 : i32
    %c0_i32_0 = arith.constant 0 : i32
    %c0_i32_1 = arith.constant 0 : i32
    %c0_i32_2 = arith.constant 0 : i32
    return %c0_i32, %c0_i32_0, %c0_i32_1 : i32, i32, i32
  }
  func.func @transform_17(%arg0: i32) -> (i32, i32, i32) {
    %c0_i32 = arith.constant 0 : i32
    %c0_i32_0 = arith.constant 0 : i32
    %c0_i32_1 = arith.constant 0 : i32
    return %arg0, %c0_i32, %c0_i32_0 : i32, i32, i32
  }
}

</mosaic_0001>

<llo_original>
// kernel: clip_vision_encoder.1
$region0: #{clip_vision_encoder.1}
  #allocation0 [shape = 'u32[]', space=smem, size = 0x4, offset = 0x4, fixed_abs, tag = 'smem constant byte address 0x4 - core index']
  #allocation1 [shape = 'u32[144,128]{1,0:T(1,128)}', space=vmem, size = 0x12000, scoped, tag = 'internal scratch']
  %s0 = inlined_call_operand.vmem [shape: f32[2,5,192], index: 0, kind: input, shape index: {}]
  %s1 = inlined_call_operand.vmem [shape: bf16[192,128], index: 1, kind: input, shape index: {}]
  %s2 = inlined_call_operand.vmem [shape: f32[5,128], index: 2, kind: input, shape index: {}]
  %s3 = inlined_call_operand.vmem [shape: f32[1,128], index: 3, kind: input, shape index: {}]
  %s4 = inlined_call_operand.vmem [shape: f32[1,128], index: 4, kind: input, shape index: {}]
  %s5 = inlined_call_operand.vmem [shape: f32[2,1,128], index: 5, kind: input, shape index: {}]
  %s6 = inlined_call_operand.vmem [shape: f32[2,1,128], index: 6, kind: input, shape index: {}]
  %s7 = inlined_call_operand.vmem [shape: bf16[2,128,384], index: 7, kind: input, shape index: {}]
  %s8 = inlined_call_operand.vmem [shape: f32[2,1,384], index: 8, kind: input, shape index: {}]
  %s9 = inlined_call_operand.vmem [shape: bf16[2,128,128], index: 9, kind: input, shape index: {}]
  %s10 = inlined_call_operand.vmem [shape: f32[2,1,128], index: 10, kind: input, shape index: {}]
  %s11 = inlined_call_operand.vmem [shape: f32[2,1,128], index: 11, kind: input, shape index: {}]
  %s12 = inlined_call_operand.vmem [shape: f32[2,1,128], index: 12, kind: input, shape index: {}]
  %s13 = inlined_call_operand.vmem [shape: bf16[2,128,128], index: 13, kind: input, shape index: {}]
  %s14 = inlined_call_operand.vmem [shape: f32[2,1,128], index: 14, kind: input, shape index: {}]
  %s15 = inlined_call_operand.vmem [shape: bf16[2,128,128], index: 15, kind: input, shape index: {}]
  %s16 = inlined_call_operand.vmem [shape: f32[2,1,128], index: 16, kind: input, shape index: {}]
  %s17 = inlined_call_operand.vmem [shape: f32[2,5,128], index: 17, kind: output, shape index: {}]
  %s18 = sld [smem:[#allocation0]]
  $region101: #{clip_vision_encoder.1} parent=0
    _
  %s20 = ssub.s32 1, %s18
  %s21 = scalar_select 0, %s20, %s18
  loop: start=0, step=1, limit=4
  $region2: #{clip_vision_encoder.1} parent=0 // loop_pre_header
    _
  $region3: #{clip_vision_encoder.1} parent=0 // loop_header
    %s23 = sphi 0, %s27
    %p24 = scmp.ge.s32.totalorder %s23, 4
    %s33 = sphi 0, %s35
    %s36 = sphi 0, %s33
    %s37 = sphi 0, %s36
    %s53 = sphi 0, %s37
    %s57 = sphi 0, %s57
    %s59 = sphi 0, %s57
    %s60 = sphi 0, %s59
    %s74 = sphi 0, %s60
    %s78 = sphi 0, %s78
    %s80 = sphi 0, %s78
    %s81 = sphi 0, %s80
    %s95 = sphi 0, %s81
    %s99 = sphi 0, %s99
    %s101 = sphi 0, %s99
    %s102 = sphi 0, %s101
    %s116 = sphi 0, %s102
    %s120 = sphi 0, %s120
    %s122 = sphi 0, %s120
    %s123 = sphi 0, %s122
    %s137 = sphi 0, %s123
    %s141 = sphi 0, %s141
    %s143 = sphi 0, %s141
    %s144 = sphi 0, %s143
    %s158 = sphi 0, %s144
    %s162 = sphi 0, %s162
    %s164 = sphi 0, %s162
    %s165 = sphi 0, %s164
    %s179 = sphi 0, %s165
    %s183 = sphi 0, %s183
    %s185 = sphi 0, %s183
    %s186 = sphi 0, %s185
    %s200 = sphi 0, %s186
    %s204 = sphi 0, %s204
    %s206 = sphi 0, %s204
    %s207 = sphi 0, %s206
    %s221 = sphi 0, %s207
    %s225 = sphi 0, %s225
    %s227 = sphi 0, %s225
    %s228 = sphi 0, %s227
    %s242 = sphi 0, %s228
    %s246 = sphi 0, %s246
    %s248 = sphi 0, %s246
    %s249 = sphi 0, %s248
    %s263 = sphi 0, %s249
    %s267 = sphi 0, %s267
    %s269 = sphi 0, %s267
    %s270 = sphi 0, %s269
    %s284 = sphi 0, %s270
    %s288 = sphi 0, %s288
    %s290 = sphi 0, %s288
    %s291 = sphi 0, %s290
    %s305 = sphi 0, %s291
    %s309 = sphi 0, %s309
    %s311 = sphi 0, %s309
    %s312 = sphi 0, %s311
    %s326 = sphi 0, %s312
    %s330 = sphi 0, %s330
    %s332 = sphi 0, %s330
    %s333 = sphi 0, %s332
    %s347 = sphi 0, %s333
    %s351 = sphi 0, %s351
    %s353 = sphi 0, %s351
    %s354 = sphi 0, %s353
    %s368 = sphi 0, %s354
    %s372 = sphi 0, %s372
    %s374 = sphi 0, %s372
    %s375 = sphi 0, %s374
    %s389 = sphi 0, %s375
    %s395 = sphi 0, %s397
    %s398 = sphi 0, %s395
    %s399 = sphi 0, %s398
    %s415 = sphi 0, %s399
  $region4: #{clip_vision_encoder.1} parent=0 // loop_header_branch
    %26 = sbr.rel (%p24) target = $region8
  $region5: #{clip_vision_encoder.1} parent=0 // loop_body
    %s28 = ssub.s32 %s23, 1
    %s29 = ssub.s32 %s23, 2
    %s30 = sadd.s32 %s23, 1
    %s31 = ssub.s32 %s23, %s30
    %p32 = scmp.eq.s32.totalorder %s31, 0
    %s34 = sadd.s32 %s33, 1
    %s35 = scalar_select %p32, %s33, %s34
    %p38 = pneg %p32
    %p39 = scmp.eq.s32.totalorder %s23, 1
    %p40 = por %p38, %p39
    %p41 = scmp.ne.s32.totalorder %s33, %s36
    %p42 = scmp.eq.s32.totalorder %s23, 0
    %p43 = por %p41, %p42
    %p44 = scmp.ne.s32.totalorder %s33, %s36
    %p45 = scmp.eq.s32.totalorder %s28, 1
    %p46 = por %p44, %p45
    %p47 = scmp.ne.s32.totalorder %s36, %s37
    %p48 = scmp.eq.s32.totalorder %s28, 0
    %p49 = por %p47, %p48
    %p50 = scmp.ne.s32.totalorder %s36, %s37
    %p51 = scmp.eq.s32.totalorder %s29, 1
    %p52 = por %p50, %p51
    %p54 = scmp.ne.s32.totalorder %s37, %s53
    %p55 = scmp.eq.s32.totalorder %s29, 0
    %p56 = por %p54, %p55
    %s58 = sadd.s32 %s57, 1
    %p61 = scmp.eq.s32.totalorder %s23, 1
    %p62 = scmp.ne.s32.totalorder %s57, %s59
    %p63 = scmp.eq.s32.totalorder %s23, 0
    %p64 = por %p62, %p63
    %p65 = scmp.ne.s32.totalorder %s57, %s59
    %p66 = scmp.eq.s32.totalorder %s28, 1
    %p67 = por %p65, %p66
    %p68 = scmp.ne.s32.totalorder %s59, %s60
    %p69 = scmp.eq.s32.totalorder %s28, 0
    %p70 = por %p68, %p69
    %p71 = scmp.ne.s32.totalorder %s59, %s60
    %p72 = scmp.eq.s32.totalorder %s29, 1
    %p73 = por %p71, %p72
    %p75 = scmp.ne.s32.totalorder %s60, %s74
    %p76 = scmp.eq.s32.totalorder %s29, 0
    %p77 = por %p75, %p76
    %s79 = sadd.s32 %s78, 1
    %p82 = scmp.eq.s32.totalorder %s23, 1
    %p83 = scmp.ne.s32.totalorder %s78, %s80
    %p84 = scmp.eq.s32.totalorder %s23, 0
    %p85 = por %p83, %p84
    %p86 = scmp.ne.s32.totalorder %s78, %s80
    %p87 = scmp.eq.s32.totalorder %s28, 1
    %p88 = por %p86, %p87
    %p89 = scmp.ne.s32.totalorder %s80, %s81
    %p90 = scmp.eq.s32.totalorder %s28, 0
    %p91 = por %p89, %p90
    %p92 = scmp.ne.s32.totalorder %s80, %s81
    %p93 = scmp.eq.s32.totalorder %s29, 1
    %p94 = por %p92, %p93
    %p96 = scmp.ne.s32.totalorder %s81, %s95
    %p97 = scmp.eq.s32.totalorder %s29, 0
    %p98 = por %p96, %p97
    %s100 = sadd.s32 %s99, 1
    %p103 = scmp.eq.s32.totalorder %s23, 1
    %p104 = scmp.ne.s32.totalorder %s99, %s101
    %p105 = scmp.eq.s32.totalorder %s23, 0
    %p106 = por %p104, %p105
    %p107 = scmp.ne.s32.totalorder %s99, %s101
    %p108 = scmp.eq.s32.totalorder %s28, 1
    %p109 = por %p107, %p108
    %p110 = scmp.ne.s32.totalorder %s101, %s102
    %p111 = scmp.eq.s32.totalorder %s28, 0
    %p112 = por %p110, %p111
    %p113 = scmp.ne.s32.totalorder %s101, %s102
    %p114 = scmp.eq.s32.totalorder %s29, 1
    %p115 = por %p113, %p114
    %p117 = scmp.ne.s32.totalorder %s102, %s116
    %p118 = scmp.eq.s32.totalorder %s29, 0
    %p119 = por %p117, %p118
    %s121 = sadd.s32 %s120, 1
    %p124 = scmp.eq.s32.totalorder %s23, 1
    %p125 = scmp.ne.s32.totalorder %s120, %s122
    %p126 = scmp.eq.s32.totalorder %s23, 0
    %p127 = por %p125, %p126
    %p128 = scmp.ne.s32.totalorder %s120, %s122
    %p129 = scmp.eq.s32.totalorder %s28, 1
    %p130 = por %p128, %p129
    %p131 = scmp.ne.s32.totalorder %s122, %s123
    %p132 = scmp.eq.s32.totalorder %s28, 0
    %p133 = por %p131, %p132
    %p134 = scmp.ne.s32.totalorder %s122, %s123
    %p135 = scmp.eq.s32.totalorder %s29, 1
    %p136 = por %p134, %p135
    %p138 = scmp.ne.s32.totalorder %s123, %s137
    %p139 = scmp.eq.s32.totalorder %s29, 0
    %p140 = por %p138, %p139
    %s142 = sadd.s32 %s141, 1
    %p145 = scmp.eq.s32.totalorder %s23, 1
    %p146 = scmp.ne.s32.totalorder %s141, %s143
    %p147 = scmp.eq.s32.totalorder %s23, 0
    %p148 = por %p146, %p147
    %p149 = scmp.ne.s32.totalorder %s141, %s143
    %p150 = scmp.eq.s32.totalorder %s28, 1
    %p151 = por %p149, %p150
    %p152 = scmp.ne.s32.totalorder %s143, %s144
    %p153 = scmp.eq.s32.totalorder %s28, 0
    %p154 = por %p152, %p153
    %p155 = scmp.ne.s32.totalorder %s143, %s144
    %p156 = scmp.eq.s32.totalorder %s29, 1
    %p157 = por %p155, %p156
    %p159 = scmp.ne.s32.totalorder %s144, %s158
    %p160 = scmp.eq.s32.totalorder %s29, 0
    %p161 = por %p159, %p160
    %s163 = sadd.s32 %s162, 1
    %p166 = scmp.eq.s32.totalorder %s23, 1
    %p167 = scmp.ne.s32.totalorder %s162, %s164
    %p168 = scmp.eq.s32.totalorder %s23, 0
    %p169 = por %p167, %p168
    %p170 = scmp.ne.s32.totalorder %s162, %s164
    %p171 = scmp.eq.s32.totalorder %s28, 1
    %p172 = por %p170, %p171
    %p173 = scmp.ne.s32.totalorder %s164, %s165
    %p174 = scmp.eq.s32.totalorder %s28, 0
    %p175 = por %p173, %p174
    %p176 = scmp.ne.s32.totalorder %s164, %s165
    %p177 = scmp.eq.s32.totalorder %s29, 1
    %p178 = por %p176, %p177
    %p180 = scmp.ne.s32.totalorder %s165, %s179
    %p181 = scmp.eq.s32.totalorder %s29, 0
    %p182 = por %p180, %p181
    %s184 = sadd.s32 %s183, 1
    %p187 = scmp.eq.s32.totalorder %s23, 1
    %p188 = scmp.ne.s32.totalorder %s183, %s185
    %p189 = scmp.eq.s32.totalorder %s23, 0
    %p190 = por %p188, %p189
    %p191 = scmp.ne.s32.totalorder %s183, %s185
    %p192 = scmp.eq.s32.totalorder %s28, 1
    %p193 = por %p191, %p192
    %p194 = scmp.ne.s32.totalorder %s185, %s186
    %p195 = scmp.eq.s32.totalorder %s28, 0
    %p196 = por %p194, %p195
    %p197 = scmp.ne.s32.totalorder %s185, %s186
    %p198 = scmp.eq.s32.totalorder %s29, 1
    %p199 = por %p197, %p198
    %p201 = scmp.ne.s32.totalorder %s186, %s200
    %p202 = scmp.eq.s32.totalorder %s29, 0
    %p203 = por %p201, %p202
    %s205 = sadd.s32 %s204, 1
    %p208 = scmp.eq.s32.totalorder %s23, 1
    %p209 = scmp.ne.s32.totalorder %s204, %s206
    %p210 = scmp.eq.s32.totalorder %s23, 0
    %p211 = por %p209, %p210
    %p212 = scmp.ne.s32.totalorder %s204, %s206
    %p213 = scmp.eq.s32.totalorder %s28, 1
    %p214 = por %p212, %p213
    %p215 = scmp.ne.s32.totalorder %s206, %s207
    %p216 = scmp.eq.s32.totalorder %s28, 0
    %p217 = por %p215, %p216
    %p218 = scmp.ne.s32.totalorder %s206, %s207
    %p219 = scmp.eq.s32.totalorder %s29, 1
    %p220 = por %p218, %p219
    %p222 = scmp.ne.s32.totalorder %s207, %s221
    %p223 = scmp.eq.s32.totalorder %s29, 0
    %p224 = por %p222, %p223
    %s226 = sadd.s32 %s225, 1
    %p229 = scmp.eq.s32.totalorder %s23, 1
    %p230 = scmp.ne.s32.totalorder %s225, %s227
    %p231 = scmp.eq.s32.totalorder %s23, 0
    %p232 = por %p230, %p231
    %p233 = scmp.ne.s32.totalorder %s225, %s227
    %p234 = scmp.eq.s32.totalorder %s28, 1
    %p235 = por %p233, %p234
    %p236 = scmp.ne.s32.totalorder %s227, %s228
    %p237 = scmp.eq.s32.totalorder %s28, 0
    %p238 = por %p236, %p237
    %p239 = scmp.ne.s32.totalorder %s227, %s228
    %p240 = scmp.eq.s32.totalorder %s29, 1
    %p241 = por %p239, %p240
    %p243 = scmp.ne.s32.totalorder %s228, %s242
    %p244 = scmp.eq.s32.totalorder %s29, 0
    %p245 = por %p243, %p244
    %s247 = sadd.s32 %s246, 1
    %p250 = scmp.eq.s32.totalorder %s23, 1
    %p251 = scmp.ne.s32.totalorder %s246, %s248
    %p252 = scmp.eq.s32.totalorder %s23, 0
    %p253 = por %p251, %p252
    %p254 = scmp.ne.s32.totalorder %s246, %s248
    %p255 = scmp.eq.s32.totalorder %s28, 1
    %p256 = por %p254, %p255
    %p257 = scmp.ne.s32.totalorder %s248, %s249
    %p258 = scmp.eq.s32.totalorder %s28, 0
    %p259 = por %p257, %p258
    %p260 = scmp.ne.s32.totalorder %s248, %s249
    %p261 = scmp.eq.s32.totalorder %s29, 1
    %p262 = por %p260, %p261
    %p264 = scmp.ne.s32.totalorder %s249, %s263
    %p265 = scmp.eq.s32.totalorder %s29, 0
    %p266 = por %p264, %p265
    %s268 = sadd.s32 %s267, 1
    %p271 = scmp.eq.s32.totalorder %s23, 1
    %p272 = scmp.ne.s32.totalorder %s267, %s269
    %p273 = scmp.eq.s32.totalorder %s23, 0
    %p274 = por %p272, %p273
    %p275 = scmp.ne.s32.totalorder %s267, %s269
    %p276 = scmp.eq.s32.totalorder %s28, 1
    %p277 = por %p275, %p276
    %p278 = scmp.ne.s32.totalorder %s269, %s270
    %p279 = scmp.eq.s32.totalorder %s28, 0
    %p280 = por %p278, %p279
    %p281 = scmp.ne.s32.totalorder %s269, %s270
    %p282 = scmp.eq.s32.totalorder %s29, 1
    %p283 = por %p281, %p282
    %p285 = scmp.ne.s32.totalorder %s270, %s284
    %p286 = scmp.eq.s32.totalorder %s29, 0
    %p287 = por %p285, %p286
    %s289 = sadd.s32 %s288, 1
    %p292 = scmp.eq.s32.totalorder %s23, 1
    %p293 = scmp.ne.s32.totalorder %s288, %s290
    %p294 = scmp.eq.s32.totalorder %s23, 0
    %p295 = por %p293, %p294
    %p296 = scmp.ne.s32.totalorder %s288, %s290
    %p297 = scmp.eq.s32.totalorder %s28, 1
    %p298 = por %p296, %p297
    %p299 = scmp.ne.s32.totalorder %s290, %s291
    %p300 = scmp.eq.s32.totalorder %s28, 0
    %p301 = por %p299, %p300
    %p302 = scmp.ne.s32.totalorder %s290, %s291
    %p303 = scmp.eq.s32.totalorder %s29, 1
    %p304 = por %p302, %p303
    %p306 = scmp.ne.s32.totalorder %s291, %s305
    %p307 = scmp.eq.s32.totalorder %s29, 0
    %p308 = por %p306, %p307
    %s310 = sadd.s32 %s309, 1
    %p313 = scmp.eq.s32.totalorder %s23, 1
    %p314 = scmp.ne.s32.totalorder %s309, %s311
    %p315 = scmp.eq.s32.totalorder %s23, 0
    %p316 = por %p314, %p315
    %p317 = scmp.ne.s32.totalorder %s309, %s311
    %p318 = scmp.eq.s32.totalorder %s28, 1
    %p319 = por %p317, %p318
    %p320 = scmp.ne.s32.totalorder %s311, %s312
    %p321 = scmp.eq.s32.totalorder %s28, 0
    %p322 = por %p320, %p321
    %p323 = scmp.ne.s32.totalorder %s311, %s312
    %p324 = scmp.eq.s32.totalorder %s29, 1
    %p325 = por %p323, %p324
    %p327 = scmp.ne.s32.totalorder %s312, %s326
    %p328 = scmp.eq.s32.totalorder %s29, 0
    %p329 = por %p327, %p328
    %s331 = sadd.s32 %s330, 1
    %p334 = scmp.eq.s32.totalorder %s23, 1
    %p335 = scmp.ne.s32.totalorder %s330, %s332
    %p336 = scmp.eq.s32.totalorder %s23, 0
    %p337 = por %p335, %p336
    %p338 = scmp.ne.s32.totalorder %s330, %s332
    %p339 = scmp.eq.s32.totalorder %s28, 1
    %p340 = por %p338, %p339
    %p341 = scmp.ne.s32.totalorder %s332, %s333
    %p342 = scmp.eq.s32.totalorder %s28, 0
    %p343 = por %p341, %p342
    %p344 = scmp.ne.s32.totalorder %s332, %s333
    %p345 = scmp.eq.s32.totalorder %s29, 1
    %p346 = por %p344, %p345
    %p348 = scmp.ne.s32.totalorder %s333, %s347
    %p349 = scmp.eq.s32.totalorder %s29, 0
    %p350 = por %p348, %p349
    %s352 = sadd.s32 %s351, 1
    %p355 = scmp.eq.s32.totalorder %s23, 1
    %p356 = scmp.ne.s32.totalorder %s351, %s353
    %p357 = scmp.eq.s32.totalorder %s23, 0
    %p358 = por %p356, %p357
    %p359 = scmp.ne.s32.totalorder %s351, %s353
    %p360 = scmp.eq.s32.totalorder %s28, 1
    %p361 = por %p359, %p360
    %p362 = scmp.ne.s32.totalorder %s353, %s354
    %p363 = scmp.eq.s32.totalorder %s28, 0
    %p364 = por %p362, %p363
    %p365 = scmp.ne.s32.totalorder %s353, %s354
    %p366 = scmp.eq.s32.totalorder %s29, 1
    %p367 = por %p365, %p366
    %p369 = scmp.ne.s32.totalorder %s354, %s368
    %p370 = scmp.eq.s32.totalorder %s29, 0
    %p371 = por %p369, %p370
    %s373 = sadd.s32 %s372, 1
    %p376 = scmp.eq.s32.totalorder %s23, 1
    %p377 = scmp.ne.s32.totalorder %s372, %s374
    %p378 = scmp.eq.s32.totalorder %s23, 0
    %p379 = por %p377, %p378
    %p380 = scmp.ne.s32.totalorder %s372, %s374
    %p381 = scmp.eq.s32.totalorder %s28, 1
    %p382 = por %p380, %p381
    %p383 = scmp.ne.s32.totalorder %s374, %s375
    %p384 = scmp.eq.s32.totalorder %s28, 0
    %p385 = por %p383, %p384
    %p386 = scmp.ne.s32.totalorder %s374, %s375
    %p387 = scmp.eq.s32.totalorder %s29, 1
    %p388 = por %p386, %p387
    %p390 = scmp.ne.s32.totalorder %s375, %s389
    %p391 = scmp.eq.s32.totalorder %s29, 0
    %p392 = por %p390, %p391
    %s393 = ssub.s32 %s23, %s30
    %p394 = scmp.eq.s32.totalorder %s393, 0
    %s396 = sadd.s32 %s395, 1
    %s397 = scalar_select %p394, %s395, %s396
    %p400 = pneg %p394
    %p401 = scmp.eq.s32.totalorder %s23, 1
    %p402 = por %p400, %p401
    %p403 = scmp.ne.s32.totalorder %s395, %s398
    %p404 = scmp.eq.s32.totalorder %s23, 0
    %p405 = por %p403, %p404
    %p406 = scmp.ne.s32.totalorder %s395, %s398
    %p407 = scmp.eq.s32.totalorder %s28, 1
    %p408 = por %p406, %p407
    %p409 = scmp.ne.s32.totalorder %s398, %s399
    %p410 = scmp.eq.s32.totalorder %s28, 0
    %p411 = por %p409, %p410
    %p412 = scmp.ne.s32.totalorder %s398, %s399
    %p413 = scmp.eq.s32.totalorder %s29, 1
    %p414 = por %p412, %p413
    %p416 = scmp.ne.s32.totalorder %s399, %s415
    %p417 = scmp.eq.s32.totalorder %s29, 0
    %p418 = por %p416, %p417
    %p419 = scmp.le.s32.totalorder 1, %s23
    %p420 = scmp.lt.s32.totalorder %s23, 3
    %p421 = pnand %p419, %p420
    %p422 = pneg %p421
    // Predicated region
    $region9: #{clip_vision_encoder.1} parent=5 // pred_check
      _
    $region10: #{clip_vision_encoder.1} parent=5 // pred_check_branch
      %424 = sbr.rel (%p421) target = $region12
    $region11: #{clip_vision_encoder.1} parent=5 // pred_region
      %s425 = ssub.s32 %s23, 1
      // Predicated region
      $region13: #{clip_vision_encoder.1} parent=11 // pred_check
        %p426 = pneg %p70
      $region14: #{clip_vision_encoder.1} parent=11 // pred_check_branch
        %428 = sbr.rel (%p426) target = $region16
      $region15: #{clip_vision_encoder.1} parent=11 // pred_region
        _
      $region16: #{clip_vision_encoder.1} parent=11 // pred_fallthru
        _
      // Predicated region
      $region17: #{clip_vision_encoder.1} parent=11 // pred_check
        %p429 = pneg %p91
      $region18: #{clip_vision_encoder.1} parent=11 // pred_check_branch
        %431 = sbr.rel (%p429) target = $region20
      $region19: #{clip_vision_encoder.1} parent=11 // pred_region
        _
      $region20: #{clip_vision_encoder.1} parent=11 // pred_fallthru
        _
      // Predicated region
      $region21: #{clip_vision_encoder.1} parent=11 // pred_check
        %p432 = pneg %p112
      $region22: #{clip_vision_encoder.1} parent=11 // pred_check_branch
        %434 = sbr.rel (%p432) target = $region24
      $region23: #{clip_vision_encoder.1} parent=11 // pred_region
        _
      $region24: #{clip_vision_encoder.1} parent=11 // pred_fallthru
        _
      // Predicated region
      $region25: #{clip_vision_encoder.1} parent=11 // pred_check
        %p435 = pneg %p133
      $region26: #{clip_vision_encoder.1} parent=11 // pred_check_branch
        %437 = sbr.rel (%p435) target = $region28
      $region27: #{clip_vision_encoder.1} parent=11 // pred_region
        _
      $region28: #{clip_vision_encoder.1} parent=11 // pred_fallthru
        _
      // Predicated region
      $region29: #{clip_vision_encoder.1} parent=11 // pred_check
        %p438 = pneg %p154
      $region30: #{clip_vision_encoder.1} parent=11 // pred_check_branch
        %440 = sbr.rel (%p438) target = $region32
      $region31: #{clip_vision_encoder.1} parent=11 // pred_region
        _
      $region32: #{clip_vision_encoder.1} parent=11 // pred_fallthru
        _
      // Predicated region
      $region33: #{clip_vision_encoder.1} parent=11 // pred_check
        %p441 = pneg %p175
      $region34: #{clip_vision_encoder.1} parent=11 // pred_check_branch
        %443 = sbr.rel (%p441) target = $region36
      $region35: #{clip_vision_encoder.1} parent=11 // pred_region
        _
      $region36: #{clip_vision_encoder.1} parent=11 // pred_fallthru
        _
      // Predicated region
      $region37: #{clip_vision_encoder.1} parent=11 // pred_check
        %p444 = pneg %p196
      $region38: #{clip_vision_encoder.1} parent=11 // pred_check_branch
        %446 = sbr.rel (%p444) target = $region40
      $region39: #{clip_vision_encoder.1} parent=11 // pred_region
        _
      $region40: #{clip_vision_encoder.1} parent=11 // pred_fallthru
        _
      // Predicated region
      $region41: #{clip_vision_encoder.1} parent=11 // pred_check
        %p447 = pneg %p217
      $region42: #{clip_vision_encoder.1} parent=11 // pred_check_branch
        %449 = sbr.rel (%p447) target = $region44
      $region43: #{clip_vision_encoder.1} parent=11 // pred_region
        _
      $region44: #{clip_vision_encoder.1} parent=11 // pred_fallthru
        _
      // Predicated region
      $region45: #{clip_vision_encoder.1} parent=11 // pred_check
        %p450 = pneg %p238
      $region46: #{clip_vision_encoder.1} parent=11 // pred_check_branch
        %452 = sbr.rel (%p450) target = $region48
      $region47: #{clip_vision_encoder.1} parent=11 // pred_region
        _
      $region48: #{clip_vision_encoder.1} parent=11 // pred_fallthru
        _
      // Predicated region
      $region49: #{clip_vision_encoder.1} parent=11 // pred_check
        %p453 = pneg %p259
      $region50: #{clip_vision_encoder.1} parent=11 // pred_check_branch
        %455 = sbr.rel (%p453) target = $region52
      $region51: #{clip_vision_encoder.1} parent=11 // pred_region
        _
      $region52: #{clip_vision_encoder.1} parent=11 // pred_fallthru
        _
      // Predicated region
      $region53: #{clip_vision_encoder.1} parent=11 // pred_check
        %p456 = pneg %p280
      $region54: #{clip_vision_encoder.1} parent=11 // pred_check_branch
        %458 = sbr.rel (%p456) target = $region56
      $region55: #{clip_vision_encoder.1} parent=11 // pred_region
        _
      $region56: #{clip_vision_encoder.1} parent=11 // pred_fallthru
        _
      // Predicated region
      $region57: #{clip_vision_encoder.1} parent=11 // pred_check
        %p459 = pneg %p301
      $region58: #{clip_vision_encoder.1} parent=11 // pred_check_branch
        %461 = sbr.rel (%p459) target = $region60
      $region59: #{clip_vision_encoder.1} parent=11 // pred_region
        _
      $region60: #{clip_vision_encoder.1} parent=11 // pred_fallthru
        _
      // Predicated region
      $region61: #{clip_vision_encoder.1} parent=11 // pred_check
        %p462 = pneg %p322
      $region62: #{clip_vision_encoder.1} parent=11 // pred_check_branch
        %464 = sbr.rel (%p462) target = $region64
      $region63: #{clip_vision_encoder.1} parent=11 // pred_region
        _
      $region64: #{clip_vision_encoder.1} parent=11 // pred_fallthru
        _
      // Predicated region
      $region65: #{clip_vision_encoder.1} parent=11 // pred_check
        %p465 = pneg %p343
      $region66: #{clip_vision_encoder.1} parent=11 // pred_check_branch
        %467 = sbr.rel (%p465) target = $region68
      $region67: #{clip_vision_encoder.1} parent=11 // pred_region
        _
      $region68: #{clip_vision_encoder.1} parent=11 // pred_fallthru
        _
      // Predicated region
      $region69: #{clip_vision_encoder.1} parent=11 // pred_check
        %p468 = pneg %p364
      $region70: #{clip_vision_encoder.1} parent=11 // pred_check_branch
        %470 = sbr.rel (%p468) target = $region72
      $region71: #{clip_vision_encoder.1} parent=11 // pred_region
        _
      $region72: #{clip_vision_encoder.1} parent=11 // pred_fallthru
        _
      // Predicated region
      $region73: #{clip_vision_encoder.1} parent=11 // pred_check
        %p471 = pneg %p385
      $region74: #{clip_vision_encoder.1} parent=11 // pred_check_branch
        %473 = sbr.rel (%p471) target = $region76
      $region75: #{clip_vision_encoder.1} parent=11 // pred_region
        _
      $region76: #{clip_vision_encoder.1} parent=11 // pred_fallthru
        _
    $region12: #{clip_vision_encoder.1} parent=5 // pred_fallthru
      _
    %p474 = scmp.lt.s32.totalorder %s23, 2
    // Predicated region
    $region77: #{clip_vision_encoder.1} parent=5 // pred_check
      %p475 = pneg %p474
    $region78: #{clip_vision_encoder.1} parent=5 // pred_check_branch
      %477 = sbr.rel (%p475) target = $region80
    $region79: #{clip_vision_encoder.1} parent=5 // pred_region
      // Predicated region
      $region81: #{clip_vision_encoder.1} parent=79 // pred_check
        %p478 = pneg %p43
      $region82: #{clip_vision_encoder.1} parent=79 // pred_check_branch
        %480 = sbr.rel (%p478) target = $region84
      $region83: #{clip_vision_encoder.1} parent=79 // pred_region
        %p481 = scmp.lt.s32.totalorder %s23, 1
        %s482 = scalar_select %p481, %s23, 1
        %s483 = smul.addr %s482, 2
        %s484 = smul.addr %s483, 8
        %s485 = scalar_lea.vmem %s0, %s484
      $region84: #{clip_vision_encoder.1} parent=79 // pred_fallthru
        _
    $region80: #{clip_vision_encoder.1} parent=5 // pred_fallthru
      _
    %p486 = scmp.le.s32.totalorder 1, %s23
    %p487 = scmp.lt.s32.totalorder %s23, 3
    %p488 = pnand %p486, %p487
    %p489 = pneg %p488
    // Predicated region
    $region85: #{clip_vision_encoder.1} parent=5 // pred_check
      _
    $region86: #{clip_vision_encoder.1} parent=5 // pred_check_branch
      %491 = sbr.rel (%p488) target = $region88
    $region87: #{clip_vision_encoder.1} parent=5 // pred_region
      %s492 = ssub.s32 %s23, 1
      %p493 = scmp.lt.s32.totalorder %s28, 1
      %s494 = scalar_select %p493, %s28, 1
      %s495 = smul.addr %s494, 2
      %s496 = smul.addr %s495, 8
      %s497 = scalar_lea.vmem %s0, %s496
      %p498 = pneg %p49
      %p499 = pneg %p46
      %p500 = pneg %p70
      %p501 = pneg %p67
      %p502 = pneg %p91
      %p503 = pneg %p88
      %p504 = pneg %p112
      %p505 = pneg %p109
      %p506 = pneg %p133
      %p507 = pneg %p130
      %p508 = pneg %p154
      %p509 = pneg %p151
      %p510 = pneg %p175
      %p511 = pneg %p172
      %p512 = pneg %p196
      %p513 = pneg %p193
      %p514 = pneg %p217
      %p515 = pneg %p214
      %p516 = pneg %p238
      %p517 = pneg %p235
      %p518 = pneg %p259
      %p519 = pneg %p256
      %p520 = pneg %p280
      %p521 = pneg %p277
      %p522 = pneg %p301
      %p523 = pneg %p298
      %p524 = pneg %p322
      %p525 = pneg %p319
      %p526 = pneg %p343
      %p527 = pneg %p340
      %p528 = pneg %p364
      %p529 = pneg %p361
      %p530 = pneg %p385
      %p531 = pneg %p382
      %p532 = pneg %p411
      %p533 = pneg %p408
      %p534 = scmp.lt.s32.totalorder %s28, 1
      %s535 = scalar_select %p534, %s28, 1
      %s536 = smul.addr %s535, 8
      %s537 = scalar_lea.vmem %s17, %s536
      %p538 = scmp.lt.s32.totalorder %s28, 1
      %s539 = scalar_select %p538, %s28, 1
      %s540 = smul.addr %s539, 2
      %s541 = smul.addr %s540, 8
      %s542 = scalar_lea.vmem %s0, %s541
      %p543 = scmp.lt.s32.totalorder %s28, 1
      %s544 = scalar_select %p543, %s28, 1
      %s545 = smul.addr %s544, 8
      %s546 = scalar_lea.vmem %s17, %s545
      %v548 = vlaneseq
      %v549 = vand.u32 %v548, 127
      %vm550 = vcmp.lt.s32.totalorder %v549, 32
      %v551 = vsel %vm550, 1, 0
      %v552 = vcvt.s32.f32 %v551
      %vm553 = vcmp.ge.s32.totalorder %v549, 0
      %vm554 = vcmp.lt.s32.totalorder %v549, 8
      %vm555 = vmand %vm553, %vm554
      %v556 = vsel %vm555, 1, 0
      %v557 = vcvt.s32.f32 %v556
      %vm558 = vcmp.ge.s32.totalorder %v549, 8
      %vm559 = vcmp.lt.s32.totalorder %v549, 16
      %vm560 = vmand %vm558, %vm559
      %v561 = vsel %vm560, 1, 0
      %v562 = vcvt.s32.f32 %v561
      %vm563 = vcmp.ge.s32.totalorder %v549, 16
      %vm564 = vcmp.lt.s32.totalorder %v549, 24
      %vm565 = vmand %vm563, %vm564
      %v566 = vsel %vm565, 1, 0
      %v567 = vcvt.s32.f32 %v566
      %vm568 = vcmp.ge.s32.totalorder %v549, 24
      %vm569 = vmand %vm568, %vm550
      %v570 = vsel %vm569, 1, 0
      %v571 = vcvt.s32.f32 %v570
      %v572 = vld [vmem:[%s542] sm:$0x1f]
      %v573 = vld [vmem:[%s542 + $0x8] sm:$0x1f]
      %v574 = vpack.c.bf16 %v572, %v572
      %v575 = vpack.c.bf16 %v573, %v573
      %v576 = vld [vmem:[%s1] sm:$0xf]
      %v577 = vld [vmem:[%s1 + $0x4] sm:$0xf]
      %v578 = vld [vmem:[%s1 + $0x8] sm:$0xf]
      %v579 = vld [vmem:[%s1 + $0xc] sm:$0xf]
      %v580 = vld [vmem:[%s1 + $0x10] sm:$0xf]
      %v581 = vld [vmem:[%s1 + $0x14] sm:$0xf]
      %v582 = vld [vmem:[%s1 + $0x18] sm:$0xf]
      %v583 = vld [vmem:[%s1 + $0x1c] sm:$0xf]
      %v584 = vld [vmem:[%s1 + $0x20] sm:$0xf]
      %v585 = vld [vmem:[%s1 + $0x24] sm:$0xf]
      %v586 = vld [vmem:[%s1 + $0x28] sm:$0xf]
      %v587 = vld [vmem:[%s1 + $0x2c] sm:$0xf]
      %v588 = vld [vmem:[%s1 + $0x30] sm:$0xf]
      %v589 = vld [vmem:[%s1 + $0x34] sm:$0xf]
      %v590 = vld [vmem:[%s1 + $0x38] sm:$0xf]
      %v591 = vld [vmem:[%s1 + $0x3c] sm:$0xf]
      %v592 = vld [vmem:[%s1 + $0x40] sm:$0xf]
      %v593 = vld [vmem:[%s1 + $0x44] sm:$0xf]
      %v594 = vld [vmem:[%s1 + $0x48] sm:$0xf]
      %v595 = vld [vmem:[%s1 + $0x4c] sm:$0xf]
      %v596 = vld [vmem:[%s1 + $0x50] sm:$0xf]
      %v597 = vld [vmem:[%s1 + $0x54] sm:$0xf]
      %v598 = vld [vmem:[%s1 + $0x58] sm:$0xf]
      %v599 = vld [vmem:[%s1 + $0x5c] sm:$0xf]
      %v600 = vld [vmem:[%s2] sm:$0x1f]
      %v625 = vunpack.c.l.b16 %v576
      %v626 = vunpack.c.l.b16 %v577
      %v627 = vunpack.c.l.b16 %v578
      %v628 = vunpack.c.l.b16 %v579
      %v629 = vunpack.c.l.b16 %v580
      %v630 = vunpack.c.l.b16 %v581
      %v631 = vunpack.c.l.b16 %v582
      %v632 = vunpack.c.l.b16 %v583
      %v633 = vunpack.c.l.b16 %v584
      %v634 = vunpack.c.l.b16 %v585
      %v635 = vunpack.c.l.b16 %v586
      %v636 = vunpack.c.l.b16 %v587
      %v637 = vunpack.c.l.b16 %v588
      %v638 = vunpack.c.l.b16 %v589
      %v639 = vunpack.c.l.b16 %v590
      %v640 = vunpack.c.l.b16 %v591
      %v641 = vunpack.c.l.b16 %v592
      %v642 = vunpack.c.l.b16 %v593
      %v643 = vunpack.c.l.b16 %v594
      %v644 = vunpack.c.l.b16 %v595
      %v645 = vunpack.c.l.b16 %v596
      %v646 = vunpack.c.l.b16 %v597
      %v647 = vunpack.c.l.b16 %v598
      %v648 = vunpack.c.l.b16 %v599
      %v649 = vpack.c.b16 %v626, %v625
      %v650 = vpack.c.b16 %v628, %v627
      %v651 = vpack.c.b16 %v630, %v629
      %v652 = vpack.c.b16 %v632, %v631
      %v653 = vpack.c.b16 %v634, %v633
      %v654 = vpack.c.b16 %v636, %v635
      %v655 = vpack.c.b16 %v638, %v637
      %v656 = vpack.c.b16 %v640, %v639
      %v657 = vpack.c.b16 %v642, %v641
      %v658 = vpack.c.b16 %v644, %v643
      %v659 = vpack.c.b16 %v646, %v645
      %v660 = vpack.c.b16 %v648, %v647
      %vm673 = vcmask 523264
      %v675 = vsel %vm673, %v575, 0
      %677 = vmatprep.subr.bf16.mxu0 0
      %678 = vmatpush1.bf16.msra.mxu0 %v649
      %679 = vmatprep.subr.bf16.mxu0 0
      %680 = vmatpush1.bf16.msra.mxu0 %v650
      %681 = vmatprep.subr.bf16.mxu0 0
      %682 = vmatpush1.bf16.msra.mxu0 %v651
      %683 = vmatprep.subr.bf16.mxu0 0
      %684 = vmatpush1.bf16.msra.mxu0 %v652
      %685 = vmatprep.subr.bf16.mxu0 0
      %686 = vmatpush1.bf16.msra.mxu0 %v653
      %687 = vmatprep.subr.bf16.mxu0 0
      %688 = vmatpush1.bf16.msra.mxu0 %v654
      %689 = vmatprep.subr.bf16.mxu0 0
      %690 = vmatpush1.bf16.msra.mxu0 %v655
      %691 = vmatprep.subr.bf16.mxu0 0
      %692 = vmatpush1.bf16.msra.mxu0 %v656
      %693 = vmatprep.subr.bf16.mxu0 0
      %694 = vmatpush1.bf16.msra.mxu0 %v657
      %695 = vmatprep.subr.bf16.mxu0 0
      %696 = vmatpush1.bf16.msra.mxu0 %v658
      %697 = vmatprep.subr.bf16.mxu0 0
      %698 = vmatpush1.bf16.msra.mxu0 %v659
      %699 = vmatprep.subr.bf16.mxu0 0
      %700 = vmatpush1.bf16.msra.mxu0 %v660
      %701 = vmatprep.subr.bf16.mxu0 0
      %702 = vmatpush1.bf16.msra.mxu0 0
      %703 = vmatprep.subr.bf16.mxu0 0
      %704 = vmatpush1.bf16.msra.mxu0 0
      %705 = vmatprep.subr.bf16.mxu0 0
      %706 = vmatpush1.bf16.msra.mxu0 0
      %707 = vmatprep.subr.bf16.mxu0 0
      %708 = vmatpush1.bf16.msra.mxu0 0
      %709 = vmatprep.mubr.bf16.mxu0 %v675
      %710 = vmatmul.mubr.bf16.gmra.mrb[0].mxu0 %v574
      %v711 = vpop.f32.mrb[0].mxu0
      %v712 = vadd.f32 %v600, %v711
      %v713 = vpop.f32.mrb[0].mxu0
      %v714 = vpop.f32.mrb[0].mxu0
      %v715 = vpop.f32.mrb[0].mxu0
      %716 = vdwg.mxu0
      %v717 = vld [vmem:[%s3] sm:$0x1]
      %v718 = vld [vmem:[%s4] sm:$0x1]
      %vm719 = vcmask 1044480
      %v720 = vsel %vm719, %v712, 0.0
      %721 = vadd.xlane.f32.xlu0 %v720
      %v722 = vpop.xlane.xlu0 %721
      %v723 = vmul.f32 %v722, 0.03125
      %v724 = vsub.f32 %v712, %v723
      %v725 = vmul.f32 %v724, %v552
      %v726 = vmul.f32 %v725, %v725
      %v727 = vsel %vm719, %v726, 0.0
      %728 = vadd.xlane.f32.xlu0 %v727
      %v729 = vpop.xlane.xlu0 %728
      %v730 = vmul.f32 %v729, 0.03125
      %v731 = vadd.f32 %v730, 1e-05
      %v732 = vrsqrt.pop %v731
      %v733 = vmul.f32 %v725, %v732
      %v735 = vlaneseq
      %v736 = vshrl.u32 %v735, 7
      %v737 = vsub.s32 0, %v736
      %v738 = vrot.slane %v717, %v737
      %v740 = vmul.f32 %v733, %v738
      %v742 = vlaneseq
      %v743 = vshrl.u32 %v742, 7
      %v744 = vsub.s32 0, %v743
      %v745 = vrot.slane %v718, %v744
      %v747 = vadd.f32 %v740, %v745
      %v748 = vld [vmem:[%s5] sm:$0x1]
      %v749 = vld [vmem:[%s6] sm:$0x1]
      %v750 = vsel %vm719, %v747, 0.0
      %751 = vadd.xlane.f32.xlu0 %v750
      %v752 = vpop.xlane.xlu0 %751
      %v753 = vmul.f32 %v752, 0.03125
      %v754 = vsub.f32 %v747, %v753
      %v755 = vmul.f32 %v754, %v552
      %v756 = vmul.f32 %v755, %v755
      %v757 = vsel %vm719, %v756, 0.0
      %758 = vadd.xlane.f32.xlu0 %v757
      %v759 = vpop.xlane.xlu0 %758
      %v760 = vmul.f32 %v759, 0.03125
      %v761 = vadd.f32 %v760, 1e-05
      %v762 = vrsqrt.pop %v761
      %v763 = vmul.f32 %v755, %v762
      %v765 = vlaneseq
      %v766 = vshrl.u32 %v765, 7
      %v767 = vsub.s32 0, %v766
      %v768 = vrot.slane %v748, %v767
      %v770 = vmul.f32 %v763, %v768
      %v772 = vlaneseq
      %v773 = vshrl.u32 %v772, 7
      %v774 = vsub.s32 0, %v773
      %v775 = vrot.slane %v749, %v774
      %v777 = vadd.f32 %v770, %v775
      %v778 = vpack.c.bf16 %v777, %v777
      %v779 = vld [vmem:[%s7] sm:$0xff]
      %v780 = vld [vmem:[%s7 + $0x8] sm:$0xf]
      %v781 = vld [vmem:[%s7 + $0xc] sm:$0xff]
      %v782 = vld [vmem:[%s7 + $0x14] sm:$0xf]
      %v783 = vld [vmem:[%s7 + $0x18] sm:$0xff]
      %v784 = vld [vmem:[%s7 + $0x20] sm:$0xf]
      %v785 = vld [vmem:[%s7 + $0x24] sm:$0xff]
      %v786 = vld [vmem:[%s7 + $0x2c] sm:$0xf]
      %v787 = vld [vmem:[%s7 + $0x30] sm:$0xff]
      %v788 = vld [vmem:[%s7 + $0x38] sm:$0xf]
      %v789 = vld [vmem:[%s7 + $0x3c] sm:$0xff]
      %v790 = vld [vmem:[%s7 + $0x44] sm:$0xf]
      %v791 = vld [vmem:[%s7 + $0x48] sm:$0xff]
      %v792 = vld [vmem:[%s7 + $0x50] sm:$0xf]
      %v793 = vld [vmem:[%s7 + $0x54] sm:$0xff]
      %v794 = vld [vmem:[%s7 + $0x5c] sm:$0xf]
      %v795 = vld [vmem:[%s7 + $0x60] sm:$0xff]
      %v796 = vld [vmem:[%s7 + $0x68] sm:$0xf]
      %v797 = vld [vmem:[%s7 + $0x6c] sm:$0xff]
      %v798 = vld [vmem:[%s7 + $0x74] sm:$0xf]
      %v799 = vld [vmem:[%s7 + $0x78] sm:$0xff]
      %v800 = vld [vmem:[%s7 + $0x80] sm:$0xf]
      %v801 = vld [vmem:[%s7 + $0x84] sm:$0xff]
      %v802 = vld [vmem:[%s7 + $0x8c] sm:$0xf]
      %v803 = vld [vmem:[%s7 + $0x90] sm:$0xff]
      %v804 = vld [vmem:[%s7 + $0x98] sm:$0xf]
      %v805 = vld [vmem:[%s7 + $0x9c] sm:$0xff]
      %v806 = vld [vmem:[%s7 + $0xa4] sm:$0xf]
      %v807 = vld [vmem:[%s7 + $0xa8] sm:$0xff]
      %v808 = vld [vmem:[%s7 + $0xb0] sm:$0xf]
      %v809 = vld [vmem:[%s7 + $0xb4] sm:$0xff]
      %v810 = vld [vmem:[%s7 + $0xbc] sm:$0xf]
      %v811 = vld [vmem:[%s8] sm:$0x7]
      %v813 = vlaneseq
      %v814 = vshrl.u32 %v813, 7
      %v815 = vsub.s32 0, %v814
      %v816 = vrot.slane %v811, %v815
      %v817 = vlaneseq
      %v818 = vshrl.u32 %v817, 7
      %v819 = vsub.s32 1, %v818
      %v820 = vrot.slane %v811, %v819
      %v821 = vlaneseq
      %v822 = vshrl.u32 %v821, 7
      %v823 = vsub.s32 2, %v822
      %v824 = vrot.slane %v811, %v823
      %v860 = vunpack.c.l.b16 %v779
      %v861 = vunpack.c.h.b16 %v779
      %v862 = vunpack.c.l.b16 %v780
      %v863 = vunpack.c.l.b16 %v781
      %v864 = vunpack.c.h.b16 %v781
      %v865 = vunpack.c.l.b16 %v782
      %v866 = vunpack.c.l.b16 %v783
      %v867 = vunpack.c.h.b16 %v783
      %v868 = vunpack.c.l.b16 %v784
      %v869 = vunpack.c.l.b16 %v785
      %v870 = vunpack.c.h.b16 %v785
      %v871 = vunpack.c.l.b16 %v786
      %v872 = vunpack.c.l.b16 %v787
      %v873 = vunpack.c.h.b16 %v787
      %v874 = vunpack.c.l.b16 %v788
      %v875 = vunpack.c.l.b16 %v789
      %v876 = vunpack.c.h.b16 %v789
      %v877 = vunpack.c.l.b16 %v790
      %v878 = vunpack.c.l.b16 %v791
      %v879 = vunpack.c.h.b16 %v791
      %v880 = vunpack.c.l.b16 %v792
      %v881 = vunpack.c.l.b16 %v793
      %v882 = vunpack.c.h.b16 %v793
      %v883 = vunpack.c.l.b16 %v794
      %v884 = vunpack.c.l.b16 %v795
      %v885 = vunpack.c.h.b16 %v795
      %v886 = vunpack.c.l.b16 %v796
      %v887 = vunpack.c.l.b16 %v797
      %v888 = vunpack.c.h.b16 %v797
      %v889 = vunpack.c.l.b16 %v798
      %v890 = vunpack.c.l.b16 %v799
      %v891 = vunpack.c.h.b16 %v799
      %v892 = vunpack.c.l.b16 %v800
      %v893 = vunpack.c.l.b16 %v801
      %v894 = vunpack.c.h.b16 %v801
      %v895 = vunpack.c.l.b16 %v802
      %v896 = vunpack.c.l.b16 %v803
      %v897 = vunpack.c.h.b16 %v803
      %v898 = vunpack.c.l.b16 %v804
      %v899 = vunpack.c.l.b16 %v805
      %v900 = vunpack.c.h.b16 %v805
      %v901 = vunpack.c.l.b16 %v806
      %v902 = vunpack.c.l.b16 %v807
      %v903 = vunpack.c.h.b16 %v807
      %v904 = vunpack.c.l.b16 %v808
      %v905 = vunpack.c.l.b16 %v809
      %v906 = vunpack.c.h.b16 %v809
      %v907 = vunpack.c.l.b16 %v810
      %v908 = vpack.c.b16 %v863, %v860
      %v909 = vpack.c.b16 %v864, %v861
      %v910 = vpack.c.b16 %v865, %v862
      %v911 = vpack.c.b16 %v869, %v866
      %v912 = vpack.c.b16 %v870, %v867
      %v913 = vpack.c.b16 %v871, %v868
      %v914 = vpack.c.b16 %v875, %v872
      %v915 = vpack.c.b16 %v876, %v873
      %v916 = vpack.c.b16 %v877, %v874
      %v917 = vpack.c.b16 %v881, %v878
      %v918 = vpack.c.b16 %v882, %v879
      %v919 = vpack.c.b16 %v883, %v880
      %v920 = vpack.c.b16 %v887, %v884
      %v921 = vpack.c.b16 %v888, %v885
      %v922 = vpack.c.b16 %v889, %v886
      %v923 = vpack.c.b16 %v893, %v890
      %v924 = vpack.c.b16 %v894, %v891
      %v925 = vpack.c.b16 %v895, %v892
      %v926 = vpack.c.b16 %v899, %v896
      %v927 = vpack.c.b16 %v900, %v897
      %v928 = vpack.c.b16 %v901, %v898
      %v929 = vpack.c.b16 %v905, %v902
      %v930 = vpack.c.b16 %v906, %v903
      %v931 = vpack.c.b16 %v907, %v904
      %956 = vmatprep.subr.bf16.mxu0 %v909
      %957 = vmatpush1.bf16.msra.mxu0 %v908
      %958 = vmatprep.subr.bf16.mxu0 %v912
      %959 = vmatpush1.bf16.msra.mxu0 %v911
      %960 = vmatprep.subr.bf16.mxu0 %v915
      %961 = vmatpush1.bf16.msra.mxu0 %v914
      %962 = vmatprep.subr.bf16.mxu0 %v918
      %963 = vmatpush1.bf16.msra.mxu0 %v917
      %964 = vmatprep.subr.bf16.mxu0 %v921
      %965 = vmatpush1.bf16.msra.mxu0 %v920
      %966 = vmatprep.subr.bf16.mxu0 %v924
      %967 = vmatpush1.bf16.msra.mxu0 %v923
      %968 = vmatprep.subr.bf16.mxu0 %v927
      %969 = vmatpush1.bf16.msra.mxu0 %v926
      %970 = vmatprep.subr.bf16.mxu0 %v930
      %971 = vmatpush1.bf16.msra.mxu0 %v929
      %972 = vmatprep.subr.bf16.mxu0 0
      %973 = vmatpush1.bf16.msra.mxu0 0
      %974 = vmatprep.subr.bf16.mxu0 0
      %975 = vmatpush1.bf16.msra.mxu0 0
      %976 = vmatprep.subr.bf16.mxu0 0
      %977 = vmatpush1.bf16.msra.mxu0 0
      %978 = vmatprep.subr.bf16.mxu0 0
      %979 = vmatpush1.bf16.msra.mxu0 0
      %980 = vmatprep.subr.bf16.mxu0 0
      %981 = vmatpush1.bf16.msra.mxu0 0
      %982 = vmatprep.subr.bf16.mxu0 0
      %983 = vmatpush1.bf16.msra.mxu0 0
      %984 = vmatprep.subr.bf16.mxu0 0
      %985 = vmatpush1.bf16.msra.mxu0 0
      %986 = vmatprep.subr.bf16.mxu0 0
      %987 = vmatpush1.bf16.msra.mxu0 0
      %988 = vmatprep.mubr.bf16.mxu0 0
      %989 = vmatmul.mubr.bf16.gmra.mrb[0].mxu0 %v778
      %v990 = vpop.f32.mrb[0].mxu0
      %v991 = vadd.f32 %v816, %v990
      %v992 = vpop.f32.mrb[0].mxu0
      %v993 = vadd.f32 %v820, %v992
      %v994 = vpop.f32.mrb[0].mxu0
      %v995 = vpop.f32.mrb[0].mxu0
      %996 = vdwg.mxu0
      %997 = vmatprep.subr.bf16.mxu0 0
      %998 = vmatpush1.bf16.msra.mxu0 %v910
      %999 = vmatprep.subr.bf16.mxu0 0
      %1000 = vmatpush1.bf16.msra.mxu0 %v913
      %1001 = vmatprep.subr.bf16.mxu0 0
      %1002 = vmatpush1.bf16.msra.mxu0 %v916
      %1003 = vmatprep.subr.bf16.mxu0 0
      %1004 = vmatpush1.bf16.msra.mxu0 %v919
      %1005 = vmatprep.subr.bf16.mxu0 0
      %1006 = vmatpush1.bf16.msra.mxu0 %v922
      %1007 = vmatprep.subr.bf16.mxu0 0
      %1008 = vmatpush1.bf16.msra.mxu0 %v925
      %1009 = vmatprep.subr.bf16.mxu0 0
      %1010 = vmatpush1.bf16.msra.mxu0 %v928
      %1011 = vmatprep.subr.bf16.mxu0 0
      %1012 = vmatpush1.bf16.msra.mxu0 %v931
      %1013 = vmatprep.subr.bf16.mxu0 0
      %1014 = vmatpush1.bf16.msra.mxu0 0
      %1015 = vmatprep.subr.bf16.mxu0 0
      %1016 = vmatpush1.bf16.msra.mxu0 0
      %1017 = vmatprep.subr.bf16.mxu0 0
      %1018 = vmatpush1.bf16.msra.mxu0 0
      %1019 = vmatprep.subr.bf16.mxu0 0
      %1020 = vmatpush1.bf16.msra.mxu0 0
      %1021 = vmatprep.subr.bf16.mxu0 0
      %1022 = vmatpush1.bf16.msra.mxu0 0
      %1023 = vmatprep.subr.bf16.mxu0 0
      %1024 = vmatpush1.bf16.msra.mxu0 0
      %1025 = vmatprep.subr.bf16.mxu0 0
      %1026 = vmatpush1.bf16.msra.mxu0 0
      %1027 = vmatprep.subr.bf16.mxu0 0
      %1028 = vmatpush1.bf16.msra.mxu0 0
      %1029 = vmatprep.mubr.bf16.mxu0 0
      %1030 = vmatmul.mubr.bf16.gmra.mrb[0].mxu0 %v778
      %v1031 = vpop.f32.mrb[0].mxu0
      %v1032 = vadd.f32 %v824, %v1031
      %v1033 = vpop.f32.mrb[0].mxu0
      %v1034 = vpop.f32.mrb[0].mxu0
      %v1035 = vpop.f32.mrb[0].mxu0
      %1036 = vdwg.mxu0
      %v1037 = vmul.f32 %v991, %v557
      %v1038 = vpack.c.bf16 %v1037, %v1037
      %v1039 = vpack.c.bf16 %v993, %v993
      %1040 = vmatprep.subr.bf16.mxu0 0
      %1041 = vmatpush1.bf16.xpose.msra.mxu0 %v1039
      %1042 = vmatprep.subr.bf16.mxu0 0
      %1043 = vmatpush1.bf16.xpose.msra.mxu0 0
      %1044 = vmatprep.subr.bf16.mxu0 0
      %1045 = vmatpush1.bf16.xpose.msra.mxu0 0
      %1046 = vmatprep.subr.bf16.mxu0 0
      %1047 = vmatpush1.bf16.xpose.msra.mxu0 0
      %1048 = vmatprep.subr.bf16.mxu0 0
      %1049 = vmatpush1.bf16.xpose.msra.mxu0 0
      %1050 = vmatprep.subr.bf16.mxu0 0
      %1051 = vmatpush1.bf16.xpose.msra.mxu0 0
      %1052 = vmatprep.subr.bf16.mxu0 0
      %1053 = vmatpush1.bf16.xpose.msra.mxu0 0
      %1054 = vmatprep.subr.bf16.mxu0 0
      %1055 = vmatpush1.bf16.xpose.msra.mxu0 0
      %1056 = vmatprep.subr.bf16.mxu0 0
      %1057 = vmatpush1.bf16.xpose.msra.mxu0 0
      %1058 = vmatprep.subr.bf16.mxu0 0
      %1059 = vmatpush1.bf16.xpose.msra.mxu0 0
      %1060 = vmatprep.subr.bf16.mxu0 0
      %1061 = vmatpush1.bf16.xpose.msra.mxu0 0
      %1062 = vmatprep.subr.bf16.mxu0 0
      %1063 = vmatpush1.bf16.xpose.msra.mxu0 0
      %1064 = vmatprep.subr.bf16.mxu0 0
      %1065 = vmatpush1.bf16.xpose.msra.mxu0 0
      %1066 = vmatprep.subr.bf16.mxu0 0
      %1067 = vmatpush1.bf16.xpose.msra.mxu0 0
      %1068 = vmatprep.subr.bf16.mxu0 0
      %1069 = vmatpush1.bf16.xpose.msra.mxu0 0
      %1070 = vmatprep.subr.bf16.mxu0 0
      %1071 = vmatpush1.bf16.xpose.msra.mxu0 0
      %1072 = vmatprep.mubr.bf16.mxu0 0
      %1073 = vmatmul.mubr.bf16.gmra.mrb[0].mxu0 %v1038
      %v1074 = vpop.f32.mrb[0].mxu0
      %v1075 = vadd.f32 0.0, %v1074
      %v1076 = vpop.f32.mrb[0].mxu0
      %v1077 = vpop.f32.mrb[0].mxu0
      %v1078 = vpop.f32.mrb[0].mxu0
      %1079 = vdwg.mxu0
      %vm1080 = vcmask 36864
      %v1081 = vsel %vm1080, %v1075, -inf
      %1082 = vmax.xlane.f32.xlu0 %v1081
      %v1083 = vpop.xlane.xlu0 %1082
      %v1084 = vsub.f32 %v1075, %v1083
      %v1085 = vmul.f32 %v1084, 1.442695
      %v1086 = vpow.pop %v1085
      %v1087 = vsel %vm1080, %v1086, 0.0
      %1088 = vadd.xlane.f32.xlu0 %v1087
      %v1089 = vpop.xlane.xlu0 %1088
      %v1090 = vrcp.pop %v1089
      %v1091 = vmul.f32 %v1086, %v1090
      %v1092 = vpack.c.bf16 %v1091, %v1091
      %v1093 = vmul.f32 %v1032, %v557
      %v1094 = vpack.c.bf16 %v1093, %v1093
      %v1095 = vmul.f32 %v991, %v562
      %v1096 = vpack.c.bf16 %v1095, %v1095
      %1097 = vmatprep.subr.bf16.mxu0 0
      %1098 = vmatpush1.bf16.xpose.msra.mxu0 %v1039
      %1099 = vmatprep.subr.bf16.mxu0 0
      %1100 = vmatpush1.bf16.xpose.msra.mxu0 0
      %1101 = vmatprep.subr.bf16.mxu0 0
      %1102 = vmatpush1.bf16.xpose.msra.mxu0 0
      %1103 = vmatprep.subr.bf16.mxu0 0
      %1104 = vmatpush1.bf16.xpose.msra.mxu0 0
      %1105 = vmatprep.subr.bf16.mxu0 0
      %1106 = vmatpush1.bf16.xpose.msra.mxu0 0
      %1107 = vmatprep.subr.bf16.mxu0 0
      %1108 = vmatpush1.bf16.xpose.msra.mxu0 0
      %1109 = vmatprep.subr.bf16.mxu0 0
      %1110 = vmatpush1.bf16.xpose.msra.mxu0 0
      %1111 = vmatprep.subr.bf16.mxu0 0
      %1112 = vmatpush1.bf16.xpose.msra.mxu0 0
      %1113 = vmatprep.subr.bf16.mxu0 0
      %1114 = vmatpush1.bf16.xpose.msra.mxu0 0
      %1115 = vmatprep.subr.bf16.mxu0 0
      %1116 = vmatpush1.bf16.xpose.msra.mxu0 0
      %1117 = vmatprep.subr.bf16.mxu0 0
      %1118 = vmatpush1.bf16.xpose.msra.mxu0 0
      %1119 = vmatprep.subr.bf16.mxu0 0
      %1120 = vmatpush1.bf16.xpose.msra.mxu0 0
      %1121 = vmatprep.subr.bf16.mxu0 0
      %1122 = vmatpush1.bf16.xpose.msra.mxu0 0
      %1123 = vmatprep.subr.bf16.mxu0 0
      %1124 = vmatpush1.bf16.xpose.msra.mxu0 0
      %1125 = vmatprep.subr.bf16.mxu0 0
      %1126 = vmatpush1.bf16.xpose.msra.mxu0 0
      %1127 = vmatprep.subr.bf16.mxu0 0
      %1128 = vmatpush1.bf16.xpose.msra.mxu0 0
      %1129 = vmatprep.mubr.bf16.mxu0 0
      %1130 = vmatmul.mubr.bf16.gmra.mrb[0].mxu0 %v1096
      %v1131 = vpop.f32.mrb[0].mxu0
      %v1132 = vadd.f32 0.0, %v1131
      %v1133 = vpop.f32.mrb[0].mxu0
      %v1134 = vpop.f32.mrb[0].mxu0
      %v1135 = vpop.f32.mrb[0].mxu0
      %1136 = vdwg.mxu0
      %v1137 = vsel %vm1080, %v1132, -inf
      %1138 = vmax.xlane.f32.xlu0 %v1137
      %v1139 = vpop.xlane.xlu0 %1138
      %v1140 = vsub.f32 %v1132, %v1139
      %v1141 = vmul.f32 %v1140, 1.442695
      %v1142 = vpow.pop %v1141
      %v1143 = vsel %vm1080, %v1142, 0.0
      %1144 = vadd.xlane.f32.xlu0 %v1143
      %v1145 = vpop.xlane.xlu0 %1144
      %v1146 = vrcp.pop %v1145
      %v1147 = vmul.f32 %v1142, %v1146
      %v1148 = vpack.c.bf16 %v1147, %v1147
      %v1149 = vmul.f32 %v1032, %v562
      %v1150 = vpack.c.bf16 %v1149, %v1149
      %vm1151 = vcmask 39936
      %v1153 = vsel %vm1151, %v1148, 0
      %vm1155 = vcmask 1041408
      %vm1156 = vcmask 1042432
      %v1157 = vsel %vm1155, 4294967295, 65535
      %v1158 = vsel %vm1156, %v1157, 0
      %v1160 = vand.u32 %v1150, %v1158
      %1162 = vmatprep.subr.bf16.mxu0 0
      %1163 = vmatpush1.bf16.msra.mxu0 %v1160
      %1164 = vmatprep.subr.bf16.mxu0 0
      %1165 = vmatpush1.bf16.msra.mxu0 0
      %1166 = vmatprep.subr.bf16.mxu0 0
      %1167 = vmatpush1.bf16.msra.mxu0 0
      %1168 = vmatprep.subr.bf16.mxu0 0
      %1169 = vmatpush1.bf16.msra.mxu0 0
      %1170 = vmatprep.subr.bf16.mxu0 0
      %1171 = vmatpush1.bf16.msra.mxu0 0
      %1172 = vmatprep.subr.bf16.mxu0 0
      %1173 = vmatpush1.bf16.msra.mxu0 0
      %1174 = vmatprep.subr.bf16.mxu0 0
      %1175 = vmatpush1.bf16.msra.mxu0 0
      %1176 = vmatprep.subr.bf16.mxu0 0
      %1177 = vmatpush1.bf16.msra.mxu0 0
      %1178 = vmatprep.subr.bf16.mxu0 0
      %1179 = vmatpush1.bf16.msra.mxu0 0
      %1180 = vmatprep.subr.bf16.mxu0 0
      %1181 = vmatpush1.bf16.msra.mxu0 0
      %1182 = vmatprep.subr.bf16.mxu0 0
      %1183 = vmatpush1.bf16.msra.mxu0 0
      %1184 = vmatprep.subr.bf16.mxu0 0
      %1185 = vmatpush1.bf16.msra.mxu0 0
      %1186 = vmatprep.subr.bf16.mxu0 0
      %1187 = vmatpush1.bf16.msra.mxu0 0
      %1188 = vmatprep.subr.bf16.mxu0 0
      %1189 = vmatpush1.bf16.msra.mxu0 0
      %1190 = vmatprep.subr.bf16.mxu0 0
      %1191 = vmatpush1.bf16.msra.mxu0 0
      %1192 = vmatprep.subr.bf16.mxu0 0
      %1193 = vmatpush1.bf16.msra.mxu0 0
      %1194 = vmatprep.mubr.bf16.mxu0 0
      %1195 = vmatmul.mubr.bf16.gmra.mrb[0].mxu0 %v1153
      %v1196 = vpop.f32.mrb[0].mxu0
      %v1197 = vadd.f32 0.0, %v1196
      %v1198 = vpop.f32.mrb[0].mxu0
      %v1199 = vpop.f32.mrb[0].mxu0
      %v1200 = vpop.f32.mrb[0].mxu0
      %1201 = vdwg.mxu0
      %v1203 = vsel %vm1151, %v1092, 0
      %v1206 = vand.u32 %v1094, %v1158
      %1208 = vmatprep.subr.bf16.mxu0 0
      %1209 = vmatpush1.bf16.msra.mxu0 %v1206
      %1210 = vmatprep.subr.bf16.mxu0 0
      %1211 = vmatpush1.bf16.msra.mxu0 0
      %1212 = vmatprep.subr.bf16.mxu0 0
      %1213 = vmatpush1.bf16.msra.mxu0 0
      %1214 = vmatprep.subr.bf16.mxu0 0
      %1215 = vmatpush1.bf16.msra.mxu0 0
      %1216 = vmatprep.subr.bf16.mxu0 0
      %1217 = vmatpush1.bf16.msra.mxu0 0
      %1218 = vmatprep.subr.bf16.mxu0 0
      %1219 = vmatpush1.bf16.msra.mxu0 0
      %1220 = vmatprep.subr.bf16.mxu0 0
      %1221 = vmatpush1.bf16.msra.mxu0 0
      %1222 = vmatprep.subr.bf16.mxu0 0
      %1223 = vmatpush1.bf16.msra.mxu0 0
      %1224 = vmatprep.subr.bf16.mxu0 0
      %1225 = vmatpush1.bf16.msra.mxu0 0
      %1226 = vmatprep.subr.bf16.mxu0 0
      %1227 = vmatpush1.bf16.msra.mxu0 0
      %1228 = vmatprep.subr.bf16.mxu0 0
      %1229 = vmatpush1.bf16.msra.mxu0 0
      %1230 = vmatprep.subr.bf16.mxu0 0
      %1231 = vmatpush1.bf16.msra.mxu0 0
      %1232 = vmatprep.subr.bf16.mxu0 0
      %1233 = vmatpush1.bf16.msra.mxu0 0
      %1234 = vmatprep.subr.bf16.mxu0 0
      %1235 = vmatpush1.bf16.msra.mxu0 0
      %1236 = vmatprep.subr.bf16.mxu0 0
      %1237 = vmatpush1.bf16.msra.mxu0 0
      %1238 = vmatprep.subr.bf16.mxu0 0
      %1239 = vmatpush1.bf16.msra.mxu0 0
      %1240 = vmatprep.mubr.bf16.mxu0 0
      %1241 = vmatmul.mubr.bf16.gmra.mrb[0].mxu0 %v1203
      %v1242 = vpop.f32.mrb[0].mxu0
      %v1243 = vadd.f32 %v1197, %v1242
      %v1244 = vpop.f32.mrb[0].mxu0
      %v1245 = vpop.f32.mrb[0].mxu0
      %v1246 = vpop.f32.mrb[0].mxu0
      %1247 = vdwg.mxu0
      %v1248 = vmul.f32 %v991, %v567
      %v1249 = vpack.c.bf16 %v1248, %v1248
      %1250 = vmatprep.subr.bf16.mxu0 0
      %1251 = vmatpush1.bf16.xpose.msra.mxu0 %v1039
      %1252 = vmatprep.subr.bf16.mxu0 0
      %1253 = vmatpush1.bf16.xpose.msra.mxu0 0
      %1254 = vmatprep.subr.bf16.mxu0 0
      %1255 = vmatpush1.bf16.xpose.msra.mxu0 0
      %1256 = vmatprep.subr.bf16.mxu0 0
      %1257 = vmatpush1.bf16.xpose.msra.mxu0 0
      %1258 = vmatprep.subr.bf16.mxu0 0
      %1259 = vmatpush1.bf16.xpose.msra.mxu0 0
      %1260 = vmatprep.subr.bf16.mxu0 0
      %1261 = vmatpush1.bf16.xpose.msra.mxu0 0
      %1262 = vmatprep.subr.bf16.mxu0 0
      %1263 = vmatpush1.bf16.xpose.msra.mxu0 0
      %1264 = vmatprep.subr.bf16.mxu0 0
      %1265 = vmatpush1.bf16.xpose.msra.mxu0 0
      %1266 = vmatprep.subr.bf16.mxu0 0
      %1267 = vmatpush1.bf16.xpose.msra.mxu0 0
      %1268 = vmatprep.subr.bf16.mxu0 0
      %1269 = vmatpush1.bf16.xpose.msra.mxu0 0
      %1270 = vmatprep.subr.bf16.mxu0 0
      %1271 = vmatpush1.bf16.xpose.msra.mxu0 0
      %1272 = vmatprep.subr.bf16.mxu0 0
      %1273 = vmatpush1.bf16.xpose.msra.mxu0 0
      %1274 = vmatprep.subr.bf16.mxu0 0
      %1275 = vmatpush1.bf16.xpose.msra.mxu0 0
      %1276 = vmatprep.subr.bf16.mxu0 0
      %1277 = vmatpush1.bf16.xpose.msra.mxu0 0
      %1278 = vmatprep.subr.bf16.mxu0 0
      %1279 = vmatpush1.bf16.xpose.msra.mxu0 0
      %1280 = vmatprep.subr.bf16.mxu0 0
      %1281 = vmatpush1.bf16.xpose.msra.mxu0 0
      %1282 = vmatprep.mubr.bf16.mxu0 0
      %1283 = vmatmul.mubr.bf16.gmra.mrb[0].mxu0 %v1249
      %v1284 = vpop.f32.mrb[0].mxu0
      %v1285 = vadd.f32 0.0, %v1284
      %v1286 = vpop.f32.mrb[0].mxu0
      %v1287 = vpop.f32.mrb[0].mxu0
      %v1288 = vpop.f32.mrb[0].mxu0
      %1289 = vdwg.mxu0
      %v1290 = vsel %vm1080, %v1285, -inf
      %1291 = vmax.xlane.f32.xlu0 %v1290
      %v1292 = vpop.xlane.xlu0 %1291
      %v1293 = vsub.f32 %v1285, %v1292
      %v1294 = vmul.f32 %v1293, 1.442695
      %v1295 = vpow.pop %v1294
      %v1296 = vsel %vm1080, %v1295, 0.0
      %1297 = vadd.xlane.f32.xlu0 %v1296
      %v1298 = vpop.xlane.xlu0 %1297
      %v1299 = vrcp.pop %v1298
      %v1300 = vmul.f32 %v1295, %v1299
      %v1301 = vpack.c.bf16 %v1300, %v1300
      %v1302 = vmul.f32 %v1032, %v567
      %v1303 = vpack.c.bf16 %v1302, %v1302
      %v1305 = vsel %vm1151, %v1301, 0
      %v1308 = vand.u32 %v1303, %v1158
      %1310 = vmatprep.subr.bf16.mxu0 0
      %1311 = vmatpush1.bf16.msra.mxu0 %v1308
      %1312 = vmatprep.subr.bf16.mxu0 0
      %1313 = vmatpush1.bf16.msra.mxu0 0
      %1314 = vmatprep.subr.bf16.mxu0 0
      %1315 = vmatpush1.bf16.msra.mxu0 0
      %1316 = vmatprep.subr.bf16.mxu0 0
      %1317 = vmatpush1.bf16.msra.mxu0 0
      %1318 = vmatprep.subr.bf16.mxu0 0
      %1319 = vmatpush1.bf16.msra.mxu0 0
      %1320 = vmatprep.subr.bf16.mxu0 0
      %1321 = vmatpush1.bf16.msra.mxu0 0
      %1322 = vmatprep.subr.bf16.mxu0 0
      %1323 = vmatpush1.bf16.msra.mxu0 0
      %1324 = vmatprep.subr.bf16.mxu0 0
      %1325 = vmatpush1.bf16.msra.mxu0 0
      %1326 = vmatprep.subr.bf16.mxu0 0
      %1327 = vmatpush1.bf16.msra.mxu0 0
      %1328 = vmatprep.subr.bf16.mxu0 0
      %1329 = vmatpush1.bf16.msra.mxu0 0
      %1330 = vmatprep.subr.bf16.mxu0 0
      %1331 = vmatpush1.bf16.msra.mxu0 0
      %1332 = vmatprep.subr.bf16.mxu0 0
      %1333 = vmatpush1.bf16.msra.mxu0 0
      %1334 = vmatprep.subr.bf16.mxu0 0
      %1335 = vmatpush1.bf16.msra.mxu0 0
      %1336 = vmatprep.subr.bf16.mxu0 0
      %1337 = vmatpush1.bf16.msra.mxu0 0
      %1338 = vmatprep.subr.bf16.mxu0 0
      %1339 = vmatpush1.bf16.msra.mxu0 0
      %1340 = vmatprep.subr.bf16.mxu0 0
      %1341 = vmatpush1.bf16.msra.mxu0 0
      %1342 = vmatprep.mubr.bf16.mxu0 0
      %1343 = vmatmul.mubr.bf16.gmra.mrb[0].mxu0 %v1305
      %v1344 = vpop.f32.mrb[0].mxu0
      %v1345 = vadd.f32 0.0, %v1344
      %v1346 = vpop.f32.mrb[0].mxu0
      %v1347 = vpop.f32.mrb[0].mxu0
      %v1348 = vpop.f32.mrb[0].mxu0
      %1349 = vdwg.mxu0
      %v1350 = vadd.f32 %v1243, %v1345
      %v1351 = vmul.f32 %v991, %v571
      %v1352 = vpack.c.bf16 %v1351, %v1351
      %1353 = vmatprep.subr.bf16.mxu0 0
      %1354 = vmatpush1.bf16.xpose.msra.mxu0 %v1039
      %1355 = vmatprep.subr.bf16.mxu0 0
      %1356 = vmatpush1.bf16.xpose.msra.mxu0 0
      %1357 = vmatprep.subr.bf16.mxu0 0
      %1358 = vmatpush1.bf16.xpose.msra.mxu0 0
      %1359 = vmatprep.subr.bf16.mxu0 0
      %1360 = vmatpush1.bf16.xpose.msra.mxu0 0
      %1361 = vmatprep.subr.bf16.mxu0 0
      %1362 = vmatpush1.bf16.xpose.msra.mxu0 0
      %1363 = vmatprep.subr.bf16.mxu0 0
      %1364 = vmatpush1.bf16.xpose.msra.mxu0 0
      %1365 = vmatprep.subr.bf16.mxu0 0
      %1366 = vmatpush1.bf16.xpose.msra.mxu0 0
      %1367 = vmatprep.subr.bf16.mxu0 0
      %1368 = vmatpush1.bf16.xpose.msra.mxu0 0
      %1369 = vmatprep.subr.bf16.mxu0 0
      %1370 = vmatpush1.bf16.xpose.msra.mxu0 0
      %1371 = vmatprep.subr.bf16.mxu0 0
      %1372 = vmatpush1.bf16.xpose.msra.mxu0 0
      %1373 = vmatprep.subr.bf16.mxu0 0
      %1374 = vmatpush1.bf16.xpose.msra.mxu0 0
      %1375 = vmatprep.subr.bf16.mxu0 0
      %1376 = vmatpush1.bf16.xpose.msra.mxu0 0
      %1377 = vmatprep.subr.bf16.mxu0 0
      %1378 = vmatpush1.bf16.xpose.msra.mxu0 0
      %1379 = vmatprep.subr.bf16.mxu0 0
      %1380 = vmatpush1.bf16.xpose.msra.mxu0 0
      %1381 = vmatprep.subr.bf16.mxu0 0
      %1382 = vmatpush1.bf16.xpose.msra.mxu0 0
      %1383 = vmatprep.subr.bf16.mxu0 0
      %1384 = vmatpush1.bf16.xpose.msra.mxu0 0
      %1385 = vmatprep.mubr.bf16.mxu0 0
      %1386 = vmatmul.mubr.bf16.gmra.mrb[0].mxu0 %v1352
      %v1387 = vpop.f32.mrb[0].mxu0
      %v1388 = vadd.f32 0.0, %v1387
      %v1389 = vpop.f32.mrb[0].mxu0
      %v1390 = vpop.f32.mrb[0].mxu0
      %v1391 = vpop.f32.mrb[0].mxu0
      %1392 = vdwg.mxu0
      %v1393 = vsel %vm1080, %v1388, -inf
      %1394 = vmax.xlane.f32.xlu0 %v1393
      %v1395 = vpop.xlane.xlu0 %1394
      %v1396 = vsub.f32 %v1388, %v1395
      %v1397 = vmul.f32 %v1396, 1.442695
      %v1398 = vpow.pop %v1397
      %v1399 = vsel %vm1080, %v1398, 0.0
      %1400 = vadd.xlane.f32.xlu0 %v1399
      %v1401 = vpop.xlane.xlu0 %1400
      %v1402 = vrcp.pop %v1401
      %v1403 = vmul.f32 %v1398, %v1402
      %v1404 = vpack.c.bf16 %v1403, %v1403
      %v1405 = vmul.f32 %v1032, %v571
      %v1406 = vpack.c.bf16 %v1405, %v1405
      %v1408 = vsel %vm1151, %v1404, 0
      %v1411 = vand.u32 %v1406, %v1158
      %1413 = vmatprep.subr.bf16.mxu0 0
      %1414 = vmatpush1.bf16.msra.mxu0 %v1411
      %1415 = vmatprep.subr.bf16.mxu0 0
      %1416 = vmatpush1.bf16.msra.mxu0 0
      %1417 = vmatprep.subr.bf16.mxu0 0
      %1418 = vmatpush1.bf16.msra.mxu0 0
      %1419 = vmatprep.subr.bf16.mxu0 0
      %1420 = vmatpush1.bf16.msra.mxu0 0
      %1421 = vmatprep.subr.bf16.mxu0 0
      %1422 = vmatpush1.bf16.msra.mxu0 0
      %1423 = vmatprep.subr.bf16.mxu0 0
      %1424 = vmatpush1.bf16.msra.mxu0 0
      %1425 = vmatprep.subr.bf16.mxu0 0
      %1426 = vmatpush1.bf16.msra.mxu0 0
      %1427 = vmatprep.subr.bf16.mxu0 0
      %1428 = vmatpush1.bf16.msra.mxu0 0
      %1429 = vmatprep.subr.bf16.mxu0 0
      %1430 = vmatpush1.bf16.msra.mxu0 0
      %1431 = vmatprep.subr.bf16.mxu0 0
      %1432 = vmatpush1.bf16.msra.mxu0 0
      %1433 = vmatprep.subr.bf16.mxu0 0
      %1434 = vmatpush1.bf16.msra.mxu0 0
      %1435 = vmatprep.subr.bf16.mxu0 0
      %1436 = vmatpush1.bf16.msra.mxu0 0
      %1437 = vmatprep.subr.bf16.mxu0 0
      %1438 = vmatpush1.bf16.msra.mxu0 0
      %1439 = vmatprep.subr.bf16.mxu0 0
      %1440 = vmatpush1.bf16.msra.mxu0 0
      %1441 = vmatprep.subr.bf16.mxu0 0
      %1442 = vmatpush1.bf16.msra.mxu0 0
      %1443 = vmatprep.subr.bf16.mxu0 0
      %1444 = vmatpush1.bf16.msra.mxu0 0
      %1445 = vmatprep.mubr.bf16.mxu0 0
      %1446 = vmatmul.mubr.bf16.gmra.mrb[0].mxu0 %v1408
      %v1447 = vpop.f32.mrb[0].mxu0
      %v1448 = vadd.f32 0.0, %v1447
      %v1449 = vpop.f32.mrb[0].mxu0
      %v1450 = vpop.f32.mrb[0].mxu0
      %v1451 = vpop.f32.mrb[0].mxu0
      %1452 = vdwg.mxu0
      %v1453 = vadd.f32 %v1350, %v1448
      %v1454 = vpack.c.bf16 %v1453, %v1453
      %v1455 = vld [vmem:[%s9] sm:$0xf]
      %v1456 = vld [vmem:[%s9 + $0x4] sm:$0xf]
      %v1457 = vld [vmem:[%s9 + $0x8] sm:$0xf]
      %v1458 = vld [vmem:[%s9 + $0xc] sm:$0xf]
      %v1459 = vld [vmem:[%s9 + $0x10] sm:$0xf]
      %v1460 = vld [vmem:[%s9 + $0x14] sm:$0xf]
      %v1461 = vld [vmem:[%s9 + $0x18] sm:$0xf]
      %v1462 = vld [vmem:[%s9 + $0x1c] sm:$0xf]
      %v1463 = vld [vmem:[%s9 + $0x20] sm:$0xf]
      %v1464 = vld [vmem:[%s9 + $0x24] sm:$0xf]
      %v1465 = vld [vmem:[%s9 + $0x28] sm:$0xf]
      %v1466 = vld [vmem:[%s9 + $0x2c] sm:$0xf]
      %v1467 = vld [vmem:[%s9 + $0x30] sm:$0xf]
      %v1468 = vld [vmem:[%s9 + $0x34] sm:$0xf]
      %v1469 = vld [vmem:[%s9 + $0x38] sm:$0xf]
      %v1470 = vld [vmem:[%s9 + $0x3c] sm:$0xf]
      %v1487 = vunpack.c.l.b16 %v1455
      %v1488 = vunpack.c.l.b16 %v1456
      %v1489 = vunpack.c.l.b16 %v1457
      %v1490 = vunpack.c.l.b16 %v1458
      %v1491 = vunpack.c.l.b16 %v1459
      %v1492 = vunpack.c.l.b16 %v1460
      %v1493 = vunpack.c.l.b16 %v1461
      %v1494 = vunpack.c.l.b16 %v1462
      %v1495 = vunpack.c.l.b16 %v1463
      %v1496 = vunpack.c.l.b16 %v1464
      %v1497 = vunpack.c.l.b16 %v1465
      %v1498 = vunpack.c.l.b16 %v1466
      %v1499 = vunpack.c.l.b16 %v1467
      %v1500 = vunpack.c.l.b16 %v1468
      %v1501 = vunpack.c.l.b16 %v1469
      %v1502 = vunpack.c.l.b16 %v1470
      %v1503 = vpack.c.b16 %v1488, %v1487
      %v1504 = vpack.c.b16 %v1490, %v1489
      %v1505 = vpack.c.b16 %v1492, %v1491
      %v1506 = vpack.c.b16 %v1494, %v1493
      %v1507 = vpack.c.b16 %v1496, %v1495
      %v1508 = vpack.c.b16 %v1498, %v1497
      %v1509 = vpack.c.b16 %v1500, %v1499
      %v1510 = vpack.c.b16 %v1502, %v1501
      %1519 = vmatprep.subr.bf16.mxu0 0
      %1520 = vmatpush1.bf16.msra.mxu0 %v1503
      %1521 = vmatprep.subr.bf16.mxu0 0
      %1522 = vmatpush1.bf16.msra.mxu0 %v1504
      %1523 = vmatprep.subr.bf16.mxu0 0
      %1524 = vmatpush1.bf16.msra.mxu0 %v1505
      %1525 = vmatprep.subr.bf16.mxu0 0
      %1526 = vmatpush1.bf16.msra.mxu0 %v1506
      %1527 = vmatprep.subr.bf16.mxu0 0
      %1528 = vmatpush1.bf16.msra.mxu0 %v1507
      %1529 = vmatprep.subr.bf16.mxu0 0
      %1530 = vmatpush1.bf16.msra.mxu0 %v1508
      %1531 = vmatprep.subr.bf16.mxu0 0
      %1532 = vmatpush1.bf16.msra.mxu0 %v1509
      %1533 = vmatprep.subr.bf16.mxu0 0
      %1534 = vmatpush1.bf16.msra.mxu0 %v1510
      %1535 = vmatprep.subr.bf16.mxu0 0
      %1536 = vmatpush1.bf16.msra.mxu0 0
      %1537 = vmatprep.subr.bf16.mxu0 0
      %1538 = vmatpush1.bf16.msra.mxu0 0
      %1539 = vmatprep.subr.bf16.mxu0 0
      %1540 = vmatpush1.bf16.msra.mxu0 0
      %1541 = vmatprep.subr.bf16.mxu0 0
      %1542 = vmatpush1.bf16.msra.mxu0 0
      %1543 = vmatprep.subr.bf16.mxu0 0
      %1544 = vmatpush1.bf16.msra.mxu0 0
      %1545 = vmatprep.subr.bf16.mxu0 0
      %1546 = vmatpush1.bf16.msra.mxu0 0
      %1547 = vmatprep.subr.bf16.mxu0 0
      %1548 = vmatpush1.bf16.msra.mxu0 0
      %1549 = vmatprep.subr.bf16.mxu0 0
      %1550 = vmatpush1.bf16.msra.mxu0 0
      %1551 = vmatprep.mubr.bf16.mxu0 0
      %1552 = vmatmul.mubr.bf16.gmra.mrb[0].mxu0 %v1454
      %v1553 = vpop.f32.mrb[0].mxu0
      %v1554 = vadd.f32 0.0, %v1553
      %v1555 = vpop.f32.mrb[0].mxu0
      %v1556 = vpop.f32.mrb[0].mxu0
      %v1557 = vpop.f32.mrb[0].mxu0
      %1558 = vdwg.mxu0
      %v1559 = vadd.f32 %v747, %v1554
      %v1560 = vld [vmem:[%s10] sm:$0x1]
      %v1562 = vlaneseq
      %v1563 = vshrl.u32 %v1562, 7
      %v1564 = vsub.s32 0, %v1563
      %v1565 = vrot.slane %v1560, %v1564
      %v1567 = vadd.f32 %v1559, %v1565
      %v1568 = vld [vmem:[%s11] sm:$0x1]
      %v1569 = vld [vmem:[%s12] sm:$0x1]
      %v1570 = vsel %vm719, %v1567, 0.0
      %1571 = vadd.xlane.f32.xlu0 %v1570
      %v1572 = vpop.xlane.xlu0 %1571
      %v1573 = vmul.f32 %v1572, 0.03125
      %v1574 = vsub.f32 %v1567, %v1573
      %v1575 = vmul.f32 %v1574, %v552
      %v1576 = vmul.f32 %v1575, %v1575
      %v1577 = vsel %vm719, %v1576, 0.0
      %1578 = vadd.xlane.f32.xlu0 %v1577
      %v1579 = vpop.xlane.xlu0 %1578
      %v1580 = vmul.f32 %v1579, 0.03125
      %v1581 = vadd.f32 %v1580, 1e-05
      %v1582 = vrsqrt.pop %v1581
      %v1583 = vmul.f32 %v1575, %v1582
      %v1585 = vlaneseq
      %v1586 = vshrl.u32 %v1585, 7
      %v1587 = vsub.s32 0, %v1586
      %v1588 = vrot.slane %v1568, %v1587
      %v1590 = vmul.f32 %v1583, %v1588
      %v1592 = vlaneseq
      %v1593 = vshrl.u32 %v1592, 7
      %v1594 = vsub.s32 0, %v1593
      %v1595 = vrot.slane %v1569, %v1594
      %v1597 = vadd.f32 %v1590, %v1595
      %v1598 = vpack.c.bf16 %v1597, %v1597
      %v1599 = vld [vmem:[%s13] sm:$0xf]
      %v1600 = vld [vmem:[%s13 + $0x4] sm:$0xf]
      %v1601 = vld [vmem:[%s13 + $0x8] sm:$0xf]
      %v1602 = vld [vmem:[%s13 + $0xc] sm:$0xf]
      %v1603 = vld [vmem:[%s13 + $0x10] sm:$0xf]
      %v1604 = vld [vmem:[%s13 + $0x14] sm:$0xf]
      %v1605 = vld [vmem:[%s13 + $0x18] sm:$0xf]
      %v1606 = vld [vmem:[%s13 + $0x1c] sm:$0xf]
      %v1607 = vld [vmem:[%s13 + $0x20] sm:$0xf]
      %v1608 = vld [vmem:[%s13 + $0x24] sm:$0xf]
      %v1609 = vld [vmem:[%s13 + $0x28] sm:$0xf]
      %v1610 = vld [vmem:[%s13 + $0x2c] sm:$0xf]
      %v1611 = vld [vmem:[%s13 + $0x30] sm:$0xf]
      %v1612 = vld [vmem:[%s13 + $0x34] sm:$0xf]
      %v1613 = vld [vmem:[%s13 + $0x38] sm:$0xf]
      %v1614 = vld [vmem:[%s13 + $0x3c] sm:$0xf]
      %v1615 = vld [vmem:[%s14] sm:$0x1]
      %v1617 = vlaneseq
      %v1618 = vshrl.u32 %v1617, 7
      %v1619 = vsub.s32 0, %v1618
      %v1620 = vrot.slane %v1615, %v1619
      %v1638 = vunpack.c.l.b16 %v1599
      %v1639 = vunpack.c.l.b16 %v1600
      %v1640 = vunpack.c.l.b16 %v1601
      %v1641 = vunpack.c.l.b16 %v1602
      %v1642 = vunpack.c.l.b16 %v1603
      %v1643 = vunpack.c.l.b16 %v1604
      %v1644 = vunpack.c.l.b16 %v1605
      %v1645 = vunpack.c.l.b16 %v1606
      %v1646 = vunpack.c.l.b16 %v1607
      %v1647 = vunpack.c.l.b16 %v1608
      %v1648 = vunpack.c.l.b16 %v1609
      %v1649 = vunpack.c.l.b16 %v1610
      %v1650 = vunpack.c.l.b16 %v1611
      %v1651 = vunpack.c.l.b16 %v1612
      %v1652 = vunpack.c.l.b16 %v1613
      %v1653 = vunpack.c.l.b16 %v1614
      %v1654 = vpack.c.b16 %v1639, %v1638
      %v1655 = vpack.c.b16 %v1641, %v1640
      %v1656 = vpack.c.b16 %v1643, %v1642
      %v1657 = vpack.c.b16 %v1645, %v1644
      %v1658 = vpack.c.b16 %v1647, %v1646
      %v1659 = vpack.c.b16 %v1649, %v1648
      %v1660 = vpack.c.b16 %v1651, %v1650
      %v1661 = vpack.c.b16 %v1653, %v1652
      %1670 = vmatprep.subr.bf16.mxu0 0
      %1671 = vmatpush1.bf16.msra.mxu0 %v1654
      %1672 = vmatprep.subr.bf16.mxu0 0
      %1673 = vmatpush1.bf16.msra.mxu0 %v1655
      %1674 = vmatprep.subr.bf16.mxu0 0
      %1675 = vmatpush1.bf16.msra.mxu0 %v1656
      %1676 = vmatprep.subr.bf16.mxu0 0
      %1677 = vmatpush1.bf16.msra.mxu0 %v1657
      %1678 = vmatprep.subr.bf16.mxu0 0
      %1679 = vmatpush1.bf16.msra.mxu0 %v1658
      %1680 = vmatprep.subr.bf16.mxu0 0
      %1681 = vmatpush1.bf16.msra.mxu0 %v1659
      %1682 = vmatprep.subr.bf16.mxu0 0
      %1683 = vmatpush1.bf16.msra.mxu0 %v1660
      %1684 = vmatprep.subr.bf16.mxu0 0
      %1685 = vmatpush1.bf16.msra.mxu0 %v1661
      %1686 = vmatprep.subr.bf16.mxu0 0
      %1687 = vmatpush1.bf16.msra.mxu0 0
      %1688 = vmatprep.subr.bf16.mxu0 0
      %1689 = vmatpush1.bf16.msra.mxu0 0
      %1690 = vmatprep.subr.bf16.mxu0 0
      %1691 = vmatpush1.bf16.msra.mxu0 0
      %1692 = vmatprep.subr.bf16.mxu0 0
      %1693 = vmatpush1.bf16.msra.mxu0 0
      %1694 = vmatprep.subr.bf16.mxu0 0
      %1695 = vmatpush1.bf16.msra.mxu0 0
      %1696 = vmatprep.subr.bf16.mxu0 0
      %1697 = vmatpush1.bf16.msra.mxu0 0
      %1698 = vmatprep.subr.bf16.mxu0 0
      %1699 = vmatpush1.bf16.msra.mxu0 0
      %1700 = vmatprep.subr.bf16.mxu0 0
      %1701 = vmatpush1.bf16.msra.mxu0 0
      %1702 = vmatprep.mubr.bf16.mxu0 0
      %1703 = vmatmul.mubr.bf16.gmra.mrb[0].mxu0 %v1598
      %v1704 = vpop.f32.mrb[0].mxu0
      %v1705 = vadd.f32 %v1620, %v1704
      %v1706 = vpop.f32.mrb[0].mxu0
      %v1707 = vpop.f32.mrb[0].mxu0
      %v1708 = vpop.f32.mrb[0].mxu0
      %1709 = vdwg.mxu0
      %v1710 = vmul.f32 %v1705, 1.702
      %v1711 = vxor.u32 %v1710, 2147483648
      %v1712 = vmul.f32 %v1711, 1.442695
      %v1713 = vpow.pop %v1712
      %v1714 = vadd.f32 %v1713, 1.0
      %v1715 = vrcp.pop %v1714
      %v1716 = vmul.f32 1.0, %v1715
      %v1717 = vmul.f32 %v1705, %v1716
      %v1718 = vpack.c.bf16 %v1717, %v1717
      %v1719 = vld [vmem:[%s15] sm:$0xf]
      %v1720 = vld [vmem:[%s15 + $0x4] sm:$0xf]
      %v1721 = vld [vmem:[%s15 + $0x8] sm:$0xf]
      %v1722 = vld [vmem:[%s15 + $0xc] sm:$0xf]
      %v1723 = vld [vmem:[%s15 + $0x10] sm:$0xf]
      %v1724 = vld [vmem:[%s15 + $0x14] sm:$0xf]
      %v1725 = vld [vmem:[%s15 + $0x18] sm:$0xf]
      %v1726 = vld [vmem:[%s15 + $0x1c] sm:$0xf]
      %v1727 = vld [vmem:[%s15 + $0x20] sm:$0xf]
      %v1728 = vld [vmem:[%s15 + $0x24] sm:$0xf]
      %v1729 = vld [vmem:[%s15 + $0x28] sm:$0xf]
      %v1730 = vld [vmem:[%s15 + $0x2c] sm:$0xf]
      %v1731 = vld [vmem:[%s15 + $0x30] sm:$0xf]
      %v1732 = vld [vmem:[%s15 + $0x34] sm:$0xf]
      %v1733 = vld [vmem:[%s15 + $0x38] sm:$0xf]
      %v1734 = vld [vmem:[%s15 + $0x3c] sm:$0xf]
      %v1751 = vunpack.c.l.b16 %v1719
      %v1752 = vunpack.c.l.b16 %v1720
      %v1753 = vunpack.c.l.b16 %v1721
      %v1754 = vunpack.c.l.b16 %v1722
      %v1755 = vunpack.c.l.b16 %v1723
      %v1756 = vunpack.c.l.b16 %v1724
      %v1757 = vunpack.c.l.b16 %v1725
      %v1758 = vunpack.c.l.b16 %v1726
      %v1759 = vunpack.c.l.b16 %v1727
      %v1760 = vunpack.c.l.b16 %v1728
      %v1761 = vunpack.c.l.b16 %v1729
      %v1762 = vunpack.c.l.b16 %v1730
      %v1763 = vunpack.c.l.b16 %v1731
      %v1764 = vunpack.c.l.b16 %v1732
      %v1765 = vunpack.c.l.b16 %v1733
      %v1766 = vunpack.c.l.b16 %v1734
      %v1767 = vpack.c.b16 %v1752, %v1751
      %v1768 = vpack.c.b16 %v1754, %v1753
      %v1769 = vpack.c.b16 %v1756, %v1755
      %v1770 = vpack.c.b16 %v1758, %v1757
      %v1771 = vpack.c.b16 %v1760, %v1759
      %v1772 = vpack.c.b16 %v1762, %v1761
      %v1773 = vpack.c.b16 %v1764, %v1763
      %v1774 = vpack.c.b16 %v1766, %v1765
      %1783 = vmatprep.subr.bf16.mxu0 0
      %1784 = vmatpush1.bf16.msra.mxu0 %v1767
      %1785 = vmatprep.subr.bf16.mxu0 0
      %1786 = vmatpush1.bf16.msra.mxu0 %v1768
      %1787 = vmatprep.subr.bf16.mxu0 0
      %1788 = vmatpush1.bf16.msra.mxu0 %v1769
      %1789 = vmatprep.subr.bf16.mxu0 0
      %1790 = vmatpush1.bf16.msra.mxu0 %v1770
      %1791 = vmatprep.subr.bf16.mxu0 0
      %1792 = vmatpush1.bf16.msra.mxu0 %v1771
      %1793 = vmatprep.subr.bf16.mxu0 0
      %1794 = vmatpush1.bf16.msra.mxu0 %v1772
      %1795 = vmatprep.subr.bf16.mxu0 0
      %1796 = vmatpush1.bf16.msra.mxu0 %v1773
      %1797 = vmatprep.subr.bf16.mxu0 0
      %1798 = vmatpush1.bf16.msra.mxu0 %v1774
      %1799 = vmatprep.subr.bf16.mxu0 0
      %1800 = vmatpush1.bf16.msra.mxu0 0
      %1801 = vmatprep.subr.bf16.mxu0 0
      %1802 = vmatpush1.bf16.msra.mxu0 0
      %1803 = vmatprep.subr.bf16.mxu0 0
      %1804 = vmatpush1.bf16.msra.mxu0 0
      %1805 = vmatprep.subr.bf16.mxu0 0
      %1806 = vmatpush1.bf16.msra.mxu0 0
      %1807 = vmatprep.subr.bf16.mxu0 0
      %1808 = vmatpush1.bf16.msra.mxu0 0
      %1809 = vmatprep.subr.bf16.mxu0 0
      %1810 = vmatpush1.bf16.msra.mxu0 0
      %1811 = vmatprep.subr.bf16.mxu0 0
      %1812 = vmatpush1.bf16.msra.mxu0 0
      %1813 = vmatprep.subr.bf16.mxu0 0
      %1814 = vmatpush1.bf16.msra.mxu0 0
      %1815 = vmatprep.mubr.bf16.mxu0 0
      %1816 = vmatmul.mubr.bf16.gmra.mrb[0].mxu0 %v1718
      %v1817 = vpop.f32.mrb[0].mxu0
      %v1818 = vadd.f32 0.0, %v1817
      %v1819 = vpop.f32.mrb[0].mxu0
      %v1820 = vpop.f32.mrb[0].mxu0
      %v1821 = vpop.f32.mrb[0].mxu0
      %1822 = vdwg.mxu0
      %v1823 = vadd.f32 %v1567, %v1818
      %v1824 = vld [vmem:[%s16] sm:$0x1]
      %v1826 = vlaneseq
      %v1827 = vshrl.u32 %v1826, 7
      %v1828 = vsub.s32 0, %v1827
      %v1829 = vrot.slane %v1824, %v1828
      %v1831 = vadd.f32 %v1823, %v1829
      %s1832 = scalar_lea.vmem %s5, 1
      %v1833 = vld [vmem:[%s1832] sm:$0x1]
      %s1834 = scalar_lea.vmem %s6, 1
      %v1835 = vld [vmem:[%s1834] sm:$0x1]
      %v1836 = vsel %vm719, %v1831, 0.0
      %1837 = vadd.xlane.f32.xlu0 %v1836
      %v1838 = vpop.xlane.xlu0 %1837
      %v1839 = vmul.f32 %v1838, 0.03125
      %v1840 = vsub.f32 %v1831, %v1839
      %v1841 = vmul.f32 %v1840, %v552
      %v1842 = vmul.f32 %v1841, %v1841
      %v1843 = vsel %vm719, %v1842, 0.0
      %1844 = vadd.xlane.f32.xlu0 %v1843
      %v1845 = vpop.xlane.xlu0 %1844
      %v1846 = vmul.f32 %v1845, 0.03125
      %v1847 = vadd.f32 %v1846, 1e-05
      %v1848 = vrsqrt.pop %v1847
      %v1849 = vmul.f32 %v1841, %v1848
      %v1851 = vlaneseq
      %v1852 = vshrl.u32 %v1851, 7
      %v1853 = vsub.s32 0, %v1852
      %v1854 = vrot.slane %v1833, %v1853
      %v1856 = vmul.f32 %v1849, %v1854
      %v1858 = vlaneseq
      %v1859 = vshrl.u32 %v1858, 7
      %v1860 = vsub.s32 0, %v1859
      %v1861 = vrot.slane %v1835, %v1860
      %v1863 = vadd.f32 %v1856, %v1861
      %v1864 = vpack.c.bf16 %v1863, %v1863
      %s1865 = scalar_lea.vmem %s7, 192
      %v1866 = vld [vmem:[%s1865] sm:$0xff]
      %v1867 = vld [vmem:[%s1865 + $0x8] sm:$0xf]
      %v1868 = vld [vmem:[%s1865 + $0xc] sm:$0xff]
      %v1869 = vld [vmem:[%s1865 + $0x14] sm:$0xf]
      %v1870 = vld [vmem:[%s1865 + $0x18] sm:$0xff]
      %v1871 = vld [vmem:[%s1865 + $0x20] sm:$0xf]
      %v1872 = vld [vmem:[%s1865 + $0x24] sm:$0xff]
      %v1873 = vld [vmem:[%s1865 + $0x2c] sm:$0xf]
      %v1874 = vld [vmem:[%s1865 + $0x30] sm:$0xff]
      %v1875 = vld [vmem:[%s1865 + $0x38] sm:$0xf]
      %v1876 = vld [vmem:[%s1865 + $0x3c] sm:$0xff]
      %v1877 = vld [vmem:[%s1865 + $0x44] sm:$0xf]
      %v1878 = vld [vmem:[%s1865 + $0x48] sm:$0xff]
      %v1879 = vld [vmem:[%s1865 + $0x50] sm:$0xf]
      %v1880 = vld [vmem:[%s1865 + $0x54] sm:$0xff]
      %v1881 = vld [vmem:[%s1865 + $0x5c] sm:$0xf]
      %v1882 = vld [vmem:[%s1865 + $0x60] sm:$0xff]
      %v1883 = vld [vmem:[%s1865 + $0x68] sm:$0xf]
      %v1884 = vld [vmem:[%s1865 + $0x6c] sm:$0xff]
      %v1885 = vld [vmem:[%s1865 + $0x74] sm:$0xf]
      %v1886 = vld [vmem:[%s1865 + $0x78] sm:$0xff]
      %v1887 = vld [vmem:[%s1865 + $0x80] sm:$0xf]
      %v1888 = vld [vmem:[%s1865 + $0x84] sm:$0xff]
      %v1889 = vld [vmem:[%s1865 + $0x8c] sm:$0xf]
      %v1890 = vld [vmem:[%s1865 + $0x90] sm:$0xff]
      %v1891 = vld [vmem:[%s1865 + $0x98] sm:$0xf]
      %v1892 = vld [vmem:[%s1865 + $0x9c] sm:$0xff]
      %v1893 = vld [vmem:[%s1865 + $0xa4] sm:$0xf]
      %v1894 = vld [vmem:[%s1865 + $0xa8] sm:$0xff]
      %v1895 = vld [vmem:[%s1865 + $0xb0] sm:$0xf]
      %v1896 = vld [vmem:[%s1865 + $0xb4] sm:$0xff]
      %v1897 = vld [vmem:[%s1865 + $0xbc] sm:$0xf]
      %s1898 = scalar_lea.vmem %s8, 3
      %v1899 = vld [vmem:[%s1898] sm:$0x7]
      %v1901 = vlaneseq
      %v1902 = vshrl.u32 %v1901, 7
      %v1903 = vsub.s32 0, %v1902
      %v1904 = vrot.slane %v1899, %v1903
      %v1905 = vlaneseq
      %v1906 = vshrl.u32 %v1905, 7
      %v1907 = vsub.s32 1, %v1906
      %v1908 = vrot.slane %v1899, %v1907
      %v1909 = vlaneseq
      %v1910 = vshrl.u32 %v1909, 7
      %v1911 = vsub.s32 2, %v1910
      %v1912 = vrot.slane %v1899, %v1911
      %v1948 = vunpack.c.l.b16 %v1866
      %v1949 = vunpack.c.h.b16 %v1866
      %v1950 = vunpack.c.l.b16 %v1867
      %v1951 = vunpack.c.l.b16 %v1868
      %v1952 = vunpack.c.h.b16 %v1868
      %v1953 = vunpack.c.l.b16 %v1869
      %v1954 = vunpack.c.l.b16 %v1870
      %v1955 = vunpack.c.h.b16 %v1870
      %v1956 = vunpack.c.l.b16 %v1871
      %v1957 = vunpack.c.l.b16 %v1872
      %v1958 = vunpack.c.h.b16 %v1872
      %v1959 = vunpack.c.l.b16 %v1873
      %v1960 = vunpack.c.l.b16 %v1874
      %v1961 = vunpack.c.h.b16 %v1874
      %v1962 = vunpack.c.l.b16 %v1875
      %v1963 = vunpack.c.l.b16 %v1876
      %v1964 = vunpack.c.h.b16 %v1876
      %v1965 = vunpack.c.l.b16 %v1877
      %v1966 = vunpack.c.l.b16 %v1878
      %v1967 = vunpack.c.h.b16 %v1878
      %v1968 = vunpack.c.l.b16 %v1879
      %v1969 = vunpack.c.l.b16 %v1880
      %v1970 = vunpack.c.h.b16 %v1880
      %v1971 = vunpack.c.l.b16 %v1881
      %v1972 = vunpack.c.l.b16 %v1882
      %v1973 = vunpack.c.h.b16 %v1882
      %v1974 = vunpack.c.l.b16 %v1883
      %v1975 = vunpack.c.l.b16 %v1884
      %v1976 = vunpack.c.h.b16 %v1884
      %v1977 = vunpack.c.l.b16 %v1885
      %v1978 = vunpack.c.l.b16 %v1886
      %v1979 = vunpack.c.h.b16 %v1886
      %v1980 = vunpack.c.l.b16 %v1887
      %v1981 = vunpack.c.l.b16 %v1888
      %v1982 = vunpack.c.h.b16 %v1888
      %v1983 = vunpack.c.l.b16 %v1889
      %v1984 = vunpack.c.l.b16 %v1890
      %v1985 = vunpack.c.h.b16 %v1890
      %v1986 = vunpack.c.l.b16 %v1891
      %v1987 = vunpack.c.l.b16 %v1892
      %v1988 = vunpack.c.h.b16 %v1892
      %v1989 = vunpack.c.l.b16 %v1893
      %v1990 = vunpack.c.l.b16 %v1894
      %v1991 = vunpack.c.h.b16 %v1894
      %v1992 = vunpack.c.l.b16 %v1895
      %v1993 = vunpack.c.l.b16 %v1896
      %v1994 = vunpack.c.h.b16 %v1896
      %v1995 = vunpack.c.l.b16 %v1897
      %v1996 = vpack.c.b16 %v1951, %v1948
      %v1997 = vpack.c.b16 %v1952, %v1949
      %v1998 = vpack.c.b16 %v1953, %v1950
      %v1999 = vpack.c.b16 %v1957, %v1954
      %v2000 = vpack.c.b16 %v1958, %v1955
      %v2001 = vpack.c.b16 %v1959, %v1956
      %v2002 = vpack.c.b16 %v1963, %v1960
      %v2003 = vpack.c.b16 %v1964, %v1961
      %v2004 = vpack.c.b16 %v1965, %v1962
      %v2005 = vpack.c.b16 %v1969, %v1966
      %v2006 = vpack.c.b16 %v1970, %v1967
      %v2007 = vpack.c.b16 %v1971, %v1968
      %v2008 = vpack.c.b16 %v1975, %v1972
      %v2009 = vpack.c.b16 %v1976, %v1973
      %v2010 = vpack.c.b16 %v1977, %v1974
      %v2011 = vpack.c.b16 %v1981, %v1978
      %v2012 = vpack.c.b16 %v1982, %v1979
      %v2013 = vpack.c.b16 %v1983, %v1980
      %v2014 = vpack.c.b16 %v1987, %v1984
      %v2015 = vpack.c.b16 %v1988, %v1985
      %v2016 = vpack.c.b16 %v1989, %v1986
      %v2017 = vpack.c.b16 %v1993, %v1990
      %v2018 = vpack.c.b16 %v1994, %v1991
      %v2019 = vpack.c.b16 %v1995, %v1992
      %2044 = vmatprep.subr.bf16.mxu0 %v1997
      %2045 = vmatpush1.bf16.msra.mxu0 %v1996
      %2046 = vmatprep.subr.bf16.mxu0 %v2000
      %2047 = vmatpush1.bf16.msra.mxu0 %v1999
      %2048 = vmatprep.subr.bf16.mxu0 %v2003
      %2049 = vmatpush1.bf16.msra.mxu0 %v2002
      %2050 = vmatprep.subr.bf16.mxu0 %v2006
      %2051 = vmatpush1.bf16.msra.mxu0 %v2005
      %2052 = vmatprep.subr.bf16.mxu0 %v2009
      %2053 = vmatpush1.bf16.msra.mxu0 %v2008
      %2054 = vmatprep.subr.bf16.mxu0 %v2012
      %2055 = vmatpush1.bf16.msra.mxu0 %v2011
      %2056 = vmatprep.subr.bf16.mxu0 %v2015
      %2057 = vmatpush1.bf16.msra.mxu0 %v2014
      %2058 = vmatprep.subr.bf16.mxu0 %v2018
      %2059 = vmatpush1.bf16.msra.mxu0 %v2017
      %2060 = vmatprep.subr.bf16.mxu0 0
      %2061 = vmatpush1.bf16.msra.mxu0 0
      %2062 = vmatprep.subr.bf16.mxu0 0
      %2063 = vmatpush1.bf16.msra.mxu0 0
      %2064 = vmatprep.subr.bf16.mxu0 0
      %2065 = vmatpush1.bf16.msra.mxu0 0
      %2066 = vmatprep.subr.bf16.mxu0 0
      %2067 = vmatpush1.bf16.msra.mxu0 0
      %2068 = vmatprep.subr.bf16.mxu0 0
      %2069 = vmatpush1.bf16.msra.mxu0 0
      %2070 = vmatprep.subr.bf16.mxu0 0
      %2071 = vmatpush1.bf16.msra.mxu0 0
      %2072 = vmatprep.subr.bf16.mxu0 0
      %2073 = vmatpush1.bf16.msra.mxu0 0
      %2074 = vmatprep.subr.bf16.mxu0 0
      %2075 = vmatpush1.bf16.msra.mxu0 0
      %2076 = vmatprep.mubr.bf16.mxu0 0
      %2077 = vmatmul.mubr.bf16.gmra.mrb[0].mxu0 %v1864
      %v2078 = vpop.f32.mrb[0].mxu0
      %v2079 = vadd.f32 %v1904, %v2078
      %v2080 = vpop.f32.mrb[0].mxu0
      %v2081 = vadd.f32 %v1908, %v2080
      %v2082 = vpop.f32.mrb[0].mxu0
      %v2083 = vpop.f32.mrb[0].mxu0
      %2084 = vdwg.mxu0
      %2085 = vmatprep.subr.bf16.mxu0 0
      %2086 = vmatpush1.bf16.msra.mxu0 %v1998
      %2087 = vmatprep.subr.bf16.mxu0 0
      %2088 = vmatpush1.bf16.msra.mxu0 %v2001
      %2089 = vmatprep.subr.bf16.mxu0 0
      %2090 = vmatpush1.bf16.msra.mxu0 %v2004
      %2091 = vmatprep.subr.bf16.mxu0 0
      %2092 = vmatpush1.bf16.msra.mxu0 %v2007
      %2093 = vmatprep.subr.bf16.mxu0 0
      %2094 = vmatpush1.bf16.msra.mxu0 %v2010
      %2095 = vmatprep.subr.bf16.mxu0 0
      %2096 = vmatpush1.bf16.msra.mxu0 %v2013
      %2097 = vmatprep.subr.bf16.mxu0 0
      %2098 = vmatpush1.bf16.msra.mxu0 %v2016
      %2099 = vmatprep.subr.bf16.mxu0 0
      %2100 = vmatpush1.bf16.msra.mxu0 %v2019
      %2101 = vmatprep.subr.bf16.mxu0 0
      %2102 = vmatpush1.bf16.msra.mxu0 0
      %2103 = vmatprep.subr.bf16.mxu0 0
      %2104 = vmatpush1.bf16.msra.mxu0 0
      %2105 = vmatprep.subr.bf16.mxu0 0
      %2106 = vmatpush1.bf16.msra.mxu0 0
      %2107 = vmatprep.subr.bf16.mxu0 0
      %2108 = vmatpush1.bf16.msra.mxu0 0
      %2109 = vmatprep.subr.bf16.mxu0 0
      %2110 = vmatpush1.bf16.msra.mxu0 0
      %2111 = vmatprep.subr.bf16.mxu0 0
      %2112 = vmatpush1.bf16.msra.mxu0 0
      %2113 = vmatprep.subr.bf16.mxu0 0
      %2114 = vmatpush1.bf16.msra.mxu0 0
      %2115 = vmatprep.subr.bf16.mxu0 0
      %2116 = vmatpush1.bf16.msra.mxu0 0
      %2117 = vmatprep.mubr.bf16.mxu0 0
      %2118 = vmatmul.mubr.bf16.gmra.mrb[0].mxu0 %v1864
      %v2119 = vpop.f32.mrb[0].mxu0
      %v2120 = vadd.f32 %v1912, %v2119
      %v2121 = vpop.f32.mrb[0].mxu0
      %v2122 = vpop.f32.mrb[0].mxu0
      %v2123 = vpop.f32.mrb[0].mxu0
      %2124 = vdwg.mxu0
      %v2125 = vmul.f32 %v2079, %v557
      %v2126 = vpack.c.bf16 %v2125, %v2125
      %v2127 = vpack.c.bf16 %v2081, %v2081
      %2128 = vmatprep.subr.bf16.mxu0 0
      %2129 = vmatpush1.bf16.xpose.msra.mxu0 %v2127
      %2130 = vmatprep.subr.bf16.mxu0 0
      %2131 = vmatpush1.bf16.xpose.msra.mxu0 0
      %2132 = vmatprep.subr.bf16.mxu0 0
      %2133 = vmatpush1.bf16.xpose.msra.mxu0 0
      %2134 = vmatprep.subr.bf16.mxu0 0
      %2135 = vmatpush1.bf16.xpose.msra.mxu0 0
      %2136 = vmatprep.subr.bf16.mxu0 0
      %2137 = vmatpush1.bf16.xpose.msra.mxu0 0
      %2138 = vmatprep.subr.bf16.mxu0 0
      %2139 = vmatpush1.bf16.xpose.msra.mxu0 0
      %2140 = vmatprep.subr.bf16.mxu0 0
      %2141 = vmatpush1.bf16.xpose.msra.mxu0 0
      %2142 = vmatprep.subr.bf16.mxu0 0
      %2143 = vmatpush1.bf16.xpose.msra.mxu0 0
      %2144 = vmatprep.subr.bf16.mxu0 0
      %2145 = vmatpush1.bf16.xpose.msra.mxu0 0
      %2146 = vmatprep.subr.bf16.mxu0 0
      %2147 = vmatpush1.bf16.xpose.msra.mxu0 0
      %2148 = vmatprep.subr.bf16.mxu0 0
      %2149 = vmatpush1.bf16.xpose.msra.mxu0 0
      %2150 = vmatprep.subr.bf16.mxu0 0
      %2151 = vmatpush1.bf16.xpose.msra.mxu0 0
      %2152 = vmatprep.subr.bf16.mxu0 0
      %2153 = vmatpush1.bf16.xpose.msra.mxu0 0
      %2154 = vmatprep.subr.bf16.mxu0 0
      %2155 = vmatpush1.bf16.xpose.msra.mxu0 0
      %2156 = vmatprep.subr.bf16.mxu0 0
      %2157 = vmatpush1.bf16.xpose.msra.mxu0 0
      %2158 = vmatprep.subr.bf16.mxu0 0
      %2159 = vmatpush1.bf16.xpose.msra.mxu0 0
      %2160 = vmatprep.mubr.bf16.mxu0 0
      %2161 = vmatmul.mubr.bf16.gmra.mrb[0].mxu0 %v2126
      %v2162 = vpop.f32.mrb[0].mxu0
      %v2163 = vadd.f32 0.0, %v2162
      %v2164 = vpop.f32.mrb[0].mxu0
      %v2165 = vpop.f32.mrb[0].mxu0
      %v2166 = vpop.f32.mrb[0].mxu0
      %2167 = vdwg.mxu0
      %v2168 = vsel %vm1080, %v2163, -inf
      %2169 = vmax.xlane.f32.xlu0 %v2168
      %v2170 = vpop.xlane.xlu0 %2169
      %v2171 = vsub.f32 %v2163, %v2170
      %v2172 = vmul.f32 %v2171, 1.442695
      %v2173 = vpow.pop %v2172
      %v2174 = vsel %vm1080, %v2173, 0.0
      %2175 = vadd.xlane.f32.xlu0 %v2174
      %v2176 = vpop.xlane.xlu0 %2175
      %v2177 = vrcp.pop %v2176
      %v2178 = vmul.f32 %v2173, %v2177
      %v2179 = vpack.c.bf16 %v2178, %v2178
      %v2180 = vmul.f32 %v2120, %v557
      %v2181 = vpack.c.bf16 %v2180, %v2180
      %v2182 = vmul.f32 %v2079, %v562
      %v2183 = vpack.c.bf16 %v2182, %v2182
      %2184 = vmatprep.subr.bf16.mxu0 0
      %2185 = vmatpush1.bf16.xpose.msra.mxu0 %v2127
      %2186 = vmatprep.subr.bf16.mxu0 0
      %2187 = vmatpush1.bf16.xpose.msra.mxu0 0
      %2188 = vmatprep.subr.bf16.mxu0 0
      %2189 = vmatpush1.bf16.xpose.msra.mxu0 0
      %2190 = vmatprep.subr.bf16.mxu0 0
      %2191 = vmatpush1.bf16.xpose.msra.mxu0 0
      %2192 = vmatprep.subr.bf16.mxu0 0
      %2193 = vmatpush1.bf16.xpose.msra.mxu0 0
      %2194 = vmatprep.subr.bf16.mxu0 0
      %2195 = vmatpush1.bf16.xpose.msra.mxu0 0
      %2196 = vmatprep.subr.bf16.mxu0 0
      %2197 = vmatpush1.bf16.xpose.msra.mxu0 0
      %2198 = vmatprep.subr.bf16.mxu0 0
      %2199 = vmatpush1.bf16.xpose.msra.mxu0 0
      %2200 = vmatprep.subr.bf16.mxu0 0
      %2201 = vmatpush1.bf16.xpose.msra.mxu0 0
      %2202 = vmatprep.subr.bf16.mxu0 0
      %2203 = vmatpush1.bf16.xpose.msra.mxu0 0
      %2204 = vmatprep.subr.bf16.mxu0 0
      %2205 = vmatpush1.bf16.xpose.msra.mxu0 0
      %2206 = vmatprep.subr.bf16.mxu0 0
      %2207 = vmatpush1.bf16.xpose.msra.mxu0 0
      %2208 = vmatprep.subr.bf16.mxu0 0
      %2209 = vmatpush1.bf16.xpose.msra.mxu0 0
      %2210 = vmatprep.subr.bf16.mxu0 0
      %2211 = vmatpush1.bf16.xpose.msra.mxu0 0
      %2212 = vmatprep.subr.bf16.mxu0 0
      %2213 = vmatpush1.bf16.xpose.msra.mxu0 0
      %2214 = vmatprep.subr.bf16.mxu0 0
      %2215 = vmatpush1.bf16.xpose.msra.mxu0 0
      %2216 = vmatprep.mubr.bf16.mxu0 0
      %2217 = vmatmul.mubr.bf16.gmra.mrb[0].mxu0 %v2183
      %v2218 = vpop.f32.mrb[0].mxu0
      %v2219 = vadd.f32 0.0, %v2218
      %v2220 = vpop.f32.mrb[0].mxu0
      %v2221 = vpop.f32.mrb[0].mxu0
      %v2222 = vpop.f32.mrb[0].mxu0
      %2223 = vdwg.mxu0
      %v2224 = vsel %vm1080, %v2219, -inf
      %2225 = vmax.xlane.f32.xlu0 %v2224
      %v2226 = vpop.xlane.xlu0 %2225
      %v2227 = vsub.f32 %v2219, %v2226
      %v2228 = vmul.f32 %v2227, 1.442695
      %v2229 = vpow.pop %v2228
      %v2230 = vsel %vm1080, %v2229, 0.0
      %2231 = vadd.xlane.f32.xlu0 %v2230
      %v2232 = vpop.xlane.xlu0 %2231
      %v2233 = vrcp.pop %v2232
      %v2234 = vmul.f32 %v2229, %v2233
      %v2235 = vpack.c.bf16 %v2234, %v2234
      %v2236 = vmul.f32 %v2120, %v562
      %v2237 = vpack.c.bf16 %v2236, %v2236
      %v2239 = vsel %vm1151, %v2235, 0
      %v2242 = vand.u32 %v2237, %v1158
      %2244 = vmatprep.subr.bf16.mxu0 0
      %2245 = vmatpush1.bf16.msra.mxu0 %v2242
      %2246 = vmatprep.subr.bf16.mxu0 0
      %2247 = vmatpush1.bf16.msra.mxu0 0
      %2248 = vmatprep.subr.bf16.mxu0 0
      %2249 = vmatpush1.bf16.msra.mxu0 0
      %2250 = vmatprep.subr.bf16.mxu0 0
      %2251 = vmatpush1.bf16.msra.mxu0 0
      %2252 = vmatprep.subr.bf16.mxu0 0
      %2253 = vmatpush1.bf16.msra.mxu0 0
      %2254 = vmatprep.subr.bf16.mxu0 0
      %2255 = vmatpush1.bf16.msra.mxu0 0
      %2256 = vmatprep.subr.bf16.mxu0 0
      %2257 = vmatpush1.bf16.msra.mxu0 0
      %2258 = vmatprep.subr.bf16.mxu0 0
      %2259 = vmatpush1.bf16.msra.mxu0 0
      %2260 = vmatprep.subr.bf16.mxu0 0
      %2261 = vmatpush1.bf16.msra.mxu0 0
      %2262 = vmatprep.subr.bf16.mxu0 0
      %2263 = vmatpush1.bf16.msra.mxu0 0
      %2264 = vmatprep.subr.bf16.mxu0 0
      %2265 = vmatpush1.bf16.msra.mxu0 0
      %2266 = vmatprep.subr.bf16.mxu0 0
      %2267 = vmatpush1.bf16.msra.mxu0 0
      %2268 = vmatprep.subr.bf16.mxu0 0
      %2269 = vmatpush1.bf16.msra.mxu0 0
      %2270 = vmatprep.subr.bf16.mxu0 0
      %2271 = vmatpush1.bf16.msra.mxu0 0
      %2272 = vmatprep.subr.bf16.mxu0 0
      %2273 = vmatpush1.bf16.msra.mxu0 0
      %2274 = vmatprep.subr.bf16.mxu0 0
      %2275 = vmatpush1.bf16.msra.mxu0 0
      %2276 = vmatprep.mubr.bf16.mxu0 0
      %2277 = vmatmul.mubr.bf16.gmra.mrb[0].mxu0 %v2239
      %v2278 = vpop.f32.mrb[0].mxu0
      %v2279 = vadd.f32 0.0, %v2278
      %v2280 = vpop.f32.mrb[0].mxu0
      %v2281 = vpop.f32.mrb[0].mxu0
      %v2282 = vpop.f32.mrb[0].mxu0
      %2283 = vdwg.mxu0
      %v2285 = vsel %vm1151, %v2179, 0
      %v2288 = vand.u32 %v2181, %v1158
      %2290 = vmatprep.subr.bf16.mxu0 0
      %2291 = vmatpush1.bf16.msra.mxu0 %v2288
      %2292 = vmatprep.subr.bf16.mxu0 0
      %2293 = vmatpush1.bf16.msra.mxu0 0
      %2294 = vmatprep.subr.bf16.mxu0 0
      %2295 = vmatpush1.bf16.msra.mxu0 0
      %2296 = vmatprep.subr.bf16.mxu0 0
      %2297 = vmatpush1.bf16.msra.mxu0 0
      %2298 = vmatprep.subr.bf16.mxu0 0
      %2299 = vmatpush1.bf16.msra.mxu0 0
      %2300 = vmatprep.subr.bf16.mxu0 0
      %2301 = vmatpush1.bf16.msra.mxu0 0
      %2302 = vmatprep.subr.bf16.mxu0 0
      %2303 = vmatpush1.bf16.msra.mxu0 0
      %2304 = vmatprep.subr.bf16.mxu0 0
      %2305 = vmatpush1.bf16.msra.mxu0 0
      %2306 = vmatprep.subr.bf16.mxu0 0
      %2307 = vmatpush1.bf16.msra.mxu0 0
      %2308 = vmatprep.subr.bf16.mxu0 0
      %2309 = vmatpush1.bf16.msra.mxu0 0
      %2310 = vmatprep.subr.bf16.mxu0 0
      %2311 = vmatpush1.bf16.msra.mxu0 0
      %2312 = vmatprep.subr.bf16.mxu0 0
      %2313 = vmatpush1.bf16.msra.mxu0 0
      %2314 = vmatprep.subr.bf16.mxu0 0
      %2315 = vmatpush1.bf16.msra.mxu0 0
      %2316 = vmatprep.subr.bf16.mxu0 0
      %2317 = vmatpush1.bf16.msra.mxu0 0
      %2318 = vmatprep.subr.bf16.mxu0 0
      %2319 = vmatpush1.bf16.msra.mxu0 0
      %2320 = vmatprep.subr.bf16.mxu0 0
      %2321 = vmatpush1.bf16.msra.mxu0 0
      %2322 = vmatprep.mubr.bf16.mxu0 0
      %2323 = vmatmul.mubr.bf16.gmra.mrb[0].mxu0 %v2285
      %v2324 = vpop.f32.mrb[0].mxu0
      %v2325 = vadd.f32 %v2279, %v2324
      %v2326 = vpop.f32.mrb[0].mxu0
      %v2327 = vpop.f32.mrb[0].mxu0
      %v2328 = vpop.f32.mrb[0].mxu0
      %2329 = vdwg.mxu0
      %v2330 = vmul.f32 %v2079, %v567
      %v2331 = vpack.c.bf16 %v2330, %v2330
      %2332 = vmatprep.subr.bf16.mxu0 0
      %2333 = vmatpush1.bf16.xpose.msra.mxu0 %v2127
      %2334 = vmatprep.subr.bf16.mxu0 0
      %2335 = vmatpush1.bf16.xpose.msra.mxu0 0
      %2336 = vmatprep.subr.bf16.mxu0 0
      %2337 = vmatpush1.bf16.xpose.msra.mxu0 0
      %2338 = vmatprep.subr.bf16.mxu0 0
      %2339 = vmatpush1.bf16.xpose.msra.mxu0 0
      %2340 = vmatprep.subr.bf16.mxu0 0
      %2341 = vmatpush1.bf16.xpose.msra.mxu0 0
      %2342 = vmatprep.subr.bf16.mxu0 0
      %2343 = vmatpush1.bf16.xpose.msra.mxu0 0
      %2344 = vmatprep.subr.bf16.mxu0 0
      %2345 = vmatpush1.bf16.xpose.msra.mxu0 0
      %2346 = vmatprep.subr.bf16.mxu0 0
      %2347 = vmatpush1.bf16.xpose.msra.mxu0 0
      %2348 = vmatprep.subr.bf16.mxu0 0
      %2349 = vmatpush1.bf16.xpose.msra.mxu0 0
      %2350 = vmatprep.subr.bf16.mxu0 0
      %2351 = vmatpush1.bf16.xpose.msra.mxu0 0
      %2352 = vmatprep.subr.bf16.mxu0 0
      %2353 = vmatpush1.bf16.xpose.msra.mxu0 0
      %2354 = vmatprep.subr.bf16.mxu0 0
      %2355 = vmatpush1.bf16.xpose.msra.mxu0 0
      %2356 = vmatprep.subr.bf16.mxu0 0
      %2357 = vmatpush1.bf16.xpose.msra.mxu0 0
      %2358 = vmatprep.subr.bf16.mxu0 0
      %2359 = vmatpush1.bf16.xpose.msra.mxu0 0
      %2360 = vmatprep.subr.bf16.mxu0 0
      %2361 = vmatpush1.bf16.xpose.msra.mxu0 0
      %2362 = vmatprep.subr.bf16.mxu0 0
      %2363 = vmatpush1.bf16.xpose.msra.mxu0 0
      %2364 = vmatprep.mubr.bf16.mxu0 0
      %2365 = vmatmul.mubr.bf16.gmra.mrb[0].mxu0 %v2331
      %v2366 = vpop.f32.mrb[0].mxu0
      %v2367 = vadd.f32 0.0, %v2366
      %v2368 = vpop.f32.mrb[0].mxu0
      %v2369 = vpop.f32.mrb[0].mxu0
      %v2370 = vpop.f32.mrb[0].mxu0
      %2371 = vdwg.mxu0
      %v2372 = vsel %vm1080, %v2367, -inf
      %2373 = vmax.xlane.f32.xlu0 %v2372
      %v2374 = vpop.xlane.xlu0 %2373
      %v2375 = vsub.f32 %v2367, %v2374
      %v2376 = vmul.f32 %v2375, 1.442695
      %v2377 = vpow.pop %v2376
      %v2378 = vsel %vm1080, %v2377, 0.0
      %2379 = vadd.xlane.f32.xlu0 %v2378
      %v2380 = vpop.xlane.xlu0 %2379
      %v2381 = vrcp.pop %v2380
      %v2382 = vmul.f32 %v2377, %v2381
      %v2383 = vpack.c.bf16 %v2382, %v2382
      %v2384 = vmul.f32 %v2120, %v567
      %v2385 = vpack.c.bf16 %v2384, %v2384
      %v2387 = vsel %vm1151, %v2383, 0
      %v2390 = vand.u32 %v2385, %v1158
      %2392 = vmatprep.subr.bf16.mxu0 0
      %2393 = vmatpush1.bf16.msra.mxu0 %v2390
      %2394 = vmatprep.subr.bf16.mxu0 0
      %2395 = vmatpush1.bf16.msra.mxu0 0
      %2396 = vmatprep.subr.bf16.mxu0 0
      %2397 = vmatpush1.bf16.msra.mxu0 0
      %2398 = vmatprep.subr.bf16.mxu0 0
      %2399 = vmatpush1.bf16.msra.mxu0 0
      %2400 = vmatprep.subr.bf16.mxu0 0
      %2401 = vmatpush1.bf16.msra.mxu0 0
      %2402 = vmatprep.subr.bf16.mxu0 0
      %2403 = vmatpush1.bf16.msra.mxu0 0
      %2404 = vmatprep.subr.bf16.mxu0 0
      %2405 = vmatpush1.bf16.msra.mxu0 0
      %2406 = vmatprep.subr.bf16.mxu0 0
      %2407 = vmatpush1.bf16.msra.mxu0 0
      %2408 = vmatprep.subr.bf16.mxu0 0
      %2409 = vmatpush1.bf16.msra.mxu0 0
      %2410 = vmatprep.subr.bf16.mxu0 0
      %2411 = vmatpush1.bf16.msra.mxu0 0
      %2412 = vmatprep.subr.bf16.mxu0 0
      %2413 = vmatpush1.bf16.msra.mxu0 0
      %2414 = vmatprep.subr.bf16.mxu0 0
      %2415 = vmatpush1.bf16.msra.mxu0 0
      %2416 = vmatprep.subr.bf16.mxu0 0
      %2417 = vmatpush1.bf16.msra.mxu0 0
      %2418 = vmatprep.subr.bf16.mxu0 0
      %2419 = vmatpush1.bf16.msra.mxu0 0
      %2420 = vmatprep.subr.bf16.mxu0 0
      %2421 = vmatpush1.bf16.msra.mxu0 0
      %2422 = vmatprep.subr.bf16.mxu0 0
      %2423 = vmatpush1.bf16.msra.mxu0 0
      %2424 = vmatprep.mubr.bf16.mxu0 0
      %2425 = vmatmul.mubr.bf16.gmra.mrb[0].mxu0 %v2387
      %v2426 = vpop.f32.mrb[0].mxu0
      %v2427 = vadd.f32 0.0, %v2426
      %v2428 = vpop.f32.mrb[0].mxu0
      %v2429 = vpop.f32.mrb[0].mxu0
      %v2430 = vpop.f32.mrb[0].mxu0
      %2431 = vdwg.mxu0
      %v2432 = vadd.f32 %v2325, %v2427
      %v2433 = vmul.f32 %v2079, %v571
      %v2434 = vpack.c.bf16 %v2433, %v2433
      %2435 = vmatprep.subr.bf16.mxu0 0
      %2436 = vmatpush1.bf16.xpose.msra.mxu0 %v2127
      %2437 = vmatprep.subr.bf16.mxu0 0
      %2438 = vmatpush1.bf16.xpose.msra.mxu0 0
      %2439 = vmatprep.subr.bf16.mxu0 0
      %2440 = vmatpush1.bf16.xpose.msra.mxu0 0
      %2441 = vmatprep.subr.bf16.mxu0 0
      %2442 = vmatpush1.bf16.xpose.msra.mxu0 0
      %2443 = vmatprep.subr.bf16.mxu0 0
      %2444 = vmatpush1.bf16.xpose.msra.mxu0 0
      %2445 = vmatprep.subr.bf16.mxu0 0
      %2446 = vmatpush1.bf16.xpose.msra.mxu0 0
      %2447 = vmatprep.subr.bf16.mxu0 0
      %2448 = vmatpush1.bf16.xpose.msra.mxu0 0
      %2449 = vmatprep.subr.bf16.mxu0 0
      %2450 = vmatpush1.bf16.xpose.msra.mxu0 0
      %2451 = vmatprep.subr.bf16.mxu0 0
      %2452 = vmatpush1.bf16.xpose.msra.mxu0 0
      %2453 = vmatprep.subr.bf16.mxu0 0
      %2454 = vmatpush1.bf16.xpose.msra.mxu0 0
      %2455 = vmatprep.subr.bf16.mxu0 0
      %2456 = vmatpush1.bf16.xpose.msra.mxu0 0
      %2457 = vmatprep.subr.bf16.mxu0 0
      %2458 = vmatpush1.bf16.xpose.msra.mxu0 0
      %2459 = vmatprep.subr.bf16.mxu0 0
      %2460 = vmatpush1.bf16.xpose.msra.mxu0 0
      %2461 = vmatprep.subr.bf16.mxu0 0
      %2462 = vmatpush1.bf16.xpose.msra.mxu0 0
      %2463 = vmatprep.subr.bf16.mxu0 0
      %2464 = vmatpush1.bf16.xpose.msra.mxu0 0
      %2465 = vmatprep.subr.bf16.mxu0 0
      %2466 = vmatpush1.bf16.xpose.msra.mxu0 0
      %2467 = vmatprep.mubr.bf16.mxu0 0
      %2468 = vmatmul.mubr.bf16.gmra.mrb[0].mxu0 %v2434
      %v2469 = vpop.f32.mrb[0].mxu0
      %v2470 = vadd.f32 0.0, %v2469
      %v2471 = vpop.f32.mrb[0].mxu0
      %v2472 = vpop.f32.mrb[0].mxu0
      %v2473 = vpop.f32.mrb[0].mxu0
      %2474 = vdwg.mxu0
      %v2475 = vsel %vm1080, %v2470, -inf
      %2476 = vmax.xlane.f32.xlu0 %v2475
      %v2477 = vpop.xlane.xlu0 %2476
      %v2478 = vsub.f32 %v2470, %v2477
      %v2479 = vmul.f32 %v2478, 1.442695
      %v2480 = vpow.pop %v2479
      %v2481 = vsel %vm1080, %v2480, 0.0
      %2482 = vadd.xlane.f32.xlu0 %v2481
      %v2483 = vpop.xlane.xlu0 %2482
      %v2484 = vrcp.pop %v2483
      %v2485 = vmul.f32 %v2480, %v2484
      %v2486 = vpack.c.bf16 %v2485, %v2485
      %v2487 = vmul.f32 %v2120, %v571
      %v2488 = vpack.c.bf16 %v2487, %v2487
      %v2490 = vsel %vm1151, %v2486, 0
      %v2493 = vand.u32 %v2488, %v1158
      %2495 = vmatprep.subr.bf16.mxu0 0
      %2496 = vmatpush1.bf16.msra.mxu0 %v2493
      %2497 = vmatprep.subr.bf16.mxu0 0
      %2498 = vmatpush1.bf16.msra.mxu0 0
      %2499 = vmatprep.subr.bf16.mxu0 0
      %2500 = vmatpush1.bf16.msra.mxu0 0
      %2501 = vmatprep.subr.bf16.mxu0 0
      %2502 = vmatpush1.bf16.msra.mxu0 0
      %2503 = vmatprep.subr.bf16.mxu0 0
      %2504 = vmatpush1.bf16.msra.mxu0 0
      %2505 = vmatprep.subr.bf16.mxu0 0
      %2506 = vmatpush1.bf16.msra.mxu0 0
      %2507 = vmatprep.subr.bf16.mxu0 0
      %2508 = vmatpush1.bf16.msra.mxu0 0
      %2509 = vmatprep.subr.bf16.mxu0 0
      %2510 = vmatpush1.bf16.msra.mxu0 0
      %2511 = vmatprep.subr.bf16.mxu0 0
      %2512 = vmatpush1.bf16.msra.mxu0 0
      %2513 = vmatprep.subr.bf16.mxu0 0
      %2514 = vmatpush1.bf16.msra.mxu0 0
      %2515 = vmatprep.subr.bf16.mxu0 0
      %2516 = vmatpush1.bf16.msra.mxu0 0
      %2517 = vmatprep.subr.bf16.mxu0 0
      %2518 = vmatpush1.bf16.msra.mxu0 0
      %2519 = vmatprep.subr.bf16.mxu0 0
      %2520 = vmatpush1.bf16.msra.mxu0 0
      %2521 = vmatprep.subr.bf16.mxu0 0
      %2522 = vmatpush1.bf16.msra.mxu0 0
      %2523 = vmatprep.subr.bf16.mxu0 0
      %2524 = vmatpush1.bf16.msra.mxu0 0
      %2525 = vmatprep.subr.bf16.mxu0 0
      %2526 = vmatpush1.bf16.msra.mxu0 0
      %2527 = vmatprep.mubr.bf16.mxu0 0
      %2528 = vmatmul.mubr.bf16.gmra.mrb[0].mxu0 %v2490
      %v2529 = vpop.f32.mrb[0].mxu0
      %v2530 = vadd.f32 0.0, %v2529
      %v2531 = vpop.f32.mrb[0].mxu0
      %v2532 = vpop.f32.mrb[0].mxu0
      %v2533 = vpop.f32.mrb[0].mxu0
      %2534 = vdwg.mxu0
      %v2535 = vadd.f32 %v2432, %v2530
      %v2536 = vpack.c.bf16 %v2535, %v2535
      %s2537 = scalar_lea.vmem %s9, 64
      %v2538 = vld [vmem:[%s2537] sm:$0xf]
      %v2539 = vld [vmem:[%s2537 + $0x4] sm:$0xf]
      %v2540 = vld [vmem:[%s2537 + $0x8] sm:$0xf]
      %v2541 = vld [vmem:[%s2537 + $0xc] sm:$0xf]
      %v2542 = vld [vmem:[%s2537 + $0x10] sm:$0xf]
      %v2543 = vld [vmem:[%s2537 + $0x14] sm:$0xf]
      %v2544 = vld [vmem:[%s2537 + $0x18] sm:$0xf]
      %v2545 = vld [vmem:[%s2537 + $0x1c] sm:$0xf]
      %v2546 = vld [vmem:[%s2537 + $0x20] sm:$0xf]
      %v2547 = vld [vmem:[%s2537 + $0x24] sm:$0xf]
      %v2548 = vld [vmem:[%s2537 + $0x28] sm:$0xf]
      %v2549 = vld [vmem:[%s2537 + $0x2c] sm:$0xf]
      %v2550 = vld [vmem:[%s2537 + $0x30] sm:$0xf]
      %v2551 = vld [vmem:[%s2537 + $0x34] sm:$0xf]
      %v2552 = vld [vmem:[%s2537 + $0x38] sm:$0xf]
      %v2553 = vld [vmem:[%s2537 + $0x3c] sm:$0xf]
      %v2570 = vunpack.c.l.b16 %v2538
      %v2571 = vunpack.c.l.b16 %v2539
      %v2572 = vunpack.c.l.b16 %v2540
      %v2573 = vunpack.c.l.b16 %v2541
      %v2574 = vunpack.c.l.b16 %v2542
      %v2575 = vunpack.c.l.b16 %v2543
      %v2576 = vunpack.c.l.b16 %v2544
      %v2577 = vunpack.c.l.b16 %v2545
      %v2578 = vunpack.c.l.b16 %v2546
      %v2579 = vunpack.c.l.b16 %v2547
      %v2580 = vunpack.c.l.b16 %v2548
      %v2581 = vunpack.c.l.b16 %v2549
      %v2582 = vunpack.c.l.b16 %v2550
      %v2583 = vunpack.c.l.b16 %v2551
      %v2584 = vunpack.c.l.b16 %v2552
      %v2585 = vunpack.c.l.b16 %v2553
      %v2586 = vpack.c.b16 %v2571, %v2570
      %v2587 = vpack.c.b16 %v2573, %v2572
      %v2588 = vpack.c.b16 %v2575, %v2574
      %v2589 = vpack.c.b16 %v2577, %v2576
      %v2590 = vpack.c.b16 %v2579, %v2578
      %v2591 = vpack.c.b16 %v2581, %v2580
      %v2592 = vpack.c.b16 %v2583, %v2582
      %v2593 = vpack.c.b16 %v2585, %v2584
      %2602 = vmatprep.subr.bf16.mxu0 0
      %2603 = vmatpush1.bf16.msra.mxu0 %v2586
      %2604 = vmatprep.subr.bf16.mxu0 0
      %2605 = vmatpush1.bf16.msra.mxu0 %v2587
      %2606 = vmatprep.subr.bf16.mxu0 0
      %2607 = vmatpush1.bf16.msra.mxu0 %v2588
      %2608 = vmatprep.subr.bf16.mxu0 0
      %2609 = vmatpush1.bf16.msra.mxu0 %v2589
      %2610 = vmatprep.subr.bf16.mxu0 0
      %2611 = vmatpush1.bf16.msra.mxu0 %v2590
      %2612 = vmatprep.subr.bf16.mxu0 0
      %2613 = vmatpush1.bf16.msra.mxu0 %v2591
      %2614 = vmatprep.subr.bf16.mxu0 0
      %2615 = vmatpush1.bf16.msra.mxu0 %v2592
      %2616 = vmatprep.subr.bf16.mxu0 0
      %2617 = vmatpush1.bf16.msra.mxu0 %v2593
      %2618 = vmatprep.subr.bf16.mxu0 0
      %2619 = vmatpush1.bf16.msra.mxu0 0
      %2620 = vmatprep.subr.bf16.mxu0 0
      %2621 = vmatpush1.bf16.msra.mxu0 0
      %2622 = vmatprep.subr.bf16.mxu0 0
      %2623 = vmatpush1.bf16.msra.mxu0 0
      %2624 = vmatprep.subr.bf16.mxu0 0
      %2625 = vmatpush1.bf16.msra.mxu0 0
      %2626 = vmatprep.subr.bf16.mxu0 0
      %2627 = vmatpush1.bf16.msra.mxu0 0
      %2628 = vmatprep.subr.bf16.mxu0 0
      %2629 = vmatpush1.bf16.msra.mxu0 0
      %2630 = vmatprep.subr.bf16.mxu0 0
      %2631 = vmatpush1.bf16.msra.mxu0 0
      %2632 = vmatprep.subr.bf16.mxu0 0
      %2633 = vmatpush1.bf16.msra.mxu0 0
      %2634 = vmatprep.mubr.bf16.mxu0 0
      %2635 = vmatmul.mubr.bf16.gmra.mrb[0].mxu0 %v2536
      %v2636 = vpop.f32.mrb[0].mxu0
      %v2637 = vadd.f32 0.0, %v2636
      %v2638 = vpop.f32.mrb[0].mxu0
      %v2639 = vpop.f32.mrb[0].mxu0
      %v2640 = vpop.f32.mrb[0].mxu0
      %2641 = vdwg.mxu0
      %v2642 = vadd.f32 %v1831, %v2637
      %s2643 = scalar_lea.vmem %s10, 1
      %v2644 = vld [vmem:[%s2643] sm:$0x1]
      %v2646 = vlaneseq
      %v2647 = vshrl.u32 %v2646, 7
      %v2648 = vsub.s32 0, %v2647
      %v2649 = vrot.slane %v2644, %v2648
      %v2651 = vadd.f32 %v2642, %v2649
      %s2652 = scalar_lea.vmem %s11, 1
      %v2653 = vld [vmem:[%s2652] sm:$0x1]
      %s2654 = scalar_lea.vmem %s12, 1
      %v2655 = vld [vmem:[%s2654] sm:$0x1]
      %v2656 = vsel %vm719, %v2651, 0.0
      %2657 = vadd.xlane.f32.xlu0 %v2656
      %v2658 = vpop.xlane.xlu0 %2657
      %v2659 = vmul.f32 %v2658, 0.03125
      %v2660 = vsub.f32 %v2651, %v2659
      %v2661 = vmul.f32 %v2660, %v552
      %v2662 = vmul.f32 %v2661, %v2661
      %v2663 = vsel %vm719, %v2662, 0.0
      %2664 = vadd.xlane.f32.xlu0 %v2663
      %v2665 = vpop.xlane.xlu0 %2664
      %v2666 = vmul.f32 %v2665, 0.03125
      %v2667 = vadd.f32 %v2666, 1e-05
      %v2668 = vrsqrt.pop %v2667
      %v2669 = vmul.f32 %v2661, %v2668
      %v2671 = vlaneseq
      %v2672 = vshrl.u32 %v2671, 7
      %v2673 = vsub.s32 0, %v2672
      %v2674 = vrot.slane %v2653, %v2673
      %v2676 = vmul.f32 %v2669, %v2674
      %v2678 = vlaneseq
      %v2679 = vshrl.u32 %v2678, 7
      %v2680 = vsub.s32 0, %v2679
      %v2681 = vrot.slane %v2655, %v2680
      %v2683 = vadd.f32 %v2676, %v2681
      %v2684 = vpack.c.bf16 %v2683, %v2683
      %s2685 = scalar_lea.vmem %s13, 64
      %v2686 = vld [vmem:[%s2685] sm:$0xf]
      %v2687 = vld [vmem:[%s2685 + $0x4] sm:$0xf]
      %v2688 = vld [vmem:[%s2685 + $0x8] sm:$0xf]
      %v2689 = vld [vmem:[%s2685 + $0xc] sm:$0xf]
      %v2690 = vld [vmem:[%s2685 + $0x10] sm:$0xf]
      %v2691 = vld [vmem:[%s2685 + $0x14] sm:$0xf]
      %v2692 = vld [vmem:[%s2685 + $0x18] sm:$0xf]
      %v2693 = vld [vmem:[%s2685 + $0x1c] sm:$0xf]
      %v2694 = vld [vmem:[%s2685 + $0x20] sm:$0xf]
      %v2695 = vld [vmem:[%s2685 + $0x24] sm:$0xf]
      %v2696 = vld [vmem:[%s2685 + $0x28] sm:$0xf]
      %v2697 = vld [vmem:[%s2685 + $0x2c] sm:$0xf]
      %v2698 = vld [vmem:[%s2685 + $0x30] sm:$0xf]
      %v2699 = vld [vmem:[%s2685 + $0x34] sm:$0xf]
      %v2700 = vld [vmem:[%s2685 + $0x38] sm:$0xf]
      %v2701 = vld [vmem:[%s2685 + $0x3c] sm:$0xf]
      %s2702 = scalar_lea.vmem %s14, 1
      %v2703 = vld [vmem:[%s2702] sm:$0x1]
      %v2705 = vlaneseq
      %v2706 = vshrl.u32 %v2705, 7
      %v2707 = vsub.s32 0, %v2706
      %v2708 = vrot.slane %v2703, %v2707
      %v2726 = vunpack.c.l.b16 %v2686
      %v2727 = vunpack.c.l.b16 %v2687
      %v2728 = vunpack.c.l.b16 %v2688
      %v2729 = vunpack.c.l.b16 %v2689
      %v2730 = vunpack.c.l.b16 %v2690
      %v2731 = vunpack.c.l.b16 %v2691
      %v2732 = vunpack.c.l.b16 %v2692
      %v2733 = vunpack.c.l.b16 %v2693
      %v2734 = vunpack.c.l.b16 %v2694
      %v2735 = vunpack.c.l.b16 %v2695
      %v2736 = vunpack.c.l.b16 %v2696
      %v2737 = vunpack.c.l.b16 %v2697
      %v2738 = vunpack.c.l.b16 %v2698
      %v2739 = vunpack.c.l.b16 %v2699
      %v2740 = vunpack.c.l.b16 %v2700
      %v2741 = vunpack.c.l.b16 %v2701
      %v2742 = vpack.c.b16 %v2727, %v2726
      %v2743 = vpack.c.b16 %v2729, %v2728
      %v2744 = vpack.c.b16 %v2731, %v2730
      %v2745 = vpack.c.b16 %v2733, %v2732
      %v2746 = vpack.c.b16 %v2735, %v2734
      %v2747 = vpack.c.b16 %v2737, %v2736
      %v2748 = vpack.c.b16 %v2739, %v2738
      %v2749 = vpack.c.b16 %v2741, %v2740
      %2758 = vmatprep.subr.bf16.mxu0 0
      %2759 = vmatpush1.bf16.msra.mxu0 %v2742
      %2760 = vmatprep.subr.bf16.mxu0 0
      %2761 = vmatpush1.bf16.msra.mxu0 %v2743
      %2762 = vmatprep.subr.bf16.mxu0 0
      %2763 = vmatpush1.bf16.msra.mxu0 %v2744
      %2764 = vmatprep.subr.bf16.mxu0 0
      %2765 = vmatpush1.bf16.msra.mxu0 %v2745
      %2766 = vmatprep.subr.bf16.mxu0 0
      %2767 = vmatpush1.bf16.msra.mxu0 %v2746
      %2768 = vmatprep.subr.bf16.mxu0 0
      %2769 = vmatpush1.bf16.msra.mxu0 %v2747
      %2770 = vmatprep.subr.bf16.mxu0 0
      %2771 = vmatpush1.bf16.msra.mxu0 %v2748
      %2772 = vmatprep.subr.bf16.mxu0 0
      %2773 = vmatpush1.bf16.msra.mxu0 %v2749
      %2774 = vmatprep.subr.bf16.mxu0 0
      %2775 = vmatpush1.bf16.msra.mxu0 0
      %2776 = vmatprep.subr.bf16.mxu0 0
      %2777 = vmatpush1.bf16.msra.mxu0 0
      %2778 = vmatprep.subr.bf16.mxu0 0
      %2779 = vmatpush1.bf16.msra.mxu0 0
      %2780 = vmatprep.subr.bf16.mxu0 0
      %2781 = vmatpush1.bf16.msra.mxu0 0
      %2782 = vmatprep.subr.bf16.mxu0 0
      %2783 = vmatpush1.bf16.msra.mxu0 0
      %2784 = vmatprep.subr.bf16.mxu0 0
      %2785 = vmatpush1.bf16.msra.mxu0 0
      %2786 = vmatprep.subr.bf16.mxu0 0
      %2787 = vmatpush1.bf16.msra.mxu0 0
      %2788 = vmatprep.subr.bf16.mxu0 0
      %2789 = vmatpush1.bf16.msra.mxu0 0
      %2790 = vmatprep.mubr.bf16.mxu0 0
      %2791 = vmatmul.mubr.bf16.gmra.mrb[0].mxu0 %v2684
      %v2792 = vpop.f32.mrb[0].mxu0
      %v2793 = vadd.f32 %v2708, %v2792
      %v2794 = vpop.f32.mrb[0].mxu0
      %v2795 = vpop.f32.mrb[0].mxu0
      %v2796 = vpop.f32.mrb[0].mxu0
      %2797 = vdwg.mxu0
      %v2798 = vmul.f32 %v2793, 1.702
      %v2799 = vxor.u32 %v2798, 2147483648
      %v2800 = vmul.f32 %v2799, 1.442695
      %v2801 = vpow.pop %v2800
      %v2802 = vadd.f32 %v2801, 1.0
      %v2803 = vrcp.pop %v2802
      %v2804 = vmul.f32 1.0, %v2803
      %v2805 = vmul.f32 %v2793, %v2804
      %v2806 = vpack.c.bf16 %v2805, %v2805
      %s2807 = scalar_lea.vmem %s15, 64
      %v2808 = vld [vmem:[%s2807] sm:$0xf]
      %v2809 = vld [vmem:[%s2807 + $0x4] sm:$0xf]
      %v2810 = vld [vmem:[%s2807 + $0x8] sm:$0xf]
      %v2811 = vld [vmem:[%s2807 + $0xc] sm:$0xf]
      %v2812 = vld [vmem:[%s2807 + $0x10] sm:$0xf]
      %v2813 = vld [vmem:[%s2807 + $0x14] sm:$0xf]
      %v2814 = vld [vmem:[%s2807 + $0x18] sm:$0xf]
      %v2815 = vld [vmem:[%s2807 + $0x1c] sm:$0xf]
      %v2816 = vld [vmem:[%s2807 + $0x20] sm:$0xf]
      %v2817 = vld [vmem:[%s2807 + $0x24] sm:$0xf]
      %v2818 = vld [vmem:[%s2807 + $0x28] sm:$0xf]
      %v2819 = vld [vmem:[%s2807 + $0x2c] sm:$0xf]
      %v2820 = vld [vmem:[%s2807 + $0x30] sm:$0xf]
      %v2821 = vld [vmem:[%s2807 + $0x34] sm:$0xf]
      %v2822 = vld [vmem:[%s2807 + $0x38] sm:$0xf]
      %v2823 = vld [vmem:[%s2807 + $0x3c] sm:$0xf]
      %v2840 = vunpack.c.l.b16 %v2808
      %v2841 = vunpack.c.l.b16 %v2809
      %v2842 = vunpack.c.l.b16 %v2810
      %v2843 = vunpack.c.l.b16 %v2811
      %v2844 = vunpack.c.l.b16 %v2812
      %v2845 = vunpack.c.l.b16 %v2813
      %v2846 = vunpack.c.l.b16 %v2814
      %v2847 = vunpack.c.l.b16 %v2815
      %v2848 = vunpack.c.l.b16 %v2816
      %v2849 = vunpack.c.l.b16 %v2817
      %v2850 = vunpack.c.l.b16 %v2818
      %v2851 = vunpack.c.l.b16 %v2819
      %v2852 = vunpack.c.l.b16 %v2820
      %v2853 = vunpack.c.l.b16 %v2821
      %v2854 = vunpack.c.l.b16 %v2822
      %v2855 = vunpack.c.l.b16 %v2823
      %v2856 = vpack.c.b16 %v2841, %v2840
      %v2857 = vpack.c.b16 %v2843, %v2842
      %v2858 = vpack.c.b16 %v2845, %v2844
      %v2859 = vpack.c.b16 %v2847, %v2846
      %v2860 = vpack.c.b16 %v2849, %v2848
      %v2861 = vpack.c.b16 %v2851, %v2850
      %v2862 = vpack.c.b16 %v2853, %v2852
      %v2863 = vpack.c.b16 %v2855, %v2854
      %2872 = vmatprep.subr.bf16.mxu0 0
      %2873 = vmatpush1.bf16.msra.mxu0 %v2856
      %2874 = vmatprep.subr.bf16.mxu0 0
      %2875 = vmatpush1.bf16.msra.mxu0 %v2857
      %2876 = vmatprep.subr.bf16.mxu0 0
      %2877 = vmatpush1.bf16.msra.mxu0 %v2858
      %2878 = vmatprep.subr.bf16.mxu0 0
      %2879 = vmatpush1.bf16.msra.mxu0 %v2859
      %2880 = vmatprep.subr.bf16.mxu0 0
      %2881 = vmatpush1.bf16.msra.mxu0 %v2860
      %2882 = vmatprep.subr.bf16.mxu0 0
      %2883 = vmatpush1.bf16.msra.mxu0 %v2861
      %2884 = vmatprep.subr.bf16.mxu0 0
      %2885 = vmatpush1.bf16.msra.mxu0 %v2862
      %2886 = vmatprep.subr.bf16.mxu0 0
      %2887 = vmatpush1.bf16.msra.mxu0 %v2863
      %2888 = vmatprep.subr.bf16.mxu0 0
      %2889 = vmatpush1.bf16.msra.mxu0 0
      %2890 = vmatprep.subr.bf16.mxu0 0
      %2891 = vmatpush1.bf16.msra.mxu0 0
      %2892 = vmatprep.subr.bf16.mxu0 0
      %2893 = vmatpush1.bf16.msra.mxu0 0
      %2894 = vmatprep.subr.bf16.mxu0 0
      %2895 = vmatpush1.bf16.msra.mxu0 0
      %2896 = vmatprep.subr.bf16.mxu0 0
      %2897 = vmatpush1.bf16.msra.mxu0 0
      %2898 = vmatprep.subr.bf16.mxu0 0
      %2899 = vmatpush1.bf16.msra.mxu0 0
      %2900 = vmatprep.subr.bf16.mxu0 0
      %2901 = vmatpush1.bf16.msra.mxu0 0
      %2902 = vmatprep.subr.bf16.mxu0 0
      %2903 = vmatpush1.bf16.msra.mxu0 0
      %2904 = vmatprep.mubr.bf16.mxu0 0
      %2905 = vmatmul.mubr.bf16.gmra.mrb[0].mxu0 %v2806
      %v2906 = vpop.f32.mrb[0].mxu0
      %v2907 = vadd.f32 0.0, %v2906
      %v2908 = vpop.f32.mrb[0].mxu0
      %v2909 = vpop.f32.mrb[0].mxu0
      %v2910 = vpop.f32.mrb[0].mxu0
      %2911 = vdwg.mxu0
      %v2912 = vadd.f32 %v2651, %v2907
      %s2913 = scalar_lea.vmem %s16, 1
      %v2914 = vld [vmem:[%s2913] sm:$0x1]
      %v2916 = vlaneseq
      %v2917 = vshrl.u32 %v2916, 7
      %v2918 = vsub.s32 0, %v2917
      %v2919 = vrot.slane %v2914, %v2918
      %v2921 = vadd.f32 %v2912, %v2919
      %2922 = vst [vmem:[%s546] sm:$0x1f] %v2921
      %p2923 = scmp.lt.s32.totalorder %s28, 1
      %s2924 = scalar_select %p2923, %s28, 1
      %s2925 = smul.addr %s2924, 8
      %s2926 = scalar_lea.vmem %s17, %s2925
      // Predicated region
      $region89: #{clip_vision_encoder.1} parent=87 // pred_check
        %p2927 = pneg %p408
      $region90: #{clip_vision_encoder.1} parent=87 // pred_check_branch
        %2929 = sbr.rel (%p2927) target = $region92
      $region91: #{clip_vision_encoder.1} parent=87 // pred_region
        _
      $region92: #{clip_vision_encoder.1} parent=87 // pred_fallthru
        _
    $region88: #{clip_vision_encoder.1} parent=5 // pred_fallthru
      _
    %p2930 = scmp.le.s32.totalorder 2, %s23
    // Predicated region
    $region93: #{clip_vision_encoder.1} parent=5 // pred_check
      %p2931 = pneg %p2930
    $region94: #{clip_vision_encoder.1} parent=5 // pred_check_branch
      %2933 = sbr.rel (%p2931) target = $region96
    $region95: #{clip_vision_encoder.1} parent=5 // pred_region
      %s2934 = ssub.s32 %s23, 2
      // Predicated region
      $region97: #{clip_vision_encoder.1} parent=95 // pred_check
        %p2935 = pneg %p414
      $region98: #{clip_vision_encoder.1} parent=95 // pred_check_branch
        %2937 = sbr.rel (%p2935) target = $region100
      $region99: #{clip_vision_encoder.1} parent=95 // pred_region
        %p2938 = scmp.lt.s32.totalorder %s29, 1
        %s2939 = scalar_select %p2938, %s29, 1
        %s2940 = smul.addr %s2939, 8
        %s2941 = scalar_lea.vmem %s17, %s2940
      $region100: #{clip_vision_encoder.1} parent=95 // pred_fallthru
        _
    $region96: #{clip_vision_encoder.1} parent=5 // pred_fallthru
      _
  $region6: #{clip_vision_encoder.1} parent=0 // loop_footer
    %s27 = sadd.s32 1, %s23
  $region7: #{clip_vision_encoder.1} parent=0 // loop_footer_branch
    %22 = sbr.rel target = $region3
  $region8: #{clip_vision_encoder.1} parent=0 // loop_exit
    _

</llo_original>
